<compile_context>
chip_gen: v5e
topology: v5e:2x2
jax: 0.10.0
libtpu: 0.0.40
codegen_flags: <defaults>
</compile_context>

<pallas_src>
import functools
import random

import jax
import jax.numpy as jnp
from jax import lax
from jax.experimental import pallas as pl
from jax.experimental.pallas import tpu as pltpu

# Problem dimensions (hard-wired by the module's reshape constants).
C_IN = 32          # input channels
H_IN = 112         # input height
W_IN = 56          # input width == output width
H2 = H_IN // 2     # 56 row pairs == output height
C_OUT = 64         # output channels
KW = 3             # taps along W (unfold kernel size)
R = 2              # paired rows per output row
K_TOT = KW * R * C_IN     # 192 total contraction size
M_OUT = H2 * W_IN         # 3136 output spatial positions

# Grid split along the h2 (row-pair) axis: 2 TCs on v7x, DMA overlap on v5e.
N_BLK = 2
HB = H2 // N_BLK          # 28 row pairs per block
M_BLK = HB * W_IN         # 1568 output rows per block


def _sroll(x, s, axis):
    """Static roll; skips the no-op case (avoids zero-width concat operands)."""
    n = x.shape[axis]
    s = s % n
    if s == 0:
        return x
    return jnp.roll(x, s, axis=axis)


def _fused_kernel(x_ref, w_ref, o_ref, *, shift):
    """x_ref: (HB, 56, 64)  [h2, w, r*32 + c]   (H-roll already applied)
       w_ref: (192, 64)     [kh*64 + r*32 + c, i]  (K-major -> native MXU feed)
       o_ref: (1568, 64)    [h2_local*56 + w, i]
    """
    xc = x_ref[...]                                             # (HB, 56, 64)

    # Output-position index along W, hoisted once (unfold zero-pad masks only
    # zero one boundary column per tap; the select is ~100 VPU cycles total).
    widx = lax.broadcasted_iota(jnp.int32, (HB, W_IN, R * C_IN), 1)

    taps = []
    for kh in range(KW):
        # Fold the static W-roll into the tap shift:
        #   tap_kh[h2, p, :] = xc[h2, (p + kh - 1 - shift) mod 56, :]
        t = _sroll(xc, shift + 1 - kh, axis=1)
        if kh == 0:
            t = jnp.where(widx >= 1, t, 0.0)          # invalid at p == 0
        elif kh == KW - 1:
            t = jnp.where(widx <= W_IN - 2, t, 0.0)   # invalid at p == 55
        taps.append(t)

    # Single K=192 contraction on the MXU: lane-concat the taps at offsets
    # 0/64/128 and do one dot (instead of 3 x K=64 dots + 2 full VPU adds).
    tap = jnp.concatenate(taps, axis=-1).reshape(M_BLK, K_TOT)  # layout-free
    o_ref[...] = jnp.dot(tap, w_ref[...], preferred_element_type=jnp.float32)


def kernel_generated_0_forward(x, weight, shift):
    """x: (1, 32, 112, 56) f32, weight: (64, 32, 2, 3) f32, shift: static +-1."""
    # Fold the H-roll and the even/odd row pairing into the one wrapper copy:
    #   xc[h2, w, r*32 + c] = x[0, c, (2*h2 + r - shift) mod 112, w]
    x0 = x.reshape(C_IN, H_IN, W_IN)                            # (32, 112, 56)
    xr = jnp.roll(x0, shift, axis=1)                            # static H-roll
    xc = jnp.transpose(xr.reshape(C_IN, H2, R, W_IN),
                       (1, 3, 2, 0)).reshape(H2, W_IN, R * C_IN)  # (56, 56, 64)
    # Weight, K-major: wk[kh*64 + r*32 + c, i] = W[i, c, r, kh].
    wk = jnp.transpose(weight, (3, 2, 1, 0)).reshape(K_TOT, C_OUT)  # (192, 64)

    out = pl.pallas_call(
        functools.partial(_fused_kernel, shift=int(shift)),
        out_shape=jax.ShapeDtypeStruct((M_OUT, C_OUT), jnp.float32),
        grid=(N_BLK,),
        in_specs=[
            pl.BlockSpec((HB, W_IN, R * C_IN), lambda i: (i, 0, 0)),
            pl.BlockSpec((K_TOT, C_OUT), lambda i: (0, 0)),
        ],
        out_specs=pl.BlockSpec((M_BLK, C_OUT), lambda i: (i, 0)),
        compiler_params=pltpu.CompilerParams(
            dimension_semantics=("parallel",),
            vmem_limit_bytes=32 * 1024 * 1024,
        ),
        cost_estimate=pl.CostEstimate(
            flops=2 * M_OUT * K_TOT * C_OUT,
            transcendentals=0,
            bytes_accessed=4 * (H2 * W_IN * R * C_IN + K_TOT * C_OUT
                                + M_OUT * C_OUT),
        ),
    )(xc, wk)                                                   # (3136, 64)

    # (h2*56 + w, i) -> (1, i, h2, w): one small XLA transpose (~0.78 MiB).
    return jnp.transpose(out.reshape(H2, W_IN, C_OUT),
                         (2, 0, 1)).reshape(1, C_OUT, H2, W_IN)


# ----------------------------------------------------------------------------
# Pure-JAX reference that follows the torch ops literally (for validation).
# ----------------------------------------------------------------------------
def reference_forward(x, w, shift):
    t = jnp.einsum('ilkj->iklj', x)                      # (1, 112, 32, 56)
    t = t.reshape(1, 56, 2, 32, 56).reshape(1, 112, 32, 56)
    t = jnp.roll(t, shift, axis=1)
    t = t.reshape(1, 56, 2, 32, 56)
    t = jnp.roll(t, shift, axis=4)
    t = t.reshape(1, 3584, 56, 1)
    # unfold((3,1), padding=(1,0)) -> (1, 3584*3, 56)
    tp = jnp.pad(t, ((0, 0), (0, 0), (1, 1), (0, 0)))
    cols = jnp.stack([tp[:, :, k:k + 56, 0] for k in range(3)], axis=2)
    t = cols.reshape(1, 56, 2, 32, 3, 56)
    t = jnp.transpose(t, (0, 1, 3, 2, 4, 5))             # (1, 56, 32, 2, 3, 56)
    return jnp.einsum('mnjklo,ijkl->mino', t, w)         # (1, 64, 56, 56)


if __name__ == "__main__":
    # Deterministic "random" shift direction, same recipe as the module.
    random.seed(0)
    module_shift = (random.random() > 0.5) * 2 - 1       # +1 or -1 (python int)

    key = jax.random.PRNGKey(0)
    kx, kw = jax.random.split(key)
    # Input shape is dictated by the module's reshapes: (1, 32, 112, 56) NCHW.
    x = jax.random.normal(kx, (1, C_IN, H_IN, W_IN), dtype=jnp.float32)
    weight = jax.random.normal(kw, (C_OUT, C_IN, R, KW), dtype=jnp.float32)

    fwd = jax.jit(kernel_generated_0_forward, static_argnums=2)

    # Validate BOTH roll directions (review correctness concern about the
    # H-roll / pairing fold being off-by-one when moved to the wrapper).
    for shift in (int(module_shift), int(-module_shift)):
        y = jax.block_until_ready(fwd(x, weight, shift))
        y_ref = reference_forward(x, weight, shift)
        assert y.shape == (1, C_OUT, H2, W_IN), y.shape
        max_err = float(jnp.max(jnp.abs(y - y_ref)))
        assert jnp.allclose(y, y_ref, atol=2e-3, rtol=2e-3), (
            f"mismatch for shift={shift}, max_err={max_err}")

    print("KERNEL_OK")
</pallas_src>

<mosaic_0001>
module attributes {stable_mosaic.version = 11 : i64} {
  func.func @_fused_kernel(%arg0: i32, %arg1: memref<28x56x64xf32, #tpu.memory_space<vmem>>, %arg2: memref<192x64xf32, #tpu.memory_space<vmem>>, %arg3: memref<1568x64xf32, #tpu.memory_space<vmem>>) attributes {dimension_semantics = [#tpu.dimension_semantics<parallel>], iteration_bounds = array<i64: 2>, scalar_prefetch = 0 : i64, scratch_operands = 0 : i64, tpu.core_type = #tpu.core_type<tc>, window_params = [{transform_indices = @transform_0, window_bounds = array<i64: 28, 56, 64>}, {pipeline_mode = #tpu.pipeline_mode<synchronous>, transform_indices = @transform_1, window_bounds = array<i64: 192, 64>}, {transform_indices = @transform_2, window_bounds = array<i64: 1568, 64>}]} {
    %c0 = arith.constant 0 : index
    %c0_0 = arith.constant 0 : index
    %c0_1 = arith.constant 0 : index
    %0 = vector.load %arg1[%c0, %c0_0, %c0_1] : memref<28x56x64xf32, #tpu.memory_space<vmem>>, vector<28x56x64xf32>
    %1 = tpu.iota {dimensions = array<i32: 1>} : vector<28x56x64xi32>
    %2 = vector.extract_strided_slice %0 {offsets = [0, 54, 0], sizes = [28, 2, 64], strides = [1, 1, 1]} : vector<28x56x64xf32> to vector<28x2x64xf32>
    %3 = vector.extract_strided_slice %0 {offsets = [0, 0, 0], sizes = [28, 54, 64], strides = [1, 1, 1]} : vector<28x56x64xf32> to vector<28x54x64xf32>
    %4 = tpu.concatenate %2, %3 in 1 : vector<28x2x64xf32>, vector<28x54x64xf32> -> vector<28x56x64xf32>
    %c1_i32 = arith.constant 1 : i32
    %5 = vector.broadcast %c1_i32 : i32 to vector<28x56x64xi32>
    %6 = arith.cmpi sge, %1, %5 : vector<28x56x64xi32>
    %cst = arith.constant 0.000000e+00 : f32
    %7 = vector.broadcast %cst : f32 to vector<28x56x64xf32>
    %8 = arith.select %6, %4, %7 : vector<28x56x64xi1>, vector<28x56x64xf32>
    %9 = vector.extract_strided_slice %0 {offsets = [0, 55, 0], sizes = [28, 1, 64], strides = [1, 1, 1]} : vector<28x56x64xf32> to vector<28x1x64xf32>
    %10 = vector.extract_strided_slice %0 {offsets = [0, 0, 0], sizes = [28, 55, 64], strides = [1, 1, 1]} : vector<28x56x64xf32> to vector<28x55x64xf32>
    %11 = tpu.concatenate %9, %10 in 1 : vector<28x1x64xf32>, vector<28x55x64xf32> -> vector<28x56x64xf32>
    %c54_i32 = arith.constant 54 : i32
    %12 = vector.broadcast %c54_i32 : i32 to vector<28x56x64xi32>
    %13 = arith.cmpi sle, %1, %12 : vector<28x56x64xi32>
    %cst_2 = arith.constant 0.000000e+00 : f32
    %14 = vector.broadcast %cst_2 : f32 to vector<28x56x64xf32>
    %15 = arith.select %13, %0, %14 : vector<28x56x64xi1>, vector<28x56x64xf32>
    %16 = tpu.concatenate %8, %11, %15 in 2 : vector<28x56x64xf32>, vector<28x56x64xf32>, vector<28x56x64xf32> -> vector<28x56x192xf32>
    %17 = vector.shape_cast %16 : vector<28x56x192xf32> to vector<1568x192xf32>
    %c0_3 = arith.constant 0 : index
    %c0_4 = arith.constant 0 : index
    %18 = vector.load %arg2[%c0_3, %c0_4] : memref<192x64xf32, #tpu.memory_space<vmem>>, vector<192x64xf32>
    %cst_5 = arith.constant dense<0.000000e+00> : vector<1568x64xf32>
    %19 = tpu.matmul %17, %18, %cst_5 {dimension_numbers = #tpu.dot_dimension_numbers<[1], [0], [0], [1], [0, 0, 1, 1], [], []>} : vector<1568x192xf32>, vector<192x64xf32>, vector<1568x64xf32> -> vector<1568x64xf32>
    %c0_6 = arith.constant 0 : index
    %c0_7 = arith.constant 0 : index
    %20 = vector.load %arg3[%c0_6, %c0_7] : memref<1568x64xf32, #tpu.memory_space<vmem>>, vector<1568x64xf32>
    tpu.vector_store %arg3[%c0_6, %c0_7], %19 {strides = array<i32>} : memref<1568x64xf32, #tpu.memory_space<vmem>>, vector<1568x64xf32>,
    return
  }
  func.func @transform_0(%arg0: i32) -> (i32, i32, i32) {
    %c0_i32 = arith.constant 0 : i32
    %c0_i32_0 = arith.constant 0 : i32
    %c0_i32_1 = arith.constant 0 : i32
    return %arg0, %c0_i32, %c0_i32_0 : i32, i32, i32
  }
  func.func @transform_1(%arg0: i32) -> (i32, i32) {
    %c0_i32 = arith.constant 0 : i32
    %c0_i32_0 = arith.constant 0 : i32
    %c0_i32_1 = arith.constant 0 : i32
    return %c0_i32, %c0_i32_0 : i32, i32
  }
  func.func @transform_2(%arg0: i32) -> (i32, i32) {
    %c0_i32 = arith.constant 0 : i32
    %c0_i32_0 = arith.constant 0 : i32
    return %arg0, %c0_i32 : i32, i32
  }
}

</mosaic_0001>

<llo_original>
// kernel: kernel_generated_0_forward.1
$region0: #{kernel_generated_0_forward.1}
  #allocation0 [shape = 'u32[]', space=smem, size = 0x4, offset = 0x4, fixed_abs, tag = 'smem constant byte address 0x4 - core index']
  #allocation1 [shape = 'u32[72,128]{1,0:T(1,128)}', space=vmem, size = 0x9000, scoped, tag = 'internal scratch']
  %s0 = inlined_call_operand.vmem [shape: f32[56,56,64], index: 0, kind: input, shape index: {}]
  %s1 = inlined_call_operand.vmem [shape: f32[192,64], index: 1, kind: input, shape index: {}]
  %s2 = inlined_call_operand.hbm [shape: f32[3136,64], index: 2, kind: output, shape index: {}]
  %s3 = sld [smem:[#allocation0]]
  $region41: #{kernel_generated_0_forward.1} parent=0
    _
  %s5 = ssub.s32 1, %s3
  %s6 = scalar_select 0, %s5, %s3
  $region1: #{kernel_generated_0_forward.1} parent=0
    #allocation2 [shape = 'u8[1605632]{0}', space=vmem, size = 0x188000, scoped, tag = 'output window, operand 0']
    #allocation3 [shape = 's32[2]{0}', space=sflag, size = 0x8, scoped, tag = 'scoped memory for kernel_generated_0_forward.1']
    %7 = vsyncpa [#allocation3], 0
    %s8 = scalar_lea.sflag [#allocation3], 1
    %9 = vsyncpa %s8, 0
    loop: start=0, step=1, limit=4
    $region2: #{kernel_generated_0_forward.1} parent=1 // loop_pre_header
      _
    $region3: #{kernel_generated_0_forward.1} parent=1 // loop_header
      %s11 = sphi 0, %s15
      %p12 = scmp.ge.s32.totalorder %s11, 4
      %s21 = sphi 0, %s23
      %s24 = sphi 0, %s21
      %s25 = sphi 0, %s24
      %s41 = sphi 0, %s25
      %s45 = sphi 0, %s45
      %s47 = sphi 0, %s45
      %s48 = sphi 0, %s47
      %s62 = sphi 0, %s48
      %s68 = sphi 0, %s70
      %s71 = sphi 0, %s68
      %s72 = sphi 0, %s71
      %s88 = sphi 0, %s72
    $region4: #{kernel_generated_0_forward.1} parent=1 // loop_header_branch
      %14 = sbr.rel (%p12) target = $region8
    $region5: #{kernel_generated_0_forward.1} parent=1 // loop_body
      %s16 = ssub.s32 %s11, 1
      %s17 = ssub.s32 %s11, 2
      %s18 = sadd.s32 %s11, 1
      %s19 = ssub.s32 %s11, %s18
      %p20 = scmp.eq.s32.totalorder %s19, 0
      %s22 = sadd.s32 %s21, 1
      %s23 = scalar_select %p20, %s21, %s22
      %p26 = pneg %p20
      %p27 = scmp.eq.s32.totalorder %s11, 1
      %p28 = por %p26, %p27
      %p29 = scmp.ne.s32.totalorder %s21, %s24
      %p30 = scmp.eq.s32.totalorder %s11, 0
      %p31 = por %p29, %p30
      %p32 = scmp.ne.s32.totalorder %s21, %s24
      %p33 = scmp.eq.s32.totalorder %s16, 1
      %p34 = por %p32, %p33
      %p35 = scmp.ne.s32.totalorder %s24, %s25
      %p36 = scmp.eq.s32.totalorder %s16, 0
      %p37 = por %p35, %p36
      %p38 = scmp.ne.s32.totalorder %s24, %s25
      %p39 = scmp.eq.s32.totalorder %s17, 1
      %p40 = por %p38, %p39
      %p42 = scmp.ne.s32.totalorder %s25, %s41
      %p43 = scmp.eq.s32.totalorder %s17, 0
      %p44 = por %p42, %p43
      %s46 = sadd.s32 %s45, 1
      %p49 = scmp.eq.s32.totalorder %s11, 1
      %p50 = scmp.ne.s32.totalorder %s45, %s47
      %p51 = scmp.eq.s32.totalorder %s11, 0
      %p52 = por %p50, %p51
      %p53 = scmp.ne.s32.totalorder %s45, %s47
      %p54 = scmp.eq.s32.totalorder %s16, 1
      %p55 = por %p53, %p54
      %p56 = scmp.ne.s32.totalorder %s47, %s48
      %p57 = scmp.eq.s32.totalorder %s16, 0
      %p58 = por %p56, %p57
      %p59 = scmp.ne.s32.totalorder %s47, %s48
      %p60 = scmp.eq.s32.totalorder %s17, 1
      %p61 = por %p59, %p60
      %p63 = scmp.ne.s32.totalorder %s48, %s62
      %p64 = scmp.eq.s32.totalorder %s17, 0
      %p65 = por %p63, %p64
      %s66 = ssub.s32 %s11, %s18
      %p67 = scmp.eq.s32.totalorder %s66, 0
      %s69 = sadd.s32 %s68, 1
      %s70 = scalar_select %p67, %s68, %s69
      %p73 = pneg %p67
      %p74 = scmp.eq.s32.totalorder %s11, 1
      %p75 = por %p73, %p74
      %p76 = scmp.ne.s32.totalorder %s68, %s71
      %p77 = scmp.eq.s32.totalorder %s11, 0
      %p78 = por %p76, %p77
      %p79 = scmp.ne.s32.totalorder %s68, %s71
      %p80 = scmp.eq.s32.totalorder %s16, 1
      %p81 = por %p79, %p80
      %p82 = scmp.ne.s32.totalorder %s71, %s72
      %p83 = scmp.eq.s32.totalorder %s16, 0
      %p84 = por %p82, %p83
      %p85 = scmp.ne.s32.totalorder %s71, %s72
      %p86 = scmp.eq.s32.totalorder %s17, 1
      %p87 = por %p85, %p86
      %p89 = scmp.ne.s32.totalorder %s72, %s88
      %p90 = scmp.eq.s32.totalorder %s17, 0
      %p91 = por %p89, %p90
      %p92 = scmp.le.s32.totalorder 1, %s11
      %p93 = scmp.lt.s32.totalorder %s11, 3
      %p94 = pnand %p92, %p93
      %p95 = pneg %p94
      // Predicated region
      $region9: #{kernel_generated_0_forward.1} parent=5 // pred_check
        _
      $region10: #{kernel_generated_0_forward.1} parent=5 // pred_check_branch
        %97 = sbr.rel (%p94) target = $region12
      $region11: #{kernel_generated_0_forward.1} parent=5 // pred_region
        %s98 = ssub.s32 %s11, 1
        // Predicated region
        $region13: #{kernel_generated_0_forward.1} parent=11 // pred_check
          %p99 = pneg %p58
        $region14: #{kernel_generated_0_forward.1} parent=11 // pred_check_branch
          %101 = sbr.rel (%p99) target = $region16
        $region15: #{kernel_generated_0_forward.1} parent=11 // pred_region
          _
        $region16: #{kernel_generated_0_forward.1} parent=11 // pred_fallthru
          _
      $region12: #{kernel_generated_0_forward.1} parent=5 // pred_fallthru
        _
      %p102 = scmp.lt.s32.totalorder %s11, 2
      // Predicated region
      $region17: #{kernel_generated_0_forward.1} parent=5 // pred_check
        %p103 = pneg %p102
      $region18: #{kernel_generated_0_forward.1} parent=5 // pred_check_branch
        %105 = sbr.rel (%p103) target = $region20
      $region19: #{kernel_generated_0_forward.1} parent=5 // pred_region
        // Predicated region
        $region21: #{kernel_generated_0_forward.1} parent=19 // pred_check
          %p106 = pneg %p31
        $region22: #{kernel_generated_0_forward.1} parent=19 // pred_check_branch
          %108 = sbr.rel (%p106) target = $region24
        $region23: #{kernel_generated_0_forward.1} parent=19 // pred_region
          %s109 = smul.u32 28, %s11
          %p110 = scmp.lt.s32.totalorder %s109, 55
          %s111 = scalar_select %p110, %s109, 55
          %s112 = smul.addr %s111, 7
          %s113 = smul.addr %s112, 8
          %s114 = scalar_lea.vmem %s0, %s113
          %s115 = smul.u32 28, %s11
        $region24: #{kernel_generated_0_forward.1} parent=19 // pred_fallthru
          _
      $region20: #{kernel_generated_0_forward.1} parent=5 // pred_fallthru
        _
      %p116 = scmp.le.s32.totalorder 1, %s11
      %p117 = scmp.lt.s32.totalorder %s11, 3
      %p118 = pnand %p116, %p117
      %p119 = pneg %p118
      // Predicated region
      $region25: #{kernel_generated_0_forward.1} parent=5 // pred_check
        _
      $region26: #{kernel_generated_0_forward.1} parent=5 // pred_check_branch
        %121 = sbr.rel (%p118) target = $region28
      $region27: #{kernel_generated_0_forward.1} parent=5 // pred_region
        %s122 = ssub.s32 %s11, 1
        %s123 = smul.u32 28, %s16
        %p124 = scmp.lt.s32.totalorder %s123, 55
        %s125 = scalar_select %p124, %s123, 55
        %s126 = smul.addr %s125, 7
        %s127 = smul.addr %s126, 8
        %s128 = scalar_lea.vmem %s0, %s127
        %p129 = pneg %p37
        %p130 = pneg %p34
        %p131 = pneg %p58
        %p132 = pneg %p55
        %p133 = pneg %p84
        %p134 = pneg %p81
        %s135 = sand.u32 %s71, 1
        %s136 = scalar_lea.sflag [#allocation3], %s135
        %s137 = sand.u32 %s71, 1
        %s138 = smul.addr %s137, 1568
        %s139 = scalar_lea.vmem [#allocation2], %s138
        %s140 = smul.u32 28, %s16
        %p141 = scmp.lt.s32.totalorder %s140, 55
        %s142 = scalar_select %p141, %s140, 55
        %s143 = smul.addr %s142, 7
        %s144 = smul.addr %s143, 8
        %s145 = scalar_lea.vmem %s0, %s144
        %s146 = smul.u32 28, %s16
        %s147 = smul.u32 196, %s16
        %v148 = vld [vmem:[%s145] sm:$0xff]
        %v149 = vld [vmem:[%s145 + $0x8] sm:$0xff]
        %v150 = vld [vmem:[%s145 + $0x10] sm:$0xff]
        %v151 = vld [vmem:[%s145 + $0x18] sm:$0xff]
        %v152 = vld [vmem:[%s145 + $0x20] sm:$0xff]
        %v153 = vld [vmem:[%s145 + $0x28] sm:$0xff]
        %v154 = vld [vmem:[%s145 + $0x30] sm:$0xff]
        %v155 = vld [vmem:[%s145 + $0x38] sm:$0xff]
        %v156 = vld [vmem:[%s145 + $0x40] sm:$0xff]
        %v157 = vld [vmem:[%s145 + $0x48] sm:$0xff]
        %v158 = vld [vmem:[%s145 + $0x50] sm:$0xff]
        %v159 = vld [vmem:[%s145 + $0x58] sm:$0xff]
        %v160 = vld [vmem:[%s145 + $0x60] sm:$0xff]
        %v161 = vld [vmem:[%s145 + $0x68] sm:$0xff]
        %v162 = vld [vmem:[%s145 + $0x70] sm:$0xff]
        %v163 = vld [vmem:[%s145 + $0x78] sm:$0xff]
        %v164 = vld [vmem:[%s145 + $0x80] sm:$0xff]
        %v165 = vld [vmem:[%s145 + $0x88] sm:$0xff]
        %v166 = vld [vmem:[%s145 + $0x90] sm:$0xff]
        %v167 = vld [vmem:[%s145 + $0x98] sm:$0xff]
        %v168 = vld [vmem:[%s145 + $0xa0] sm:$0xff]
        %v169 = vld [vmem:[%s145 + $0xa8] sm:$0xff]
        %v170 = vld [vmem:[%s145 + $0xb0] sm:$0xff]
        %v171 = vld [vmem:[%s145 + $0xb8] sm:$0xff]
        %v172 = vld [vmem:[%s145 + $0xc0] sm:$0xff]
        %v173 = vld [vmem:[%s145 + $0xc8] sm:$0xff]
        %v174 = vld [vmem:[%s145 + $0xd0] sm:$0xff]
        %v175 = vld [vmem:[%s145 + $0xd8] sm:$0xff]
        %v176 = vld [vmem:[%s145 + $0xe0] sm:$0xff]
        %v177 = vld [vmem:[%s145 + $0xe8] sm:$0xff]
        %v178 = vld [vmem:[%s145 + $0xf0] sm:$0xff]
        %v179 = vld [vmem:[%s145 + $0xf8] sm:$0xff]
        %v180 = vld [vmem:[%s145 + $0x100] sm:$0xff]
        %v181 = vld [vmem:[%s145 + $0x108] sm:$0xff]
        %v182 = vld [vmem:[%s145 + $0x110] sm:$0xff]
        %v183 = vld [vmem:[%s145 + $0x118] sm:$0xff]
        %v184 = vld [vmem:[%s145 + $0x120] sm:$0xff]
        %v185 = vld [vmem:[%s145 + $0x128] sm:$0xff]
        %v186 = vld [vmem:[%s145 + $0x130] sm:$0xff]
        %v187 = vld [vmem:[%s145 + $0x138] sm:$0xff]
        %v188 = vld [vmem:[%s145 + $0x140] sm:$0xff]
        %v189 = vld [vmem:[%s145 + $0x148] sm:$0xff]
        %v190 = vld [vmem:[%s145 + $0x150] sm:$0xff]
        %v191 = vld [vmem:[%s145 + $0x158] sm:$0xff]
        %v192 = vld [vmem:[%s145 + $0x160] sm:$0xff]
        %v193 = vld [vmem:[%s145 + $0x168] sm:$0xff]
        %v194 = vld [vmem:[%s145 + $0x170] sm:$0xff]
        %v195 = vld [vmem:[%s145 + $0x178] sm:$0xff]
        %v196 = vld [vmem:[%s145 + $0x180] sm:$0xff]
        %v197 = vld [vmem:[%s145 + $0x188] sm:$0xff]
        %v198 = vld [vmem:[%s145 + $0x190] sm:$0xff]
        %v199 = vld [vmem:[%s145 + $0x198] sm:$0xff]
        %v200 = vld [vmem:[%s145 + $0x1a0] sm:$0xff]
        %v201 = vld [vmem:[%s145 + $0x1a8] sm:$0xff]
        %v202 = vld [vmem:[%s145 + $0x1b0] sm:$0xff]
        %v203 = vld [vmem:[%s145 + $0x1b8] sm:$0xff]
        %v204 = vld [vmem:[%s145 + $0x1c0] sm:$0xff]
        %v205 = vld [vmem:[%s145 + $0x1c8] sm:$0xff]
        %v206 = vld [vmem:[%s145 + $0x1d0] sm:$0xff]
        %v207 = vld [vmem:[%s145 + $0x1d8] sm:$0xff]
        %v208 = vld [vmem:[%s145 + $0x1e0] sm:$0xff]
        %v209 = vld [vmem:[%s145 + $0x1e8] sm:$0xff]
        %v210 = vld [vmem:[%s145 + $0x1f0] sm:$0xff]
        %v211 = vld [vmem:[%s145 + $0x1f8] sm:$0xff]
        %v212 = vld [vmem:[%s145 + $0x200] sm:$0xff]
        %v213 = vld [vmem:[%s145 + $0x208] sm:$0xff]
        %v214 = vld [vmem:[%s145 + $0x210] sm:$0xff]
        %v215 = vld [vmem:[%s145 + $0x218] sm:$0xff]
        %v216 = vld [vmem:[%s145 + $0x220] sm:$0xff]
        %v217 = vld [vmem:[%s145 + $0x228] sm:$0xff]
        %v218 = vld [vmem:[%s145 + $0x230] sm:$0xff]
        %v219 = vld [vmem:[%s145 + $0x238] sm:$0xff]
        %v220 = vld [vmem:[%s145 + $0x240] sm:$0xff]
        %v221 = vld [vmem:[%s145 + $0x248] sm:$0xff]
        %v222 = vld [vmem:[%s145 + $0x250] sm:$0xff]
        %v223 = vld [vmem:[%s145 + $0x258] sm:$0xff]
        %v224 = vld [vmem:[%s145 + $0x260] sm:$0xff]
        %v225 = vld [vmem:[%s145 + $0x268] sm:$0xff]
        %v226 = vld [vmem:[%s145 + $0x270] sm:$0xff]
        %v227 = vld [vmem:[%s145 + $0x278] sm:$0xff]
        %v228 = vld [vmem:[%s145 + $0x280] sm:$0xff]
        %v229 = vld [vmem:[%s145 + $0x288] sm:$0xff]
        %v230 = vld [vmem:[%s145 + $0x290] sm:$0xff]
        %v231 = vld [vmem:[%s145 + $0x298] sm:$0xff]
        %v232 = vld [vmem:[%s145 + $0x2a0] sm:$0xff]
        %v233 = vld [vmem:[%s145 + $0x2a8] sm:$0xff]
        %v234 = vld [vmem:[%s145 + $0x2b0] sm:$0xff]
        %v235 = vld [vmem:[%s145 + $0x2b8] sm:$0xff]
        %v236 = vld [vmem:[%s145 + $0x2c0] sm:$0xff]
        %v237 = vld [vmem:[%s145 + $0x2c8] sm:$0xff]
        %v238 = vld [vmem:[%s145 + $0x2d0] sm:$0xff]
        %v239 = vld [vmem:[%s145 + $0x2d8] sm:$0xff]
        %v240 = vld [vmem:[%s145 + $0x2e0] sm:$0xff]
        %v241 = vld [vmem:[%s145 + $0x2e8] sm:$0xff]
        %v242 = vld [vmem:[%s145 + $0x2f0] sm:$0xff]
        %v243 = vld [vmem:[%s145 + $0x2f8] sm:$0xff]
        %v244 = vld [vmem:[%s145 + $0x300] sm:$0xff]
        %v245 = vld [vmem:[%s145 + $0x308] sm:$0xff]
        %v246 = vld [vmem:[%s145 + $0x310] sm:$0xff]
        %v247 = vld [vmem:[%s145 + $0x318] sm:$0xff]
        %v248 = vld [vmem:[%s145 + $0x320] sm:$0xff]
        %v249 = vld [vmem:[%s145 + $0x328] sm:$0xff]
        %v250 = vld [vmem:[%s145 + $0x330] sm:$0xff]
        %v251 = vld [vmem:[%s145 + $0x338] sm:$0xff]
        %v252 = vld [vmem:[%s145 + $0x340] sm:$0xff]
        %v253 = vld [vmem:[%s145 + $0x348] sm:$0xff]
        %v254 = vld [vmem:[%s145 + $0x350] sm:$0xff]
        %v255 = vld [vmem:[%s145 + $0x358] sm:$0xff]
        %v256 = vld [vmem:[%s145 + $0x360] sm:$0xff]
        %v257 = vld [vmem:[%s145 + $0x368] sm:$0xff]
        %v258 = vld [vmem:[%s145 + $0x370] sm:$0xff]
        %v259 = vld [vmem:[%s145 + $0x378] sm:$0xff]
        %v260 = vld [vmem:[%s145 + $0x380] sm:$0xff]
        %v261 = vld [vmem:[%s145 + $0x388] sm:$0xff]
        %v262 = vld [vmem:[%s145 + $0x390] sm:$0xff]
        %v263 = vld [vmem:[%s145 + $0x398] sm:$0xff]
        %v264 = vld [vmem:[%s145 + $0x3a0] sm:$0xff]
        %v265 = vld [vmem:[%s145 + $0x3a8] sm:$0xff]
        %v266 = vld [vmem:[%s145 + $0x3b0] sm:$0xff]
        %v267 = vld [vmem:[%s145 + $0x3b8] sm:$0xff]
        %v268 = vld [vmem:[%s145 + $0x3c0] sm:$0xff]
        %v269 = vld [vmem:[%s145 + $0x3c8] sm:$0xff]
        %v270 = vld [vmem:[%s145 + $0x3d0] sm:$0xff]
        %v271 = vld [vmem:[%s145 + $0x3d8] sm:$0xff]
        %v272 = vld [vmem:[%s145 + $0x3e0] sm:$0xff]
        %v273 = vld [vmem:[%s145 + $0x3e8] sm:$0xff]
        %v274 = vld [vmem:[%s145 + $0x3f0] sm:$0xff]
        %v275 = vld [vmem:[%s145 + $0x3f8] sm:$0xff]
        %v276 = vld [vmem:[%s145 + $0x400] sm:$0xff]
        %v277 = vld [vmem:[%s145 + $0x408] sm:$0xff]
        %v278 = vld [vmem:[%s145 + $0x410] sm:$0xff]
        %v279 = vld [vmem:[%s145 + $0x418] sm:$0xff]
        %v280 = vld [vmem:[%s145 + $0x420] sm:$0xff]
        %v281 = vld [vmem:[%s145 + $0x428] sm:$0xff]
        %v282 = vld [vmem:[%s145 + $0x430] sm:$0xff]
        %v283 = vld [vmem:[%s145 + $0x438] sm:$0xff]
        %v284 = vld [vmem:[%s145 + $0x440] sm:$0xff]
        %v285 = vld [vmem:[%s145 + $0x448] sm:$0xff]
        %v286 = vld [vmem:[%s145 + $0x450] sm:$0xff]
        %v287 = vld [vmem:[%s145 + $0x458] sm:$0xff]
        %v288 = vld [vmem:[%s145 + $0x460] sm:$0xff]
        %v289 = vld [vmem:[%s145 + $0x468] sm:$0xff]
        %v290 = vld [vmem:[%s145 + $0x470] sm:$0xff]
        %v291 = vld [vmem:[%s145 + $0x478] sm:$0xff]
        %v292 = vld [vmem:[%s145 + $0x480] sm:$0xff]
        %v293 = vld [vmem:[%s145 + $0x488] sm:$0xff]
        %v294 = vld [vmem:[%s145 + $0x490] sm:$0xff]
        %v295 = vld [vmem:[%s145 + $0x498] sm:$0xff]
        %v296 = vld [vmem:[%s145 + $0x4a0] sm:$0xff]
        %v297 = vld [vmem:[%s145 + $0x4a8] sm:$0xff]
        %v298 = vld [vmem:[%s145 + $0x4b0] sm:$0xff]
        %v299 = vld [vmem:[%s145 + $0x4b8] sm:$0xff]
        %v300 = vld [vmem:[%s145 + $0x4c0] sm:$0xff]
        %v301 = vld [vmem:[%s145 + $0x4c8] sm:$0xff]
        %v302 = vld [vmem:[%s145 + $0x4d0] sm:$0xff]
        %v303 = vld [vmem:[%s145 + $0x4d8] sm:$0xff]
        %v304 = vld [vmem:[%s145 + $0x4e0] sm:$0xff]
        %v305 = vld [vmem:[%s145 + $0x4e8] sm:$0xff]
        %v306 = vld [vmem:[%s145 + $0x4f0] sm:$0xff]
        %v307 = vld [vmem:[%s145 + $0x4f8] sm:$0xff]
        %v308 = vld [vmem:[%s145 + $0x500] sm:$0xff]
        %v309 = vld [vmem:[%s145 + $0x508] sm:$0xff]
        %v310 = vld [vmem:[%s145 + $0x510] sm:$0xff]
        %v311 = vld [vmem:[%s145 + $0x518] sm:$0xff]
        %v312 = vld [vmem:[%s145 + $0x520] sm:$0xff]
        %v313 = vld [vmem:[%s145 + $0x528] sm:$0xff]
        %v314 = vld [vmem:[%s145 + $0x530] sm:$0xff]
        %v315 = vld [vmem:[%s145 + $0x538] sm:$0xff]
        %v316 = vld [vmem:[%s145 + $0x540] sm:$0xff]
        %v317 = vld [vmem:[%s145 + $0x548] sm:$0xff]
        %v318 = vld [vmem:[%s145 + $0x550] sm:$0xff]
        %v319 = vld [vmem:[%s145 + $0x558] sm:$0xff]
        %v320 = vld [vmem:[%s145 + $0x560] sm:$0xff]
        %v321 = vld [vmem:[%s145 + $0x568] sm:$0xff]
        %v322 = vld [vmem:[%s145 + $0x570] sm:$0xff]
        %v323 = vld [vmem:[%s145 + $0x578] sm:$0xff]
        %v324 = vld [vmem:[%s145 + $0x580] sm:$0xff]
        %v325 = vld [vmem:[%s145 + $0x588] sm:$0xff]
        %v326 = vld [vmem:[%s145 + $0x590] sm:$0xff]
        %v327 = vld [vmem:[%s145 + $0x598] sm:$0xff]
        %v328 = vld [vmem:[%s145 + $0x5a0] sm:$0xff]
        %v329 = vld [vmem:[%s145 + $0x5a8] sm:$0xff]
        %v330 = vld [vmem:[%s145 + $0x5b0] sm:$0xff]
        %v331 = vld [vmem:[%s145 + $0x5b8] sm:$0xff]
        %v332 = vld [vmem:[%s145 + $0x5c0] sm:$0xff]
        %v333 = vld [vmem:[%s145 + $0x5c8] sm:$0xff]
        %v334 = vld [vmem:[%s145 + $0x5d0] sm:$0xff]
        %v335 = vld [vmem:[%s145 + $0x5d8] sm:$0xff]
        %v336 = vld [vmem:[%s145 + $0x5e0] sm:$0xff]
        %v337 = vld [vmem:[%s145 + $0x5e8] sm:$0xff]
        %v338 = vld [vmem:[%s145 + $0x5f0] sm:$0xff]
        %v339 = vld [vmem:[%s145 + $0x5f8] sm:$0xff]
        %v340 = vld [vmem:[%s145 + $0x600] sm:$0xff]
        %v341 = vld [vmem:[%s145 + $0x608] sm:$0xff]
        %v342 = vld [vmem:[%s145 + $0x610] sm:$0xff]
        %v343 = vld [vmem:[%s145 + $0x618] sm:$0xff]
        %v344 = vlaneseq
        %v345 = vshrl.u32 %v344, 7
        %v346 = vadd.s32 %v345, 8
        %v347 = vadd.s32 %v345, 16
        %v348 = vadd.s32 %v345, 24
        %v349 = vadd.s32 %v345, 32
        %v350 = vadd.s32 %v345, 40
        %v351 = vadd.s32 %v345, 48
        %v380 = vrot.slane %v154, 6
        %v381 = vrot.slane %v161, 6
        %v382 = vrot.slane %v168, 6
        %v383 = vrot.slane %v175, 6
        %v384 = vrot.slane %v182, 6
        %v385 = vrot.slane %v189, 6
        %v386 = vrot.slane %v196, 6
        %v387 = vrot.slane %v203, 6
        %v388 = vrot.slane %v210, 6
        %v389 = vrot.slane %v217, 6
        %v390 = vrot.slane %v224, 6
        %v391 = vrot.slane %v231, 6
        %v392 = vrot.slane %v238, 6
        %v393 = vrot.slane %v245, 6
        %v394 = vrot.slane %v252, 6
        %v395 = vrot.slane %v259, 6
        %v396 = vrot.slane %v266, 6
        %v397 = vrot.slane %v273, 6
        %v398 = vrot.slane %v280, 6
        %v399 = vrot.slane %v287, 6
        %v400 = vrot.slane %v294, 6
        %v401 = vrot.slane %v301, 6
        %v402 = vrot.slane %v308, 6
        %v403 = vrot.slane %v315, 6
        %v404 = vrot.slane %v322, 6
        %v405 = vrot.slane %v329, 6
        %v406 = vrot.slane %v336, 6
        %v407 = vrot.slane %v343, 6
        %vm604 = vcmask 1041408
        %v605 = vrot.slane %v148, 6
        %v606 = vrot.slane %v149, 6
        %v607 = vsel %vm604, %v605, %v606
        %v608 = vrot.slane %v150, 6
        %v609 = vsel %vm604, %v606, %v608
        %v610 = vrot.slane %v151, 6
        %v611 = vsel %vm604, %v608, %v610
        %v612 = vrot.slane %v152, 6
        %v613 = vsel %vm604, %v610, %v612
        %v614 = vrot.slane %v153, 6
        %v615 = vsel %vm604, %v612, %v614
        %v616 = vsel %vm604, %v614, %v380
        %v617 = vrot.slane %v155, 6
        %v618 = vrot.slane %v156, 6
        %v619 = vsel %vm604, %v617, %v618
        %v620 = vrot.slane %v157, 6
        %v621 = vsel %vm604, %v618, %v620
        %v622 = vrot.slane %v158, 6
        %v623 = vsel %vm604, %v620, %v622
        %v624 = vrot.slane %v159, 6
        %v625 = vsel %vm604, %v622, %v624
        %v626 = vrot.slane %v160, 6
        %v627 = vsel %vm604, %v624, %v626
        %v628 = vsel %vm604, %v626, %v381
        %v629 = vrot.slane %v162, 6
        %v630 = vrot.slane %v163, 6
        %v631 = vsel %vm604, %v629, %v630
        %v632 = vrot.slane %v164, 6
        %v633 = vsel %vm604, %v630, %v632
        %v634 = vrot.slane %v165, 6
        %v635 = vsel %vm604, %v632, %v634
        %v636 = vrot.slane %v166, 6
        %v637 = vsel %vm604, %v634, %v636
        %v638 = vrot.slane %v167, 6
        %v639 = vsel %vm604, %v636, %v638
        %v640 = vsel %vm604, %v638, %v382
        %v641 = vrot.slane %v169, 6
        %v642 = vrot.slane %v170, 6
        %v643 = vsel %vm604, %v641, %v642
        %v644 = vrot.slane %v171, 6
        %v645 = vsel %vm604, %v642, %v644
        %v646 = vrot.slane %v172, 6
        %v647 = vsel %vm604, %v644, %v646
        %v648 = vrot.slane %v173, 6
        %v649 = vsel %vm604, %v646, %v648
        %v650 = vrot.slane %v174, 6
        %v651 = vsel %vm604, %v648, %v650
        %v652 = vsel %vm604, %v650, %v383
        %v653 = vrot.slane %v176, 6
        %v654 = vrot.slane %v177, 6
        %v655 = vsel %vm604, %v653, %v654
        %v656 = vrot.slane %v178, 6
        %v657 = vsel %vm604, %v654, %v656
        %v658 = vrot.slane %v179, 6
        %v659 = vsel %vm604, %v656, %v658
        %v660 = vrot.slane %v180, 6
        %v661 = vsel %vm604, %v658, %v660
        %v662 = vrot.slane %v181, 6
        %v663 = vsel %vm604, %v660, %v662
        %v664 = vsel %vm604, %v662, %v384
        %v665 = vrot.slane %v183, 6
        %v666 = vrot.slane %v184, 6
        %v667 = vsel %vm604, %v665, %v666
        %v668 = vrot.slane %v185, 6
        %v669 = vsel %vm604, %v666, %v668
        %v670 = vrot.slane %v186, 6
        %v671 = vsel %vm604, %v668, %v670
        %v672 = vrot.slane %v187, 6
        %v673 = vsel %vm604, %v670, %v672
        %v674 = vrot.slane %v188, 6
        %v675 = vsel %vm604, %v672, %v674
        %v676 = vsel %vm604, %v674, %v385
        %v677 = vrot.slane %v190, 6
        %v678 = vrot.slane %v191, 6
        %v679 = vsel %vm604, %v677, %v678
        %v680 = vrot.slane %v192, 6
        %v681 = vsel %vm604, %v678, %v680
        %v682 = vrot.slane %v193, 6
        %v683 = vsel %vm604, %v680, %v682
        %v684 = vrot.slane %v194, 6
        %v685 = vsel %vm604, %v682, %v684
        %v686 = vrot.slane %v195, 6
        %v687 = vsel %vm604, %v684, %v686
        %v688 = vsel %vm604, %v686, %v386
        %v689 = vrot.slane %v197, 6
        %v690 = vrot.slane %v198, 6
        %v691 = vsel %vm604, %v689, %v690
        %v692 = vrot.slane %v199, 6
        %v693 = vsel %vm604, %v690, %v692
        %v694 = vrot.slane %v200, 6
        %v695 = vsel %vm604, %v692, %v694
        %v696 = vrot.slane %v201, 6
        %v697 = vsel %vm604, %v694, %v696
        %v698 = vrot.slane %v202, 6
        %v699 = vsel %vm604, %v696, %v698
        %v700 = vsel %vm604, %v698, %v387
        %v701 = vrot.slane %v204, 6
        %v702 = vrot.slane %v205, 6
        %v703 = vsel %vm604, %v701, %v702
        %v704 = vrot.slane %v206, 6
        %v705 = vsel %vm604, %v702, %v704
        %v706 = vrot.slane %v207, 6
        %v707 = vsel %vm604, %v704, %v706
        %v708 = vrot.slane %v208, 6
        %v709 = vsel %vm604, %v706, %v708
        %v710 = vrot.slane %v209, 6
        %v711 = vsel %vm604, %v708, %v710
        %v712 = vsel %vm604, %v710, %v388
        %v713 = vrot.slane %v211, 6
        %v714 = vrot.slane %v212, 6
        %v715 = vsel %vm604, %v713, %v714
        %v716 = vrot.slane %v213, 6
        %v717 = vsel %vm604, %v714, %v716
        %v718 = vrot.slane %v214, 6
        %v719 = vsel %vm604, %v716, %v718
        %v720 = vrot.slane %v215, 6
        %v721 = vsel %vm604, %v718, %v720
        %v722 = vrot.slane %v216, 6
        %v723 = vsel %vm604, %v720, %v722
        %v724 = vsel %vm604, %v722, %v389
        %v725 = vrot.slane %v218, 6
        %v726 = vrot.slane %v219, 6
        %v727 = vsel %vm604, %v725, %v726
        %v728 = vrot.slane %v220, 6
        %v729 = vsel %vm604, %v726, %v728
        %v730 = vrot.slane %v221, 6
        %v731 = vsel %vm604, %v728, %v730
        %v732 = vrot.slane %v222, 6
        %v733 = vsel %vm604, %v730, %v732
        %v734 = vrot.slane %v223, 6
        %v735 = vsel %vm604, %v732, %v734
        %v736 = vsel %vm604, %v734, %v390
        %v737 = vrot.slane %v225, 6
        %v738 = vrot.slane %v226, 6
        %v739 = vsel %vm604, %v737, %v738
        %v740 = vrot.slane %v227, 6
        %v741 = vsel %vm604, %v738, %v740
        %v742 = vrot.slane %v228, 6
        %v743 = vsel %vm604, %v740, %v742
        %v744 = vrot.slane %v229, 6
        %v745 = vsel %vm604, %v742, %v744
        %v746 = vrot.slane %v230, 6
        %v747 = vsel %vm604, %v744, %v746
        %v748 = vsel %vm604, %v746, %v391
        %v749 = vrot.slane %v232, 6
        %v750 = vrot.slane %v233, 6
        %v751 = vsel %vm604, %v749, %v750
        %v752 = vrot.slane %v234, 6
        %v753 = vsel %vm604, %v750, %v752
        %v754 = vrot.slane %v235, 6
        %v755 = vsel %vm604, %v752, %v754
        %v756 = vrot.slane %v236, 6
        %v757 = vsel %vm604, %v754, %v756
        %v758 = vrot.slane %v237, 6
        %v759 = vsel %vm604, %v756, %v758
        %v760 = vsel %vm604, %v758, %v392
        %v761 = vrot.slane %v239, 6
        %v762 = vrot.slane %v240, 6
        %v763 = vsel %vm604, %v761, %v762
        %v764 = vrot.slane %v241, 6
        %v765 = vsel %vm604, %v762, %v764
        %v766 = vrot.slane %v242, 6
        %v767 = vsel %vm604, %v764, %v766
        %v768 = vrot.slane %v243, 6
        %v769 = vsel %vm604, %v766, %v768
        %v770 = vrot.slane %v244, 6
        %v771 = vsel %vm604, %v768, %v770
        %v772 = vsel %vm604, %v770, %v393
        %v773 = vrot.slane %v246, 6
        %v774 = vrot.slane %v247, 6
        %v775 = vsel %vm604, %v773, %v774
        %v776 = vrot.slane %v248, 6
        %v777 = vsel %vm604, %v774, %v776
        %v778 = vrot.slane %v249, 6
        %v779 = vsel %vm604, %v776, %v778
        %v780 = vrot.slane %v250, 6
        %v781 = vsel %vm604, %v778, %v780
        %v782 = vrot.slane %v251, 6
        %v783 = vsel %vm604, %v780, %v782
        %v784 = vsel %vm604, %v782, %v394
        %v785 = vrot.slane %v253, 6
        %v786 = vrot.slane %v254, 6
        %v787 = vsel %vm604, %v785, %v786
        %v788 = vrot.slane %v255, 6
        %v789 = vsel %vm604, %v786, %v788
        %v790 = vrot.slane %v256, 6
        %v791 = vsel %vm604, %v788, %v790
        %v792 = vrot.slane %v257, 6
        %v793 = vsel %vm604, %v790, %v792
        %v794 = vrot.slane %v258, 6
        %v795 = vsel %vm604, %v792, %v794
        %v796 = vsel %vm604, %v794, %v395
        %v797 = vrot.slane %v260, 6
        %v798 = vrot.slane %v261, 6
        %v799 = vsel %vm604, %v797, %v798
        %v800 = vrot.slane %v262, 6
        %v801 = vsel %vm604, %v798, %v800
        %v802 = vrot.slane %v263, 6
        %v803 = vsel %vm604, %v800, %v802
        %v804 = vrot.slane %v264, 6
        %v805 = vsel %vm604, %v802, %v804
        %v806 = vrot.slane %v265, 6
        %v807 = vsel %vm604, %v804, %v806
        %v808 = vsel %vm604, %v806, %v396
        %v809 = vrot.slane %v267, 6
        %v810 = vrot.slane %v268, 6
        %v811 = vsel %vm604, %v809, %v810
        %v812 = vrot.slane %v269, 6
        %v813 = vsel %vm604, %v810, %v812
        %v814 = vrot.slane %v270, 6
        %v815 = vsel %vm604, %v812, %v814
        %v816 = vrot.slane %v271, 6
        %v817 = vsel %vm604, %v814, %v816
        %v818 = vrot.slane %v272, 6
        %v819 = vsel %vm604, %v816, %v818
        %v820 = vsel %vm604, %v818, %v397
        %v821 = vrot.slane %v274, 6
        %v822 = vrot.slane %v275, 6
        %v823 = vsel %vm604, %v821, %v822
        %v824 = vrot.slane %v276, 6
        %v825 = vsel %vm604, %v822, %v824
        %v826 = vrot.slane %v277, 6
        %v827 = vsel %vm604, %v824, %v826
        %v828 = vrot.slane %v278, 6
        %v829 = vsel %vm604, %v826, %v828
        %v830 = vrot.slane %v279, 6
        %v831 = vsel %vm604, %v828, %v830
        %v832 = vsel %vm604, %v830, %v398
        %v833 = vrot.slane %v281, 6
        %v834 = vrot.slane %v282, 6
        %v835 = vsel %vm604, %v833, %v834
        %v836 = vrot.slane %v283, 6
        %v837 = vsel %vm604, %v834, %v836
        %v838 = vrot.slane %v284, 6
        %v839 = vsel %vm604, %v836, %v838
        %v840 = vrot.slane %v285, 6
        %v841 = vsel %vm604, %v838, %v840
        %v842 = vrot.slane %v286, 6
        %v843 = vsel %vm604, %v840, %v842
        %v844 = vsel %vm604, %v842, %v399
        %v845 = vrot.slane %v288, 6
        %v846 = vrot.slane %v289, 6
        %v847 = vsel %vm604, %v845, %v846
        %v848 = vrot.slane %v290, 6
        %v849 = vsel %vm604, %v846, %v848
        %v850 = vrot.slane %v291, 6
        %v851 = vsel %vm604, %v848, %v850
        %v852 = vrot.slane %v292, 6
        %v853 = vsel %vm604, %v850, %v852
        %v854 = vrot.slane %v293, 6
        %v855 = vsel %vm604, %v852, %v854
        %v856 = vsel %vm604, %v854, %v400
        %v857 = vrot.slane %v295, 6
        %v858 = vrot.slane %v296, 6
        %v859 = vsel %vm604, %v857, %v858
        %v860 = vrot.slane %v297, 6
        %v861 = vsel %vm604, %v858, %v860
        %v862 = vrot.slane %v298, 6
        %v863 = vsel %vm604, %v860, %v862
        %v864 = vrot.slane %v299, 6
        %v865 = vsel %vm604, %v862, %v864
        %v866 = vrot.slane %v300, 6
        %v867 = vsel %vm604, %v864, %v866
        %v868 = vsel %vm604, %v866, %v401
        %v869 = vrot.slane %v302, 6
        %v870 = vrot.slane %v303, 6
        %v871 = vsel %vm604, %v869, %v870
        %v872 = vrot.slane %v304, 6
        %v873 = vsel %vm604, %v870, %v872
        %v874 = vrot.slane %v305, 6
        %v875 = vsel %vm604, %v872, %v874
        %v876 = vrot.slane %v306, 6
        %v877 = vsel %vm604, %v874, %v876
        %v878 = vrot.slane %v307, 6
        %v879 = vsel %vm604, %v876, %v878
        %v880 = vsel %vm604, %v878, %v402
        %v881 = vrot.slane %v309, 6
        %v882 = vrot.slane %v310, 6
        %v883 = vsel %vm604, %v881, %v882
        %v884 = vrot.slane %v311, 6
        %v885 = vsel %vm604, %v882, %v884
        %v886 = vrot.slane %v312, 6
        %v887 = vsel %vm604, %v884, %v886
        %v888 = vrot.slane %v313, 6
        %v889 = vsel %vm604, %v886, %v888
        %v890 = vrot.slane %v314, 6
        %v891 = vsel %vm604, %v888, %v890
        %v892 = vsel %vm604, %v890, %v403
        %v893 = vrot.slane %v316, 6
        %v894 = vrot.slane %v317, 6
        %v895 = vsel %vm604, %v893, %v894
        %v896 = vrot.slane %v318, 6
        %v897 = vsel %vm604, %v894, %v896
        %v898 = vrot.slane %v319, 6
        %v899 = vsel %vm604, %v896, %v898
        %v900 = vrot.slane %v320, 6
        %v901 = vsel %vm604, %v898, %v900
        %v902 = vrot.slane %v321, 6
        %v903 = vsel %vm604, %v900, %v902
        %v904 = vsel %vm604, %v902, %v404
        %v905 = vrot.slane %v323, 6
        %v906 = vrot.slane %v324, 6
        %v907 = vsel %vm604, %v905, %v906
        %v908 = vrot.slane %v325, 6
        %v909 = vsel %vm604, %v906, %v908
        %v910 = vrot.slane %v326, 6
        %v911 = vsel %vm604, %v908, %v910
        %v912 = vrot.slane %v327, 6
        %v913 = vsel %vm604, %v910, %v912
        %v914 = vrot.slane %v328, 6
        %v915 = vsel %vm604, %v912, %v914
        %v916 = vsel %vm604, %v914, %v405
        %v917 = vrot.slane %v330, 6
        %v918 = vrot.slane %v331, 6
        %v919 = vsel %vm604, %v917, %v918
        %v920 = vrot.slane %v332, 6
        %v921 = vsel %vm604, %v918, %v920
        %v922 = vrot.slane %v333, 6
        %v923 = vsel %vm604, %v920, %v922
        %v924 = vrot.slane %v334, 6
        %v925 = vsel %vm604, %v922, %v924
        %v926 = vrot.slane %v335, 6
        %v927 = vsel %vm604, %v924, %v926
        %v928 = vsel %vm604, %v926, %v406
        %v929 = vrot.slane %v337, 6
        %v930 = vrot.slane %v338, 6
        %v931 = vsel %vm604, %v929, %v930
        %v932 = vrot.slane %v339, 6
        %v933 = vsel %vm604, %v930, %v932
        %v934 = vrot.slane %v340, 6
        %v935 = vsel %vm604, %v932, %v934
        %v936 = vrot.slane %v341, 6
        %v937 = vsel %vm604, %v934, %v936
        %v938 = vrot.slane %v342, 6
        %v939 = vsel %vm604, %v936, %v938
        %v940 = vsel %vm604, %v938, %v407
        %v1137 = vsel %vm604, %v380, %v605
        %v1138 = vsel %vm604, %v381, %v617
        %v1139 = vsel %vm604, %v382, %v629
        %v1140 = vsel %vm604, %v383, %v641
        %v1141 = vsel %vm604, %v384, %v653
        %v1142 = vsel %vm604, %v385, %v665
        %v1143 = vsel %vm604, %v386, %v677
        %v1144 = vsel %vm604, %v387, %v689
        %v1145 = vsel %vm604, %v388, %v701
        %v1146 = vsel %vm604, %v389, %v713
        %v1147 = vsel %vm604, %v390, %v725
        %v1148 = vsel %vm604, %v391, %v737
        %v1149 = vsel %vm604, %v392, %v749
        %v1150 = vsel %vm604, %v393, %v761
        %v1151 = vsel %vm604, %v394, %v773
        %v1152 = vsel %vm604, %v395, %v785
        %v1153 = vsel %vm604, %v396, %v797
        %v1154 = vsel %vm604, %v397, %v809
        %v1155 = vsel %vm604, %v398, %v821
        %v1156 = vsel %vm604, %v399, %v833
        %v1157 = vsel %vm604, %v400, %v845
        %v1158 = vsel %vm604, %v401, %v857
        %v1159 = vsel %vm604, %v402, %v869
        %v1160 = vsel %vm604, %v403, %v881
        %v1161 = vsel %vm604, %v404, %v893
        %v1162 = vsel %vm604, %v405, %v905
        %v1163 = vsel %vm604, %v406, %v917
        %v1164 = vsel %vm604, %v407, %v929
        %vm1165 = vcmp.ge.s32.totalorder %v345, 1
        %vm1166 = vcmp.ge.s32.totalorder %v346, 1
        %vm1167 = vcmp.ge.s32.totalorder %v347, 1
        %vm1168 = vcmp.ge.s32.totalorder %v348, 1
        %vm1169 = vcmp.ge.s32.totalorder %v349, 1
        %vm1170 = vcmp.ge.s32.totalorder %v350, 1
        %vm1171 = vcmp.ge.s32.totalorder %v351, 1
        %v1172 = vsel %vm1165, %v1137, 0.0
        %v1173 = vsel %vm1166, %v607, 0.0
        %v1174 = vsel %vm1167, %v609, 0.0
        %v1175 = vsel %vm1168, %v611, 0.0
        %v1176 = vsel %vm1169, %v613, 0.0
        %v1177 = vsel %vm1170, %v615, 0.0
        %v1178 = vsel %vm1171, %v616, 0.0
        %v1179 = vsel %vm1165, %v1138, 0.0
        %v1180 = vsel %vm1166, %v619, 0.0
        %v1181 = vsel %vm1167, %v621, 0.0
        %v1182 = vsel %vm1168, %v623, 0.0
        %v1183 = vsel %vm1169, %v625, 0.0
        %v1184 = vsel %vm1170, %v627, 0.0
        %v1185 = vsel %vm1171, %v628, 0.0
        %v1186 = vsel %vm1165, %v1139, 0.0
        %v1187 = vsel %vm1166, %v631, 0.0
        %v1188 = vsel %vm1167, %v633, 0.0
        %v1189 = vsel %vm1168, %v635, 0.0
        %v1190 = vsel %vm1169, %v637, 0.0
        %v1191 = vsel %vm1170, %v639, 0.0
        %v1192 = vsel %vm1171, %v640, 0.0
        %v1193 = vsel %vm1165, %v1140, 0.0
        %v1194 = vsel %vm1166, %v643, 0.0
        %v1195 = vsel %vm1167, %v645, 0.0
        %v1196 = vsel %vm1168, %v647, 0.0
        %v1197 = vsel %vm1169, %v649, 0.0
        %v1198 = vsel %vm1170, %v651, 0.0
        %v1199 = vsel %vm1171, %v652, 0.0
        %v1200 = vsel %vm1165, %v1141, 0.0
        %v1201 = vsel %vm1166, %v655, 0.0
        %v1202 = vsel %vm1167, %v657, 0.0
        %v1203 = vsel %vm1168, %v659, 0.0
        %v1204 = vsel %vm1169, %v661, 0.0
        %v1205 = vsel %vm1170, %v663, 0.0
        %v1206 = vsel %vm1171, %v664, 0.0
        %v1207 = vsel %vm1165, %v1142, 0.0
        %v1208 = vsel %vm1166, %v667, 0.0
        %v1209 = vsel %vm1167, %v669, 0.0
        %v1210 = vsel %vm1168, %v671, 0.0
        %v1211 = vsel %vm1169, %v673, 0.0
        %v1212 = vsel %vm1170, %v675, 0.0
        %v1213 = vsel %vm1171, %v676, 0.0
        %v1214 = vsel %vm1165, %v1143, 0.0
        %v1215 = vsel %vm1166, %v679, 0.0
        %v1216 = vsel %vm1167, %v681, 0.0
        %v1217 = vsel %vm1168, %v683, 0.0
        %v1218 = vsel %vm1169, %v685, 0.0
        %v1219 = vsel %vm1170, %v687, 0.0
        %v1220 = vsel %vm1171, %v688, 0.0
        %v1221 = vsel %vm1165, %v1144, 0.0
        %v1222 = vsel %vm1166, %v691, 0.0
        %v1223 = vsel %vm1167, %v693, 0.0
        %v1224 = vsel %vm1168, %v695, 0.0
        %v1225 = vsel %vm1169, %v697, 0.0
        %v1226 = vsel %vm1170, %v699, 0.0
        %v1227 = vsel %vm1171, %v700, 0.0
        %v1228 = vsel %vm1165, %v1145, 0.0
        %v1229 = vsel %vm1166, %v703, 0.0
        %v1230 = vsel %vm1167, %v705, 0.0
        %v1231 = vsel %vm1168, %v707, 0.0
        %v1232 = vsel %vm1169, %v709, 0.0
        %v1233 = vsel %vm1170, %v711, 0.0
        %v1234 = vsel %vm1171, %v712, 0.0
        %v1235 = vsel %vm1165, %v1146, 0.0
        %v1236 = vsel %vm1166, %v715, 0.0
        %v1237 = vsel %vm1167, %v717, 0.0
        %v1238 = vsel %vm1168, %v719, 0.0
        %v1239 = vsel %vm1169, %v721, 0.0
        %v1240 = vsel %vm1170, %v723, 0.0
        %v1241 = vsel %vm1171, %v724, 0.0
        %v1242 = vsel %vm1165, %v1147, 0.0
        %v1243 = vsel %vm1166, %v727, 0.0
        %v1244 = vsel %vm1167, %v729, 0.0
        %v1245 = vsel %vm1168, %v731, 0.0
        %v1246 = vsel %vm1169, %v733, 0.0
        %v1247 = vsel %vm1170, %v735, 0.0
        %v1248 = vsel %vm1171, %v736, 0.0
        %v1249 = vsel %vm1165, %v1148, 0.0
        %v1250 = vsel %vm1166, %v739, 0.0
        %v1251 = vsel %vm1167, %v741, 0.0
        %v1252 = vsel %vm1168, %v743, 0.0
        %v1253 = vsel %vm1169, %v745, 0.0
        %v1254 = vsel %vm1170, %v747, 0.0
        %v1255 = vsel %vm1171, %v748, 0.0
        %v1256 = vsel %vm1165, %v1149, 0.0
        %v1257 = vsel %vm1166, %v751, 0.0
        %v1258 = vsel %vm1167, %v753, 0.0
        %v1259 = vsel %vm1168, %v755, 0.0
        %v1260 = vsel %vm1169, %v757, 0.0
        %v1261 = vsel %vm1170, %v759, 0.0
        %v1262 = vsel %vm1171, %v760, 0.0
        %v1263 = vsel %vm1165, %v1150, 0.0
        %v1264 = vsel %vm1166, %v763, 0.0
        %v1265 = vsel %vm1167, %v765, 0.0
        %v1266 = vsel %vm1168, %v767, 0.0
        %v1267 = vsel %vm1169, %v769, 0.0
        %v1268 = vsel %vm1170, %v771, 0.0
        %v1269 = vsel %vm1171, %v772, 0.0
        %v1270 = vsel %vm1165, %v1151, 0.0
        %v1271 = vsel %vm1166, %v775, 0.0
        %v1272 = vsel %vm1167, %v777, 0.0
        %v1273 = vsel %vm1168, %v779, 0.0
        %v1274 = vsel %vm1169, %v781, 0.0
        %v1275 = vsel %vm1170, %v783, 0.0
        %v1276 = vsel %vm1171, %v784, 0.0
        %v1277 = vsel %vm1165, %v1152, 0.0
        %v1278 = vsel %vm1166, %v787, 0.0
        %v1279 = vsel %vm1167, %v789, 0.0
        %v1280 = vsel %vm1168, %v791, 0.0
        %v1281 = vsel %vm1169, %v793, 0.0
        %v1282 = vsel %vm1170, %v795, 0.0
        %v1283 = vsel %vm1171, %v796, 0.0
        %v1284 = vsel %vm1165, %v1153, 0.0
        %v1285 = vsel %vm1166, %v799, 0.0
        %v1286 = vsel %vm1167, %v801, 0.0
        %v1287 = vsel %vm1168, %v803, 0.0
        %v1288 = vsel %vm1169, %v805, 0.0
        %v1289 = vsel %vm1170, %v807, 0.0
        %v1290 = vsel %vm1171, %v808, 0.0
        %v1291 = vsel %vm1165, %v1154, 0.0
        %v1292 = vsel %vm1166, %v811, 0.0
        %v1293 = vsel %vm1167, %v813, 0.0
        %v1294 = vsel %vm1168, %v815, 0.0
        %v1295 = vsel %vm1169, %v817, 0.0
        %v1296 = vsel %vm1170, %v819, 0.0
        %v1297 = vsel %vm1171, %v820, 0.0
        %v1298 = vsel %vm1165, %v1155, 0.0
        %v1299 = vsel %vm1166, %v823, 0.0
        %v1300 = vsel %vm1167, %v825, 0.0
        %v1301 = vsel %vm1168, %v827, 0.0
        %v1302 = vsel %vm1169, %v829, 0.0
        %v1303 = vsel %vm1170, %v831, 0.0
        %v1304 = vsel %vm1171, %v832, 0.0
        %v1305 = vsel %vm1165, %v1156, 0.0
        %v1306 = vsel %vm1166, %v835, 0.0
        %v1307 = vsel %vm1167, %v837, 0.0
        %v1308 = vsel %vm1168, %v839, 0.0
        %v1309 = vsel %vm1169, %v841, 0.0
        %v1310 = vsel %vm1170, %v843, 0.0
        %v1311 = vsel %vm1171, %v844, 0.0
        %v1312 = vsel %vm1165, %v1157, 0.0
        %v1313 = vsel %vm1166, %v847, 0.0
        %v1314 = vsel %vm1167, %v849, 0.0
        %v1315 = vsel %vm1168, %v851, 0.0
        %v1316 = vsel %vm1169, %v853, 0.0
        %v1317 = vsel %vm1170, %v855, 0.0
        %v1318 = vsel %vm1171, %v856, 0.0
        %v1319 = vsel %vm1165, %v1158, 0.0
        %v1320 = vsel %vm1166, %v859, 0.0
        %v1321 = vsel %vm1167, %v861, 0.0
        %v1322 = vsel %vm1168, %v863, 0.0
        %v1323 = vsel %vm1169, %v865, 0.0
        %v1324 = vsel %vm1170, %v867, 0.0
        %v1325 = vsel %vm1171, %v868, 0.0
        %v1326 = vsel %vm1165, %v1159, 0.0
        %v1327 = vsel %vm1166, %v871, 0.0
        %v1328 = vsel %vm1167, %v873, 0.0
        %v1329 = vsel %vm1168, %v875, 0.0
        %v1330 = vsel %vm1169, %v877, 0.0
        %v1331 = vsel %vm1170, %v879, 0.0
        %v1332 = vsel %vm1171, %v880, 0.0
        %v1333 = vsel %vm1165, %v1160, 0.0
        %v1334 = vsel %vm1166, %v883, 0.0
        %v1335 = vsel %vm1167, %v885, 0.0
        %v1336 = vsel %vm1168, %v887, 0.0
        %v1337 = vsel %vm1169, %v889, 0.0
        %v1338 = vsel %vm1170, %v891, 0.0
        %v1339 = vsel %vm1171, %v892, 0.0
        %v1340 = vsel %vm1165, %v1161, 0.0
        %v1341 = vsel %vm1166, %v895, 0.0
        %v1342 = vsel %vm1167, %v897, 0.0
        %v1343 = vsel %vm1168, %v899, 0.0
        %v1344 = vsel %vm1169, %v901, 0.0
        %v1345 = vsel %vm1170, %v903, 0.0
        %v1346 = vsel %vm1171, %v904, 0.0
        %v1347 = vsel %vm1165, %v1162, 0.0
        %v1348 = vsel %vm1166, %v907, 0.0
        %v1349 = vsel %vm1167, %v909, 0.0
        %v1350 = vsel %vm1168, %v911, 0.0
        %v1351 = vsel %vm1169, %v913, 0.0
        %v1352 = vsel %vm1170, %v915, 0.0
        %v1353 = vsel %vm1171, %v916, 0.0
        %v1354 = vsel %vm1165, %v1163, 0.0
        %v1355 = vsel %vm1166, %v919, 0.0
        %v1356 = vsel %vm1167, %v921, 0.0
        %v1357 = vsel %vm1168, %v923, 0.0
        %v1358 = vsel %vm1169, %v925, 0.0
        %v1359 = vsel %vm1170, %v927, 0.0
        %v1360 = vsel %vm1171, %v928, 0.0
        %v1361 = vsel %vm1165, %v1164, 0.0
        %v1362 = vsel %vm1166, %v931, 0.0
        %v1363 = vsel %vm1167, %v933, 0.0
        %v1364 = vsel %vm1168, %v935, 0.0
        %v1365 = vsel %vm1169, %v937, 0.0
        %v1366 = vsel %vm1170, %v939, 0.0
        %v1367 = vsel %vm1171, %v940, 0.0
        %v1368 = vrot.slane %v154, 7
        %v1369 = vrot.slane %v161, 7
        %v1370 = vrot.slane %v168, 7
        %v1371 = vrot.slane %v175, 7
        %v1372 = vrot.slane %v182, 7
        %v1373 = vrot.slane %v189, 7
        %v1374 = vrot.slane %v196, 7
        %v1375 = vrot.slane %v203, 7
        %v1376 = vrot.slane %v210, 7
        %v1377 = vrot.slane %v217, 7
        %v1378 = vrot.slane %v224, 7
        %v1379 = vrot.slane %v231, 7
        %v1380 = vrot.slane %v238, 7
        %v1381 = vrot.slane %v245, 7
        %v1382 = vrot.slane %v252, 7
        %v1383 = vrot.slane %v259, 7
        %v1384 = vrot.slane %v266, 7
        %v1385 = vrot.slane %v273, 7
        %v1386 = vrot.slane %v280, 7
        %v1387 = vrot.slane %v287, 7
        %v1388 = vrot.slane %v294, 7
        %v1389 = vrot.slane %v301, 7
        %v1390 = vrot.slane %v308, 7
        %v1391 = vrot.slane %v315, 7
        %v1392 = vrot.slane %v322, 7
        %v1393 = vrot.slane %v329, 7
        %v1394 = vrot.slane %v336, 7
        %v1395 = vrot.slane %v343, 7
        %vm1424 = vcmask 1040384
        %v1425 = vrot.slane %v148, 7
        %v1426 = vrot.slane %v149, 7
        %v1427 = vsel %vm1424, %v1425, %v1426
        %v1428 = vrot.slane %v150, 7
        %v1429 = vsel %vm1424, %v1426, %v1428
        %v1430 = vrot.slane %v151, 7
        %v1431 = vsel %vm1424, %v1428, %v1430
        %v1432 = vrot.slane %v152, 7
        %v1433 = vsel %vm1424, %v1430, %v1432
        %v1434 = vrot.slane %v153, 7
        %v1435 = vsel %vm1424, %v1432, %v1434
        %v1436 = vsel %vm1424, %v1434, %v1368
        %v1437 = vrot.slane %v155, 7
        %v1438 = vrot.slane %v156, 7
        %v1439 = vsel %vm1424, %v1437, %v1438
        %v1440 = vrot.slane %v157, 7
        %v1441 = vsel %vm1424, %v1438, %v1440
        %v1442 = vrot.slane %v158, 7
        %v1443 = vsel %vm1424, %v1440, %v1442
        %v1444 = vrot.slane %v159, 7
        %v1445 = vsel %vm1424, %v1442, %v1444
        %v1446 = vrot.slane %v160, 7
        %v1447 = vsel %vm1424, %v1444, %v1446
        %v1448 = vsel %vm1424, %v1446, %v1369
        %v1449 = vrot.slane %v162, 7
        %v1450 = vrot.slane %v163, 7
        %v1451 = vsel %vm1424, %v1449, %v1450
        %v1452 = vrot.slane %v164, 7
        %v1453 = vsel %vm1424, %v1450, %v1452
        %v1454 = vrot.slane %v165, 7
        %v1455 = vsel %vm1424, %v1452, %v1454
        %v1456 = vrot.slane %v166, 7
        %v1457 = vsel %vm1424, %v1454, %v1456
        %v1458 = vrot.slane %v167, 7
        %v1459 = vsel %vm1424, %v1456, %v1458
        %v1460 = vsel %vm1424, %v1458, %v1370
        %v1461 = vrot.slane %v169, 7
        %v1462 = vrot.slane %v170, 7
        %v1463 = vsel %vm1424, %v1461, %v1462
        %v1464 = vrot.slane %v171, 7
        %v1465 = vsel %vm1424, %v1462, %v1464
        %v1466 = vrot.slane %v172, 7
        %v1467 = vsel %vm1424, %v1464, %v1466
        %v1468 = vrot.slane %v173, 7
        %v1469 = vsel %vm1424, %v1466, %v1468
        %v1470 = vrot.slane %v174, 7
        %v1471 = vsel %vm1424, %v1468, %v1470
        %v1472 = vsel %vm1424, %v1470, %v1371
        %v1473 = vrot.slane %v176, 7
        %v1474 = vrot.slane %v177, 7
        %v1475 = vsel %vm1424, %v1473, %v1474
        %v1476 = vrot.slane %v178, 7
        %v1477 = vsel %vm1424, %v1474, %v1476
        %v1478 = vrot.slane %v179, 7
        %v1479 = vsel %vm1424, %v1476, %v1478
        %v1480 = vrot.slane %v180, 7
        %v1481 = vsel %vm1424, %v1478, %v1480
        %v1482 = vrot.slane %v181, 7
        %v1483 = vsel %vm1424, %v1480, %v1482
        %v1484 = vsel %vm1424, %v1482, %v1372
        %v1485 = vrot.slane %v183, 7
        %v1486 = vrot.slane %v184, 7
        %v1487 = vsel %vm1424, %v1485, %v1486
        %v1488 = vrot.slane %v185, 7
        %v1489 = vsel %vm1424, %v1486, %v1488
        %v1490 = vrot.slane %v186, 7
        %v1491 = vsel %vm1424, %v1488, %v1490
        %v1492 = vrot.slane %v187, 7
        %v1493 = vsel %vm1424, %v1490, %v1492
        %v1494 = vrot.slane %v188, 7
        %v1495 = vsel %vm1424, %v1492, %v1494
        %v1496 = vsel %vm1424, %v1494, %v1373
        %v1497 = vrot.slane %v190, 7
        %v1498 = vrot.slane %v191, 7
        %v1499 = vsel %vm1424, %v1497, %v1498
        %v1500 = vrot.slane %v192, 7
        %v1501 = vsel %vm1424, %v1498, %v1500
        %v1502 = vrot.slane %v193, 7
        %v1503 = vsel %vm1424, %v1500, %v1502
        %v1504 = vrot.slane %v194, 7
        %v1505 = vsel %vm1424, %v1502, %v1504
        %v1506 = vrot.slane %v195, 7
        %v1507 = vsel %vm1424, %v1504, %v1506
        %v1508 = vsel %vm1424, %v1506, %v1374
        %v1509 = vrot.slane %v197, 7
        %v1510 = vrot.slane %v198, 7
        %v1511 = vsel %vm1424, %v1509, %v1510
        %v1512 = vrot.slane %v199, 7
        %v1513 = vsel %vm1424, %v1510, %v1512
        %v1514 = vrot.slane %v200, 7
        %v1515 = vsel %vm1424, %v1512, %v1514
        %v1516 = vrot.slane %v201, 7
        %v1517 = vsel %vm1424, %v1514, %v1516
        %v1518 = vrot.slane %v202, 7
        %v1519 = vsel %vm1424, %v1516, %v1518
        %v1520 = vsel %vm1424, %v1518, %v1375
        %v1521 = vrot.slane %v204, 7
        %v1522 = vrot.slane %v205, 7
        %v1523 = vsel %vm1424, %v1521, %v1522
        %v1524 = vrot.slane %v206, 7
        %v1525 = vsel %vm1424, %v1522, %v1524
        %v1526 = vrot.slane %v207, 7
        %v1527 = vsel %vm1424, %v1524, %v1526
        %v1528 = vrot.slane %v208, 7
        %v1529 = vsel %vm1424, %v1526, %v1528
        %v1530 = vrot.slane %v209, 7
        %v1531 = vsel %vm1424, %v1528, %v1530
        %v1532 = vsel %vm1424, %v1530, %v1376
        %v1533 = vrot.slane %v211, 7
        %v1534 = vrot.slane %v212, 7
        %v1535 = vsel %vm1424, %v1533, %v1534
        %v1536 = vrot.slane %v213, 7
        %v1537 = vsel %vm1424, %v1534, %v1536
        %v1538 = vrot.slane %v214, 7
        %v1539 = vsel %vm1424, %v1536, %v1538
        %v1540 = vrot.slane %v215, 7
        %v1541 = vsel %vm1424, %v1538, %v1540
        %v1542 = vrot.slane %v216, 7
        %v1543 = vsel %vm1424, %v1540, %v1542
        %v1544 = vsel %vm1424, %v1542, %v1377
        %v1545 = vrot.slane %v218, 7
        %v1546 = vrot.slane %v219, 7
        %v1547 = vsel %vm1424, %v1545, %v1546
        %v1548 = vrot.slane %v220, 7
        %v1549 = vsel %vm1424, %v1546, %v1548
        %v1550 = vrot.slane %v221, 7
        %v1551 = vsel %vm1424, %v1548, %v1550
        %v1552 = vrot.slane %v222, 7
        %v1553 = vsel %vm1424, %v1550, %v1552
        %v1554 = vrot.slane %v223, 7
        %v1555 = vsel %vm1424, %v1552, %v1554
        %v1556 = vsel %vm1424, %v1554, %v1378
        %v1557 = vrot.slane %v225, 7
        %v1558 = vrot.slane %v226, 7
        %v1559 = vsel %vm1424, %v1557, %v1558
        %v1560 = vrot.slane %v227, 7
        %v1561 = vsel %vm1424, %v1558, %v1560
        %v1562 = vrot.slane %v228, 7
        %v1563 = vsel %vm1424, %v1560, %v1562
        %v1564 = vrot.slane %v229, 7
        %v1565 = vsel %vm1424, %v1562, %v1564
        %v1566 = vrot.slane %v230, 7
        %v1567 = vsel %vm1424, %v1564, %v1566
        %v1568 = vsel %vm1424, %v1566, %v1379
        %v1569 = vrot.slane %v232, 7
        %v1570 = vrot.slane %v233, 7
        %v1571 = vsel %vm1424, %v1569, %v1570
        %v1572 = vrot.slane %v234, 7
        %v1573 = vsel %vm1424, %v1570, %v1572
        %v1574 = vrot.slane %v235, 7
        %v1575 = vsel %vm1424, %v1572, %v1574
        %v1576 = vrot.slane %v236, 7
        %v1577 = vsel %vm1424, %v1574, %v1576
        %v1578 = vrot.slane %v237, 7
        %v1579 = vsel %vm1424, %v1576, %v1578
        %v1580 = vsel %vm1424, %v1578, %v1380
        %v1581 = vrot.slane %v239, 7
        %v1582 = vrot.slane %v240, 7
        %v1583 = vsel %vm1424, %v1581, %v1582
        %v1584 = vrot.slane %v241, 7
        %v1585 = vsel %vm1424, %v1582, %v1584
        %v1586 = vrot.slane %v242, 7
        %v1587 = vsel %vm1424, %v1584, %v1586
        %v1588 = vrot.slane %v243, 7
        %v1589 = vsel %vm1424, %v1586, %v1588
        %v1590 = vrot.slane %v244, 7
        %v1591 = vsel %vm1424, %v1588, %v1590
        %v1592 = vsel %vm1424, %v1590, %v1381
        %v1593 = vrot.slane %v246, 7
        %v1594 = vrot.slane %v247, 7
        %v1595 = vsel %vm1424, %v1593, %v1594
        %v1596 = vrot.slane %v248, 7
        %v1597 = vsel %vm1424, %v1594, %v1596
        %v1598 = vrot.slane %v249, 7
        %v1599 = vsel %vm1424, %v1596, %v1598
        %v1600 = vrot.slane %v250, 7
        %v1601 = vsel %vm1424, %v1598, %v1600
        %v1602 = vrot.slane %v251, 7
        %v1603 = vsel %vm1424, %v1600, %v1602
        %v1604 = vsel %vm1424, %v1602, %v1382
        %v1605 = vrot.slane %v253, 7
        %v1606 = vrot.slane %v254, 7
        %v1607 = vsel %vm1424, %v1605, %v1606
        %v1608 = vrot.slane %v255, 7
        %v1609 = vsel %vm1424, %v1606, %v1608
        %v1610 = vrot.slane %v256, 7
        %v1611 = vsel %vm1424, %v1608, %v1610
        %v1612 = vrot.slane %v257, 7
        %v1613 = vsel %vm1424, %v1610, %v1612
        %v1614 = vrot.slane %v258, 7
        %v1615 = vsel %vm1424, %v1612, %v1614
        %v1616 = vsel %vm1424, %v1614, %v1383
        %v1617 = vrot.slane %v260, 7
        %v1618 = vrot.slane %v261, 7
        %v1619 = vsel %vm1424, %v1617, %v1618
        %v1620 = vrot.slane %v262, 7
        %v1621 = vsel %vm1424, %v1618, %v1620
        %v1622 = vrot.slane %v263, 7
        %v1623 = vsel %vm1424, %v1620, %v1622
        %v1624 = vrot.slane %v264, 7
        %v1625 = vsel %vm1424, %v1622, %v1624
        %v1626 = vrot.slane %v265, 7
        %v1627 = vsel %vm1424, %v1624, %v1626
        %v1628 = vsel %vm1424, %v1626, %v1384
        %v1629 = vrot.slane %v267, 7
        %v1630 = vrot.slane %v268, 7
        %v1631 = vsel %vm1424, %v1629, %v1630
        %v1632 = vrot.slane %v269, 7
        %v1633 = vsel %vm1424, %v1630, %v1632
        %v1634 = vrot.slane %v270, 7
        %v1635 = vsel %vm1424, %v1632, %v1634
        %v1636 = vrot.slane %v271, 7
        %v1637 = vsel %vm1424, %v1634, %v1636
        %v1638 = vrot.slane %v272, 7
        %v1639 = vsel %vm1424, %v1636, %v1638
        %v1640 = vsel %vm1424, %v1638, %v1385
        %v1641 = vrot.slane %v274, 7
        %v1642 = vrot.slane %v275, 7
        %v1643 = vsel %vm1424, %v1641, %v1642
        %v1644 = vrot.slane %v276, 7
        %v1645 = vsel %vm1424, %v1642, %v1644
        %v1646 = vrot.slane %v277, 7
        %v1647 = vsel %vm1424, %v1644, %v1646
        %v1648 = vrot.slane %v278, 7
        %v1649 = vsel %vm1424, %v1646, %v1648
        %v1650 = vrot.slane %v279, 7
        %v1651 = vsel %vm1424, %v1648, %v1650
        %v1652 = vsel %vm1424, %v1650, %v1386
        %v1653 = vrot.slane %v281, 7
        %v1654 = vrot.slane %v282, 7
        %v1655 = vsel %vm1424, %v1653, %v1654
        %v1656 = vrot.slane %v283, 7
        %v1657 = vsel %vm1424, %v1654, %v1656
        %v1658 = vrot.slane %v284, 7
        %v1659 = vsel %vm1424, %v1656, %v1658
        %v1660 = vrot.slane %v285, 7
        %v1661 = vsel %vm1424, %v1658, %v1660
        %v1662 = vrot.slane %v286, 7
        %v1663 = vsel %vm1424, %v1660, %v1662
        %v1664 = vsel %vm1424, %v1662, %v1387
        %v1665 = vrot.slane %v288, 7
        %v1666 = vrot.slane %v289, 7
        %v1667 = vsel %vm1424, %v1665, %v1666
        %v1668 = vrot.slane %v290, 7
        %v1669 = vsel %vm1424, %v1666, %v1668
        %v1670 = vrot.slane %v291, 7
        %v1671 = vsel %vm1424, %v1668, %v1670
        %v1672 = vrot.slane %v292, 7
        %v1673 = vsel %vm1424, %v1670, %v1672
        %v1674 = vrot.slane %v293, 7
        %v1675 = vsel %vm1424, %v1672, %v1674
        %v1676 = vsel %vm1424, %v1674, %v1388
        %v1677 = vrot.slane %v295, 7
        %v1678 = vrot.slane %v296, 7
        %v1679 = vsel %vm1424, %v1677, %v1678
        %v1680 = vrot.slane %v297, 7
        %v1681 = vsel %vm1424, %v1678, %v1680
        %v1682 = vrot.slane %v298, 7
        %v1683 = vsel %vm1424, %v1680, %v1682
        %v1684 = vrot.slane %v299, 7
        %v1685 = vsel %vm1424, %v1682, %v1684
        %v1686 = vrot.slane %v300, 7
        %v1687 = vsel %vm1424, %v1684, %v1686
        %v1688 = vsel %vm1424, %v1686, %v1389
        %v1689 = vrot.slane %v302, 7
        %v1690 = vrot.slane %v303, 7
        %v1691 = vsel %vm1424, %v1689, %v1690
        %v1692 = vrot.slane %v304, 7
        %v1693 = vsel %vm1424, %v1690, %v1692
        %v1694 = vrot.slane %v305, 7
        %v1695 = vsel %vm1424, %v1692, %v1694
        %v1696 = vrot.slane %v306, 7
        %v1697 = vsel %vm1424, %v1694, %v1696
        %v1698 = vrot.slane %v307, 7
        %v1699 = vsel %vm1424, %v1696, %v1698
        %v1700 = vsel %vm1424, %v1698, %v1390
        %v1701 = vrot.slane %v309, 7
        %v1702 = vrot.slane %v310, 7
        %v1703 = vsel %vm1424, %v1701, %v1702
        %v1704 = vrot.slane %v311, 7
        %v1705 = vsel %vm1424, %v1702, %v1704
        %v1706 = vrot.slane %v312, 7
        %v1707 = vsel %vm1424, %v1704, %v1706
        %v1708 = vrot.slane %v313, 7
        %v1709 = vsel %vm1424, %v1706, %v1708
        %v1710 = vrot.slane %v314, 7
        %v1711 = vsel %vm1424, %v1708, %v1710
        %v1712 = vsel %vm1424, %v1710, %v1391
        %v1713 = vrot.slane %v316, 7
        %v1714 = vrot.slane %v317, 7
        %v1715 = vsel %vm1424, %v1713, %v1714
        %v1716 = vrot.slane %v318, 7
        %v1717 = vsel %vm1424, %v1714, %v1716
        %v1718 = vrot.slane %v319, 7
        %v1719 = vsel %vm1424, %v1716, %v1718
        %v1720 = vrot.slane %v320, 7
        %v1721 = vsel %vm1424, %v1718, %v1720
        %v1722 = vrot.slane %v321, 7
        %v1723 = vsel %vm1424, %v1720, %v1722
        %v1724 = vsel %vm1424, %v1722, %v1392
        %v1725 = vrot.slane %v323, 7
        %v1726 = vrot.slane %v324, 7
        %v1727 = vsel %vm1424, %v1725, %v1726
        %v1728 = vrot.slane %v325, 7
        %v1729 = vsel %vm1424, %v1726, %v1728
        %v1730 = vrot.slane %v326, 7
        %v1731 = vsel %vm1424, %v1728, %v1730
        %v1732 = vrot.slane %v327, 7
        %v1733 = vsel %vm1424, %v1730, %v1732
        %v1734 = vrot.slane %v328, 7
        %v1735 = vsel %vm1424, %v1732, %v1734
        %v1736 = vsel %vm1424, %v1734, %v1393
        %v1737 = vrot.slane %v330, 7
        %v1738 = vrot.slane %v331, 7
        %v1739 = vsel %vm1424, %v1737, %v1738
        %v1740 = vrot.slane %v332, 7
        %v1741 = vsel %vm1424, %v1738, %v1740
        %v1742 = vrot.slane %v333, 7
        %v1743 = vsel %vm1424, %v1740, %v1742
        %v1744 = vrot.slane %v334, 7
        %v1745 = vsel %vm1424, %v1742, %v1744
        %v1746 = vrot.slane %v335, 7
        %v1747 = vsel %vm1424, %v1744, %v1746
        %v1748 = vsel %vm1424, %v1746, %v1394
        %v1749 = vrot.slane %v337, 7
        %v1750 = vrot.slane %v338, 7
        %v1751 = vsel %vm1424, %v1749, %v1750
        %v1752 = vrot.slane %v339, 7
        %v1753 = vsel %vm1424, %v1750, %v1752
        %v1754 = vrot.slane %v340, 7
        %v1755 = vsel %vm1424, %v1752, %v1754
        %v1756 = vrot.slane %v341, 7
        %v1757 = vsel %vm1424, %v1754, %v1756
        %v1758 = vrot.slane %v342, 7
        %v1759 = vsel %vm1424, %v1756, %v1758
        %v1760 = vsel %vm1424, %v1758, %v1395
        %v1789 = vsel %vm1424, %v1368, %v1425
        %v1790 = vsel %vm1424, %v1369, %v1437
        %v1791 = vsel %vm1424, %v1370, %v1449
        %v1792 = vsel %vm1424, %v1371, %v1461
        %v1793 = vsel %vm1424, %v1372, %v1473
        %v1794 = vsel %vm1424, %v1373, %v1485
        %v1795 = vsel %vm1424, %v1374, %v1497
        %v1796 = vsel %vm1424, %v1375, %v1509
        %v1797 = vsel %vm1424, %v1376, %v1521
        %v1798 = vsel %vm1424, %v1377, %v1533
        %v1799 = vsel %vm1424, %v1378, %v1545
        %v1800 = vsel %vm1424, %v1379, %v1557
        %v1801 = vsel %vm1424, %v1380, %v1569
        %v1802 = vsel %vm1424, %v1381, %v1581
        %v1803 = vsel %vm1424, %v1382, %v1593
        %v1804 = vsel %vm1424, %v1383, %v1605
        %v1805 = vsel %vm1424, %v1384, %v1617
        %v1806 = vsel %vm1424, %v1385, %v1629
        %v1807 = vsel %vm1424, %v1386, %v1641
        %v1808 = vsel %vm1424, %v1387, %v1653
        %v1809 = vsel %vm1424, %v1388, %v1665
        %v1810 = vsel %vm1424, %v1389, %v1677
        %v1811 = vsel %vm1424, %v1390, %v1689
        %v1812 = vsel %vm1424, %v1391, %v1701
        %v1813 = vsel %vm1424, %v1392, %v1713
        %v1814 = vsel %vm1424, %v1393, %v1725
        %v1815 = vsel %vm1424, %v1394, %v1737
        %v1816 = vsel %vm1424, %v1395, %v1749
        %vm1817 = vcmp.le.s32.totalorder %v345, 54
        %vm1818 = vcmp.le.s32.totalorder %v346, 54
        %vm1819 = vcmp.le.s32.totalorder %v347, 54
        %vm1820 = vcmp.le.s32.totalorder %v348, 54
        %vm1821 = vcmp.le.s32.totalorder %v349, 54
        %vm1822 = vcmp.le.s32.totalorder %v350, 54
        %vm1823 = vcmp.le.s32.totalorder %v351, 54
        %v1824 = vsel %vm1817, %v148, 0.0
        %v1825 = vsel %vm1818, %v149, 0.0
        %v1826 = vsel %vm1819, %v150, 0.0
        %v1827 = vsel %vm1820, %v151, 0.0
        %v1828 = vsel %vm1821, %v152, 0.0
        %v1829 = vsel %vm1822, %v153, 0.0
        %v1830 = vsel %vm1823, %v154, 0.0
        %v1831 = vsel %vm1817, %v155, 0.0
        %v1832 = vsel %vm1818, %v156, 0.0
        %v1833 = vsel %vm1819, %v157, 0.0
        %v1834 = vsel %vm1820, %v158, 0.0
        %v1835 = vsel %vm1821, %v159, 0.0
        %v1836 = vsel %vm1822, %v160, 0.0
        %v1837 = vsel %vm1823, %v161, 0.0
        %v1838 = vsel %vm1817, %v162, 0.0
        %v1839 = vsel %vm1818, %v163, 0.0
        %v1840 = vsel %vm1819, %v164, 0.0
        %v1841 = vsel %vm1820, %v165, 0.0
        %v1842 = vsel %vm1821, %v166, 0.0
        %v1843 = vsel %vm1822, %v167, 0.0
        %v1844 = vsel %vm1823, %v168, 0.0
        %v1845 = vsel %vm1817, %v169, 0.0
        %v1846 = vsel %vm1818, %v170, 0.0
        %v1847 = vsel %vm1819, %v171, 0.0
        %v1848 = vsel %vm1820, %v172, 0.0
        %v1849 = vsel %vm1821, %v173, 0.0
        %v1850 = vsel %vm1822, %v174, 0.0
        %v1851 = vsel %vm1823, %v175, 0.0
        %v1852 = vsel %vm1817, %v176, 0.0
        %v1853 = vsel %vm1818, %v177, 0.0
        %v1854 = vsel %vm1819, %v178, 0.0
        %v1855 = vsel %vm1820, %v179, 0.0
        %v1856 = vsel %vm1821, %v180, 0.0
        %v1857 = vsel %vm1822, %v181, 0.0
        %v1858 = vsel %vm1823, %v182, 0.0
        %v1859 = vsel %vm1817, %v183, 0.0
        %v1860 = vsel %vm1818, %v184, 0.0
        %v1861 = vsel %vm1819, %v185, 0.0
        %v1862 = vsel %vm1820, %v186, 0.0
        %v1863 = vsel %vm1821, %v187, 0.0
        %v1864 = vsel %vm1822, %v188, 0.0
        %v1865 = vsel %vm1823, %v189, 0.0
        %v1866 = vsel %vm1817, %v190, 0.0
        %v1867 = vsel %vm1818, %v191, 0.0
        %v1868 = vsel %vm1819, %v192, 0.0
        %v1869 = vsel %vm1820, %v193, 0.0
        %v1870 = vsel %vm1821, %v194, 0.0
        %v1871 = vsel %vm1822, %v195, 0.0
        %v1872 = vsel %vm1823, %v196, 0.0
        %v1873 = vsel %vm1817, %v197, 0.0
        %v1874 = vsel %vm1818, %v198, 0.0
        %v1875 = vsel %vm1819, %v199, 0.0
        %v1876 = vsel %vm1820, %v200, 0.0
        %v1877 = vsel %vm1821, %v201, 0.0
        %v1878 = vsel %vm1822, %v202, 0.0
        %v1879 = vsel %vm1823, %v203, 0.0
        %v1880 = vsel %vm1817, %v204, 0.0
        %v1881 = vsel %vm1818, %v205, 0.0
        %v1882 = vsel %vm1819, %v206, 0.0
        %v1883 = vsel %vm1820, %v207, 0.0
        %v1884 = vsel %vm1821, %v208, 0.0
        %v1885 = vsel %vm1822, %v209, 0.0
        %v1886 = vsel %vm1823, %v210, 0.0
        %v1887 = vsel %vm1817, %v211, 0.0
        %v1888 = vsel %vm1818, %v212, 0.0
        %v1889 = vsel %vm1819, %v213, 0.0
        %v1890 = vsel %vm1820, %v214, 0.0
        %v1891 = vsel %vm1821, %v215, 0.0
        %v1892 = vsel %vm1822, %v216, 0.0
        %v1893 = vsel %vm1823, %v217, 0.0
        %v1894 = vsel %vm1817, %v218, 0.0
        %v1895 = vsel %vm1818, %v219, 0.0
        %v1896 = vsel %vm1819, %v220, 0.0
        %v1897 = vsel %vm1820, %v221, 0.0
        %v1898 = vsel %vm1821, %v222, 0.0
        %v1899 = vsel %vm1822, %v223, 0.0
        %v1900 = vsel %vm1823, %v224, 0.0
        %v1901 = vsel %vm1817, %v225, 0.0
        %v1902 = vsel %vm1818, %v226, 0.0
        %v1903 = vsel %vm1819, %v227, 0.0
        %v1904 = vsel %vm1820, %v228, 0.0
        %v1905 = vsel %vm1821, %v229, 0.0
        %v1906 = vsel %vm1822, %v230, 0.0
        %v1907 = vsel %vm1823, %v231, 0.0
        %v1908 = vsel %vm1817, %v232, 0.0
        %v1909 = vsel %vm1818, %v233, 0.0
        %v1910 = vsel %vm1819, %v234, 0.0
        %v1911 = vsel %vm1820, %v235, 0.0
        %v1912 = vsel %vm1821, %v236, 0.0
        %v1913 = vsel %vm1822, %v237, 0.0
        %v1914 = vsel %vm1823, %v238, 0.0
        %v1915 = vsel %vm1817, %v239, 0.0
        %v1916 = vsel %vm1818, %v240, 0.0
        %v1917 = vsel %vm1819, %v241, 0.0
        %v1918 = vsel %vm1820, %v242, 0.0
        %v1919 = vsel %vm1821, %v243, 0.0
        %v1920 = vsel %vm1822, %v244, 0.0
        %v1921 = vsel %vm1823, %v245, 0.0
        %v1922 = vsel %vm1817, %v246, 0.0
        %v1923 = vsel %vm1818, %v247, 0.0
        %v1924 = vsel %vm1819, %v248, 0.0
        %v1925 = vsel %vm1820, %v249, 0.0
        %v1926 = vsel %vm1821, %v250, 0.0
        %v1927 = vsel %vm1822, %v251, 0.0
        %v1928 = vsel %vm1823, %v252, 0.0
        %v1929 = vsel %vm1817, %v253, 0.0
        %v1930 = vsel %vm1818, %v254, 0.0
        %v1931 = vsel %vm1819, %v255, 0.0
        %v1932 = vsel %vm1820, %v256, 0.0
        %v1933 = vsel %vm1821, %v257, 0.0
        %v1934 = vsel %vm1822, %v258, 0.0
        %v1935 = vsel %vm1823, %v259, 0.0
        %v1936 = vsel %vm1817, %v260, 0.0
        %v1937 = vsel %vm1818, %v261, 0.0
        %v1938 = vsel %vm1819, %v262, 0.0
        %v1939 = vsel %vm1820, %v263, 0.0
        %v1940 = vsel %vm1821, %v264, 0.0
        %v1941 = vsel %vm1822, %v265, 0.0
        %v1942 = vsel %vm1823, %v266, 0.0
        %v1943 = vsel %vm1817, %v267, 0.0
        %v1944 = vsel %vm1818, %v268, 0.0
        %v1945 = vsel %vm1819, %v269, 0.0
        %v1946 = vsel %vm1820, %v270, 0.0
        %v1947 = vsel %vm1821, %v271, 0.0
        %v1948 = vsel %vm1822, %v272, 0.0
        %v1949 = vsel %vm1823, %v273, 0.0
        %v1950 = vsel %vm1817, %v274, 0.0
        %v1951 = vsel %vm1818, %v275, 0.0
        %v1952 = vsel %vm1819, %v276, 0.0
        %v1953 = vsel %vm1820, %v277, 0.0
        %v1954 = vsel %vm1821, %v278, 0.0
        %v1955 = vsel %vm1822, %v279, 0.0
        %v1956 = vsel %vm1823, %v280, 0.0
        %v1957 = vsel %vm1817, %v281, 0.0
        %v1958 = vsel %vm1818, %v282, 0.0
        %v1959 = vsel %vm1819, %v283, 0.0
        %v1960 = vsel %vm1820, %v284, 0.0
        %v1961 = vsel %vm1821, %v285, 0.0
        %v1962 = vsel %vm1822, %v286, 0.0
        %v1963 = vsel %vm1823, %v287, 0.0
        %v1964 = vsel %vm1817, %v288, 0.0
        %v1965 = vsel %vm1818, %v289, 0.0
        %v1966 = vsel %vm1819, %v290, 0.0
        %v1967 = vsel %vm1820, %v291, 0.0
        %v1968 = vsel %vm1821, %v292, 0.0
        %v1969 = vsel %vm1822, %v293, 0.0
        %v1970 = vsel %vm1823, %v294, 0.0
        %v1971 = vsel %vm1817, %v295, 0.0
        %v1972 = vsel %vm1818, %v296, 0.0
        %v1973 = vsel %vm1819, %v297, 0.0
        %v1974 = vsel %vm1820, %v298, 0.0
        %v1975 = vsel %vm1821, %v299, 0.0
        %v1976 = vsel %vm1822, %v300, 0.0
        %v1977 = vsel %vm1823, %v301, 0.0
        %v1978 = vsel %vm1817, %v302, 0.0
        %v1979 = vsel %vm1818, %v303, 0.0
        %v1980 = vsel %vm1819, %v304, 0.0
        %v1981 = vsel %vm1820, %v305, 0.0
        %v1982 = vsel %vm1821, %v306, 0.0
        %v1983 = vsel %vm1822, %v307, 0.0
        %v1984 = vsel %vm1823, %v308, 0.0
        %v1985 = vsel %vm1817, %v309, 0.0
        %v1986 = vsel %vm1818, %v310, 0.0
        %v1987 = vsel %vm1819, %v311, 0.0
        %v1988 = vsel %vm1820, %v312, 0.0
        %v1989 = vsel %vm1821, %v313, 0.0
        %v1990 = vsel %vm1822, %v314, 0.0
        %v1991 = vsel %vm1823, %v315, 0.0
        %v1992 = vsel %vm1817, %v316, 0.0
        %v1993 = vsel %vm1818, %v317, 0.0
        %v1994 = vsel %vm1819, %v318, 0.0
        %v1995 = vsel %vm1820, %v319, 0.0
        %v1996 = vsel %vm1821, %v320, 0.0
        %v1997 = vsel %vm1822, %v321, 0.0
        %v1998 = vsel %vm1823, %v322, 0.0
        %v1999 = vsel %vm1817, %v323, 0.0
        %v2000 = vsel %vm1818, %v324, 0.0
        %v2001 = vsel %vm1819, %v325, 0.0
        %v2002 = vsel %vm1820, %v326, 0.0
        %v2003 = vsel %vm1821, %v327, 0.0
        %v2004 = vsel %vm1822, %v328, 0.0
        %v2005 = vsel %vm1823, %v329, 0.0
        %v2006 = vsel %vm1817, %v330, 0.0
        %v2007 = vsel %vm1818, %v331, 0.0
        %v2008 = vsel %vm1819, %v332, 0.0
        %v2009 = vsel %vm1820, %v333, 0.0
        %v2010 = vsel %vm1821, %v334, 0.0
        %v2011 = vsel %vm1822, %v335, 0.0
        %v2012 = vsel %vm1823, %v336, 0.0
        %v2013 = vsel %vm1817, %v337, 0.0
        %v2014 = vsel %vm1818, %v338, 0.0
        %v2015 = vsel %vm1819, %v339, 0.0
        %v2016 = vsel %vm1820, %v340, 0.0
        %v2017 = vsel %vm1821, %v341, 0.0
        %v2018 = vsel %vm1822, %v342, 0.0
        %v2019 = vsel %vm1823, %v343, 0.0
        %2048 = vrot.lane.b32.xlu0 %v1789, 64
        %v2049 = vpop.permute.xlu0 %2048
        %2050 = vrot.lane.b32.xlu0 %v1427, 64
        %v2051 = vpop.permute.xlu0 %2050
        %2052 = vrot.lane.b32.xlu0 %v1429, 64
        %v2053 = vpop.permute.xlu0 %2052
        %2054 = vrot.lane.b32.xlu0 %v1431, 64
        %v2055 = vpop.permute.xlu0 %2054
        %2056 = vrot.lane.b32.xlu0 %v1433, 64
        %v2057 = vpop.permute.xlu0 %2056
        %2058 = vrot.lane.b32.xlu0 %v1435, 64
        %v2059 = vpop.permute.xlu0 %2058
        %2060 = vrot.lane.b32.xlu0 %v1436, 64
        %v2061 = vpop.permute.xlu0 %2060
        %2062 = vrot.lane.b32.xlu0 %v1790, 64
        %v2063 = vpop.permute.xlu0 %2062
        %2064 = vrot.lane.b32.xlu0 %v1439, 64
        %v2065 = vpop.permute.xlu0 %2064
        %2066 = vrot.lane.b32.xlu0 %v1441, 64
        %v2067 = vpop.permute.xlu0 %2066
        %2068 = vrot.lane.b32.xlu0 %v1443, 64
        %v2069 = vpop.permute.xlu0 %2068
        %2070 = vrot.lane.b32.xlu0 %v1445, 64
        %v2071 = vpop.permute.xlu0 %2070
        %2072 = vrot.lane.b32.xlu0 %v1447, 64
        %v2073 = vpop.permute.xlu0 %2072
        %2074 = vrot.lane.b32.xlu0 %v1448, 64
        %v2075 = vpop.permute.xlu0 %2074
        %2076 = vrot.lane.b32.xlu0 %v1791, 64
        %v2077 = vpop.permute.xlu0 %2076
        %2078 = vrot.lane.b32.xlu0 %v1451, 64
        %v2079 = vpop.permute.xlu0 %2078
        %2080 = vrot.lane.b32.xlu0 %v1453, 64
        %v2081 = vpop.permute.xlu0 %2080
        %2082 = vrot.lane.b32.xlu0 %v1455, 64
        %v2083 = vpop.permute.xlu0 %2082
        %2084 = vrot.lane.b32.xlu0 %v1457, 64
        %v2085 = vpop.permute.xlu0 %2084
        %2086 = vrot.lane.b32.xlu0 %v1459, 64
        %v2087 = vpop.permute.xlu0 %2086
        %2088 = vrot.lane.b32.xlu0 %v1460, 64
        %v2089 = vpop.permute.xlu0 %2088
        %2090 = vrot.lane.b32.xlu0 %v1792, 64
        %v2091 = vpop.permute.xlu0 %2090
        %2092 = vrot.lane.b32.xlu0 %v1463, 64
        %v2093 = vpop.permute.xlu0 %2092
        %2094 = vrot.lane.b32.xlu0 %v1465, 64
        %v2095 = vpop.permute.xlu0 %2094
        %2096 = vrot.lane.b32.xlu0 %v1467, 64
        %v2097 = vpop.permute.xlu0 %2096
        %2098 = vrot.lane.b32.xlu0 %v1469, 64
        %v2099 = vpop.permute.xlu0 %2098
        %2100 = vrot.lane.b32.xlu0 %v1471, 64
        %v2101 = vpop.permute.xlu0 %2100
        %2102 = vrot.lane.b32.xlu0 %v1472, 64
        %v2103 = vpop.permute.xlu0 %2102
        %2104 = vrot.lane.b32.xlu0 %v1793, 64
        %v2105 = vpop.permute.xlu0 %2104
        %2106 = vrot.lane.b32.xlu0 %v1475, 64
        %v2107 = vpop.permute.xlu0 %2106
        %2108 = vrot.lane.b32.xlu0 %v1477, 64
        %v2109 = vpop.permute.xlu0 %2108
        %2110 = vrot.lane.b32.xlu0 %v1479, 64
        %v2111 = vpop.permute.xlu0 %2110
        %2112 = vrot.lane.b32.xlu0 %v1481, 64
        %v2113 = vpop.permute.xlu0 %2112
        %2114 = vrot.lane.b32.xlu0 %v1483, 64
        %v2115 = vpop.permute.xlu0 %2114
        %2116 = vrot.lane.b32.xlu0 %v1484, 64
        %v2117 = vpop.permute.xlu0 %2116
        %2118 = vrot.lane.b32.xlu0 %v1794, 64
        %v2119 = vpop.permute.xlu0 %2118
        %2120 = vrot.lane.b32.xlu0 %v1487, 64
        %v2121 = vpop.permute.xlu0 %2120
        %2122 = vrot.lane.b32.xlu0 %v1489, 64
        %v2123 = vpop.permute.xlu0 %2122
        %2124 = vrot.lane.b32.xlu0 %v1491, 64
        %v2125 = vpop.permute.xlu0 %2124
        %2126 = vrot.lane.b32.xlu0 %v1493, 64
        %v2127 = vpop.permute.xlu0 %2126
        %2128 = vrot.lane.b32.xlu0 %v1495, 64
        %v2129 = vpop.permute.xlu0 %2128
        %2130 = vrot.lane.b32.xlu0 %v1496, 64
        %v2131 = vpop.permute.xlu0 %2130
        %2132 = vrot.lane.b32.xlu0 %v1795, 64
        %v2133 = vpop.permute.xlu0 %2132
        %2134 = vrot.lane.b32.xlu0 %v1499, 64
        %v2135 = vpop.permute.xlu0 %2134
        %2136 = vrot.lane.b32.xlu0 %v1501, 64
        %v2137 = vpop.permute.xlu0 %2136
        %2138 = vrot.lane.b32.xlu0 %v1503, 64
        %v2139 = vpop.permute.xlu0 %2138
        %2140 = vrot.lane.b32.xlu0 %v1505, 64
        %v2141 = vpop.permute.xlu0 %2140
        %2142 = vrot.lane.b32.xlu0 %v1507, 64
        %v2143 = vpop.permute.xlu0 %2142
        %2144 = vrot.lane.b32.xlu0 %v1508, 64
        %v2145 = vpop.permute.xlu0 %2144
        %2146 = vrot.lane.b32.xlu0 %v1796, 64
        %v2147 = vpop.permute.xlu0 %2146
        %2148 = vrot.lane.b32.xlu0 %v1511, 64
        %v2149 = vpop.permute.xlu0 %2148
        %2150 = vrot.lane.b32.xlu0 %v1513, 64
        %v2151 = vpop.permute.xlu0 %2150
        %2152 = vrot.lane.b32.xlu0 %v1515, 64
        %v2153 = vpop.permute.xlu0 %2152
        %2154 = vrot.lane.b32.xlu0 %v1517, 64
        %v2155 = vpop.permute.xlu0 %2154
        %2156 = vrot.lane.b32.xlu0 %v1519, 64
        %v2157 = vpop.permute.xlu0 %2156
        %2158 = vrot.lane.b32.xlu0 %v1520, 64
        %v2159 = vpop.permute.xlu0 %2158
        %2160 = vrot.lane.b32.xlu0 %v1797, 64
        %v2161 = vpop.permute.xlu0 %2160
        %2162 = vrot.lane.b32.xlu0 %v1523, 64
        %v2163 = vpop.permute.xlu0 %2162
        %2164 = vrot.lane.b32.xlu0 %v1525, 64
        %v2165 = vpop.permute.xlu0 %2164
        %2166 = vrot.lane.b32.xlu0 %v1527, 64
        %v2167 = vpop.permute.xlu0 %2166
        %2168 = vrot.lane.b32.xlu0 %v1529, 64
        %v2169 = vpop.permute.xlu0 %2168
        %2170 = vrot.lane.b32.xlu0 %v1531, 64
        %v2171 = vpop.permute.xlu0 %2170
        %2172 = vrot.lane.b32.xlu0 %v1532, 64
        %v2173 = vpop.permute.xlu0 %2172
        %2174 = vrot.lane.b32.xlu0 %v1798, 64
        %v2175 = vpop.permute.xlu0 %2174
        %2176 = vrot.lane.b32.xlu0 %v1535, 64
        %v2177 = vpop.permute.xlu0 %2176
        %2178 = vrot.lane.b32.xlu0 %v1537, 64
        %v2179 = vpop.permute.xlu0 %2178
        %2180 = vrot.lane.b32.xlu0 %v1539, 64
        %v2181 = vpop.permute.xlu0 %2180
        %2182 = vrot.lane.b32.xlu0 %v1541, 64
        %v2183 = vpop.permute.xlu0 %2182
        %2184 = vrot.lane.b32.xlu0 %v1543, 64
        %v2185 = vpop.permute.xlu0 %2184
        %2186 = vrot.lane.b32.xlu0 %v1544, 64
        %v2187 = vpop.permute.xlu0 %2186
        %2188 = vrot.lane.b32.xlu0 %v1799, 64
        %v2189 = vpop.permute.xlu0 %2188
        %2190 = vrot.lane.b32.xlu0 %v1547, 64
        %v2191 = vpop.permute.xlu0 %2190
        %2192 = vrot.lane.b32.xlu0 %v1549, 64
        %v2193 = vpop.permute.xlu0 %2192
        %2194 = vrot.lane.b32.xlu0 %v1551, 64
        %v2195 = vpop.permute.xlu0 %2194
        %2196 = vrot.lane.b32.xlu0 %v1553, 64
        %v2197 = vpop.permute.xlu0 %2196
        %2198 = vrot.lane.b32.xlu0 %v1555, 64
        %v2199 = vpop.permute.xlu0 %2198
        %2200 = vrot.lane.b32.xlu0 %v1556, 64
        %v2201 = vpop.permute.xlu0 %2200
        %2202 = vrot.lane.b32.xlu0 %v1800, 64
        %v2203 = vpop.permute.xlu0 %2202
        %2204 = vrot.lane.b32.xlu0 %v1559, 64
        %v2205 = vpop.permute.xlu0 %2204
        %2206 = vrot.lane.b32.xlu0 %v1561, 64
        %v2207 = vpop.permute.xlu0 %2206
        %2208 = vrot.lane.b32.xlu0 %v1563, 64
        %v2209 = vpop.permute.xlu0 %2208
        %2210 = vrot.lane.b32.xlu0 %v1565, 64
        %v2211 = vpop.permute.xlu0 %2210
        %2212 = vrot.lane.b32.xlu0 %v1567, 64
        %v2213 = vpop.permute.xlu0 %2212
        %2214 = vrot.lane.b32.xlu0 %v1568, 64
        %v2215 = vpop.permute.xlu0 %2214
        %2216 = vrot.lane.b32.xlu0 %v1801, 64
        %v2217 = vpop.permute.xlu0 %2216
        %2218 = vrot.lane.b32.xlu0 %v1571, 64
        %v2219 = vpop.permute.xlu0 %2218
        %2220 = vrot.lane.b32.xlu0 %v1573, 64
        %v2221 = vpop.permute.xlu0 %2220
        %2222 = vrot.lane.b32.xlu0 %v1575, 64
        %v2223 = vpop.permute.xlu0 %2222
        %2224 = vrot.lane.b32.xlu0 %v1577, 64
        %v2225 = vpop.permute.xlu0 %2224
        %2226 = vrot.lane.b32.xlu0 %v1579, 64
        %v2227 = vpop.permute.xlu0 %2226
        %2228 = vrot.lane.b32.xlu0 %v1580, 64
        %v2229 = vpop.permute.xlu0 %2228
        %2230 = vrot.lane.b32.xlu0 %v1802, 64
        %v2231 = vpop.permute.xlu0 %2230
        %2232 = vrot.lane.b32.xlu0 %v1583, 64
        %v2233 = vpop.permute.xlu0 %2232
        %2234 = vrot.lane.b32.xlu0 %v1585, 64
        %v2235 = vpop.permute.xlu0 %2234
        %2236 = vrot.lane.b32.xlu0 %v1587, 64
        %v2237 = vpop.permute.xlu0 %2236
        %2238 = vrot.lane.b32.xlu0 %v1589, 64
        %v2239 = vpop.permute.xlu0 %2238
        %2240 = vrot.lane.b32.xlu0 %v1591, 64
        %v2241 = vpop.permute.xlu0 %2240
        %2242 = vrot.lane.b32.xlu0 %v1592, 64
        %v2243 = vpop.permute.xlu0 %2242
        %2244 = vrot.lane.b32.xlu0 %v1803, 64
        %v2245 = vpop.permute.xlu0 %2244
        %2246 = vrot.lane.b32.xlu0 %v1595, 64
        %v2247 = vpop.permute.xlu0 %2246
        %2248 = vrot.lane.b32.xlu0 %v1597, 64
        %v2249 = vpop.permute.xlu0 %2248
        %2250 = vrot.lane.b32.xlu0 %v1599, 64
        %v2251 = vpop.permute.xlu0 %2250
        %2252 = vrot.lane.b32.xlu0 %v1601, 64
        %v2253 = vpop.permute.xlu0 %2252
        %2254 = vrot.lane.b32.xlu0 %v1603, 64
        %v2255 = vpop.permute.xlu0 %2254
        %2256 = vrot.lane.b32.xlu0 %v1604, 64
        %v2257 = vpop.permute.xlu0 %2256
        %2258 = vrot.lane.b32.xlu0 %v1804, 64
        %v2259 = vpop.permute.xlu0 %2258
        %2260 = vrot.lane.b32.xlu0 %v1607, 64
        %v2261 = vpop.permute.xlu0 %2260
        %2262 = vrot.lane.b32.xlu0 %v1609, 64
        %v2263 = vpop.permute.xlu0 %2262
        %2264 = vrot.lane.b32.xlu0 %v1611, 64
        %v2265 = vpop.permute.xlu0 %2264
        %2266 = vrot.lane.b32.xlu0 %v1613, 64
        %v2267 = vpop.permute.xlu0 %2266
        %2268 = vrot.lane.b32.xlu0 %v1615, 64
        %v2269 = vpop.permute.xlu0 %2268
        %2270 = vrot.lane.b32.xlu0 %v1616, 64
        %v2271 = vpop.permute.xlu0 %2270
        %2272 = vrot.lane.b32.xlu0 %v1805, 64
        %v2273 = vpop.permute.xlu0 %2272
        %2274 = vrot.lane.b32.xlu0 %v1619, 64
        %v2275 = vpop.permute.xlu0 %2274
        %2276 = vrot.lane.b32.xlu0 %v1621, 64
        %v2277 = vpop.permute.xlu0 %2276
        %2278 = vrot.lane.b32.xlu0 %v1623, 64
        %v2279 = vpop.permute.xlu0 %2278
        %2280 = vrot.lane.b32.xlu0 %v1625, 64
        %v2281 = vpop.permute.xlu0 %2280
        %2282 = vrot.lane.b32.xlu0 %v1627, 64
        %v2283 = vpop.permute.xlu0 %2282
        %2284 = vrot.lane.b32.xlu0 %v1628, 64
        %v2285 = vpop.permute.xlu0 %2284
        %2286 = vrot.lane.b32.xlu0 %v1806, 64
        %v2287 = vpop.permute.xlu0 %2286
        %2288 = vrot.lane.b32.xlu0 %v1631, 64
        %v2289 = vpop.permute.xlu0 %2288
        %2290 = vrot.lane.b32.xlu0 %v1633, 64
        %v2291 = vpop.permute.xlu0 %2290
        %2292 = vrot.lane.b32.xlu0 %v1635, 64
        %v2293 = vpop.permute.xlu0 %2292
        %2294 = vrot.lane.b32.xlu0 %v1637, 64
        %v2295 = vpop.permute.xlu0 %2294
        %2296 = vrot.lane.b32.xlu0 %v1639, 64
        %v2297 = vpop.permute.xlu0 %2296
        %2298 = vrot.lane.b32.xlu0 %v1640, 64
        %v2299 = vpop.permute.xlu0 %2298
        %2300 = vrot.lane.b32.xlu0 %v1807, 64
        %v2301 = vpop.permute.xlu0 %2300
        %2302 = vrot.lane.b32.xlu0 %v1643, 64
        %v2303 = vpop.permute.xlu0 %2302
        %2304 = vrot.lane.b32.xlu0 %v1645, 64
        %v2305 = vpop.permute.xlu0 %2304
        %2306 = vrot.lane.b32.xlu0 %v1647, 64
        %v2307 = vpop.permute.xlu0 %2306
        %2308 = vrot.lane.b32.xlu0 %v1649, 64
        %v2309 = vpop.permute.xlu0 %2308
        %2310 = vrot.lane.b32.xlu0 %v1651, 64
        %v2311 = vpop.permute.xlu0 %2310
        %2312 = vrot.lane.b32.xlu0 %v1652, 64
        %v2313 = vpop.permute.xlu0 %2312
        %2314 = vrot.lane.b32.xlu0 %v1808, 64
        %v2315 = vpop.permute.xlu0 %2314
        %2316 = vrot.lane.b32.xlu0 %v1655, 64
        %v2317 = vpop.permute.xlu0 %2316
        %2318 = vrot.lane.b32.xlu0 %v1657, 64
        %v2319 = vpop.permute.xlu0 %2318
        %2320 = vrot.lane.b32.xlu0 %v1659, 64
        %v2321 = vpop.permute.xlu0 %2320
        %2322 = vrot.lane.b32.xlu0 %v1661, 64
        %v2323 = vpop.permute.xlu0 %2322
        %2324 = vrot.lane.b32.xlu0 %v1663, 64
        %v2325 = vpop.permute.xlu0 %2324
        %2326 = vrot.lane.b32.xlu0 %v1664, 64
        %v2327 = vpop.permute.xlu0 %2326
        %2328 = vrot.lane.b32.xlu0 %v1809, 64
        %v2329 = vpop.permute.xlu0 %2328
        %2330 = vrot.lane.b32.xlu0 %v1667, 64
        %v2331 = vpop.permute.xlu0 %2330
        %2332 = vrot.lane.b32.xlu0 %v1669, 64
        %v2333 = vpop.permute.xlu0 %2332
        %2334 = vrot.lane.b32.xlu0 %v1671, 64
        %v2335 = vpop.permute.xlu0 %2334
        %2336 = vrot.lane.b32.xlu0 %v1673, 64
        %v2337 = vpop.permute.xlu0 %2336
        %2338 = vrot.lane.b32.xlu0 %v1675, 64
        %v2339 = vpop.permute.xlu0 %2338
        %2340 = vrot.lane.b32.xlu0 %v1676, 64
        %v2341 = vpop.permute.xlu0 %2340
        %2342 = vrot.lane.b32.xlu0 %v1810, 64
        %v2343 = vpop.permute.xlu0 %2342
        %2344 = vrot.lane.b32.xlu0 %v1679, 64
        %v2345 = vpop.permute.xlu0 %2344
        %2346 = vrot.lane.b32.xlu0 %v1681, 64
        %v2347 = vpop.permute.xlu0 %2346
        %2348 = vrot.lane.b32.xlu0 %v1683, 64
        %v2349 = vpop.permute.xlu0 %2348
        %2350 = vrot.lane.b32.xlu0 %v1685, 64
        %v2351 = vpop.permute.xlu0 %2350
        %2352 = vrot.lane.b32.xlu0 %v1687, 64
        %v2353 = vpop.permute.xlu0 %2352
        %2354 = vrot.lane.b32.xlu0 %v1688, 64
        %v2355 = vpop.permute.xlu0 %2354
        %2356 = vrot.lane.b32.xlu0 %v1811, 64
        %v2357 = vpop.permute.xlu0 %2356
        %2358 = vrot.lane.b32.xlu0 %v1691, 64
        %v2359 = vpop.permute.xlu0 %2358
        %2360 = vrot.lane.b32.xlu0 %v1693, 64
        %v2361 = vpop.permute.xlu0 %2360
        %2362 = vrot.lane.b32.xlu0 %v1695, 64
        %v2363 = vpop.permute.xlu0 %2362
        %2364 = vrot.lane.b32.xlu0 %v1697, 64
        %v2365 = vpop.permute.xlu0 %2364
        %2366 = vrot.lane.b32.xlu0 %v1699, 64
        %v2367 = vpop.permute.xlu0 %2366
        %2368 = vrot.lane.b32.xlu0 %v1700, 64
        %v2369 = vpop.permute.xlu0 %2368
        %2370 = vrot.lane.b32.xlu0 %v1812, 64
        %v2371 = vpop.permute.xlu0 %2370
        %2372 = vrot.lane.b32.xlu0 %v1703, 64
        %v2373 = vpop.permute.xlu0 %2372
        %2374 = vrot.lane.b32.xlu0 %v1705, 64
        %v2375 = vpop.permute.xlu0 %2374
        %2376 = vrot.lane.b32.xlu0 %v1707, 64
        %v2377 = vpop.permute.xlu0 %2376
        %2378 = vrot.lane.b32.xlu0 %v1709, 64
        %v2379 = vpop.permute.xlu0 %2378
        %2380 = vrot.lane.b32.xlu0 %v1711, 64
        %v2381 = vpop.permute.xlu0 %2380
        %2382 = vrot.lane.b32.xlu0 %v1712, 64
        %v2383 = vpop.permute.xlu0 %2382
        %2384 = vrot.lane.b32.xlu0 %v1813, 64
        %v2385 = vpop.permute.xlu0 %2384
        %2386 = vrot.lane.b32.xlu0 %v1715, 64
        %v2387 = vpop.permute.xlu0 %2386
        %2388 = vrot.lane.b32.xlu0 %v1717, 64
        %v2389 = vpop.permute.xlu0 %2388
        %2390 = vrot.lane.b32.xlu0 %v1719, 64
        %v2391 = vpop.permute.xlu0 %2390
        %2392 = vrot.lane.b32.xlu0 %v1721, 64
        %v2393 = vpop.permute.xlu0 %2392
        %2394 = vrot.lane.b32.xlu0 %v1723, 64
        %v2395 = vpop.permute.xlu0 %2394
        %2396 = vrot.lane.b32.xlu0 %v1724, 64
        %v2397 = vpop.permute.xlu0 %2396
        %2398 = vrot.lane.b32.xlu0 %v1814, 64
        %v2399 = vpop.permute.xlu0 %2398
        %2400 = vrot.lane.b32.xlu0 %v1727, 64
        %v2401 = vpop.permute.xlu0 %2400
        %2402 = vrot.lane.b32.xlu0 %v1729, 64
        %v2403 = vpop.permute.xlu0 %2402
        %2404 = vrot.lane.b32.xlu0 %v1731, 64
        %v2405 = vpop.permute.xlu0 %2404
        %2406 = vrot.lane.b32.xlu0 %v1733, 64
        %v2407 = vpop.permute.xlu0 %2406
        %2408 = vrot.lane.b32.xlu0 %v1735, 64
        %v2409 = vpop.permute.xlu0 %2408
        %2410 = vrot.lane.b32.xlu0 %v1736, 64
        %v2411 = vpop.permute.xlu0 %2410
        %2412 = vrot.lane.b32.xlu0 %v1815, 64
        %v2413 = vpop.permute.xlu0 %2412
        %2414 = vrot.lane.b32.xlu0 %v1739, 64
        %v2415 = vpop.permute.xlu0 %2414
        %2416 = vrot.lane.b32.xlu0 %v1741, 64
        %v2417 = vpop.permute.xlu0 %2416
        %2418 = vrot.lane.b32.xlu0 %v1743, 64
        %v2419 = vpop.permute.xlu0 %2418
        %2420 = vrot.lane.b32.xlu0 %v1745, 64
        %v2421 = vpop.permute.xlu0 %2420
        %2422 = vrot.lane.b32.xlu0 %v1747, 64
        %v2423 = vpop.permute.xlu0 %2422
        %2424 = vrot.lane.b32.xlu0 %v1748, 64
        %v2425 = vpop.permute.xlu0 %2424
        %2426 = vrot.lane.b32.xlu0 %v1816, 64
        %v2427 = vpop.permute.xlu0 %2426
        %2428 = vrot.lane.b32.xlu0 %v1751, 64
        %v2429 = vpop.permute.xlu0 %2428
        %2430 = vrot.lane.b32.xlu0 %v1753, 64
        %v2431 = vpop.permute.xlu0 %2430
        %2432 = vrot.lane.b32.xlu0 %v1755, 64
        %v2433 = vpop.permute.xlu0 %2432
        %2434 = vrot.lane.b32.xlu0 %v1757, 64
        %v2435 = vpop.permute.xlu0 %2434
        %2436 = vrot.lane.b32.xlu0 %v1759, 64
        %v2437 = vpop.permute.xlu0 %2436
        %2438 = vrot.lane.b32.xlu0 %v1760, 64
        %v2439 = vpop.permute.xlu0 %2438
        %vm2636 = vcmask 523264
        %v2637 = vsel %vm2636, %v1172, %v2049
        %v2638 = vsel %vm2636, %v1173, %v2051
        %v2639 = vsel %vm2636, %v1174, %v2053
        %v2640 = vsel %vm2636, %v1175, %v2055
        %v2641 = vsel %vm2636, %v1176, %v2057
        %v2642 = vsel %vm2636, %v1177, %v2059
        %v2643 = vsel %vm2636, %v1178, %v2061
        %v2644 = vsel %vm2636, %v1179, %v2063
        %v2645 = vsel %vm2636, %v1180, %v2065
        %v2646 = vsel %vm2636, %v1181, %v2067
        %v2647 = vsel %vm2636, %v1182, %v2069
        %v2648 = vsel %vm2636, %v1183, %v2071
        %v2649 = vsel %vm2636, %v1184, %v2073
        %v2650 = vsel %vm2636, %v1185, %v2075
        %v2651 = vsel %vm2636, %v1186, %v2077
        %v2652 = vsel %vm2636, %v1187, %v2079
        %v2653 = vsel %vm2636, %v1188, %v2081
        %v2654 = vsel %vm2636, %v1189, %v2083
        %v2655 = vsel %vm2636, %v1190, %v2085
        %v2656 = vsel %vm2636, %v1191, %v2087
        %v2657 = vsel %vm2636, %v1192, %v2089
        %v2658 = vsel %vm2636, %v1193, %v2091
        %v2659 = vsel %vm2636, %v1194, %v2093
        %v2660 = vsel %vm2636, %v1195, %v2095
        %v2661 = vsel %vm2636, %v1196, %v2097
        %v2662 = vsel %vm2636, %v1197, %v2099
        %v2663 = vsel %vm2636, %v1198, %v2101
        %v2664 = vsel %vm2636, %v1199, %v2103
        %v2665 = vsel %vm2636, %v1200, %v2105
        %v2666 = vsel %vm2636, %v1201, %v2107
        %v2667 = vsel %vm2636, %v1202, %v2109
        %v2668 = vsel %vm2636, %v1203, %v2111
        %v2669 = vsel %vm2636, %v1204, %v2113
        %v2670 = vsel %vm2636, %v1205, %v2115
        %v2671 = vsel %vm2636, %v1206, %v2117
        %v2672 = vsel %vm2636, %v1207, %v2119
        %v2673 = vsel %vm2636, %v1208, %v2121
        %v2674 = vsel %vm2636, %v1209, %v2123
        %v2675 = vsel %vm2636, %v1210, %v2125
        %v2676 = vsel %vm2636, %v1211, %v2127
        %v2677 = vsel %vm2636, %v1212, %v2129
        %v2678 = vsel %vm2636, %v1213, %v2131
        %v2679 = vsel %vm2636, %v1214, %v2133
        %v2680 = vsel %vm2636, %v1215, %v2135
        %v2681 = vsel %vm2636, %v1216, %v2137
        %v2682 = vsel %vm2636, %v1217, %v2139
        %v2683 = vsel %vm2636, %v1218, %v2141
        %v2684 = vsel %vm2636, %v1219, %v2143
        %v2685 = vsel %vm2636, %v1220, %v2145
        %v2686 = vsel %vm2636, %v1221, %v2147
        %v2687 = vsel %vm2636, %v1222, %v2149
        %v2688 = vsel %vm2636, %v1223, %v2151
        %v2689 = vsel %vm2636, %v1224, %v2153
        %v2690 = vsel %vm2636, %v1225, %v2155
        %v2691 = vsel %vm2636, %v1226, %v2157
        %v2692 = vsel %vm2636, %v1227, %v2159
        %v2693 = vsel %vm2636, %v1228, %v2161
        %v2694 = vsel %vm2636, %v1229, %v2163
        %v2695 = vsel %vm2636, %v1230, %v2165
        %v2696 = vsel %vm2636, %v1231, %v2167
        %v2697 = vsel %vm2636, %v1232, %v2169
        %v2698 = vsel %vm2636, %v1233, %v2171
        %v2699 = vsel %vm2636, %v1234, %v2173
        %v2700 = vsel %vm2636, %v1235, %v2175
        %v2701 = vsel %vm2636, %v1236, %v2177
        %v2702 = vsel %vm2636, %v1237, %v2179
        %v2703 = vsel %vm2636, %v1238, %v2181
        %v2704 = vsel %vm2636, %v1239, %v2183
        %v2705 = vsel %vm2636, %v1240, %v2185
        %v2706 = vsel %vm2636, %v1241, %v2187
        %v2707 = vsel %vm2636, %v1242, %v2189
        %v2708 = vsel %vm2636, %v1243, %v2191
        %v2709 = vsel %vm2636, %v1244, %v2193
        %v2710 = vsel %vm2636, %v1245, %v2195
        %v2711 = vsel %vm2636, %v1246, %v2197
        %v2712 = vsel %vm2636, %v1247, %v2199
        %v2713 = vsel %vm2636, %v1248, %v2201
        %v2714 = vsel %vm2636, %v1249, %v2203
        %v2715 = vsel %vm2636, %v1250, %v2205
        %v2716 = vsel %vm2636, %v1251, %v2207
        %v2717 = vsel %vm2636, %v1252, %v2209
        %v2718 = vsel %vm2636, %v1253, %v2211
        %v2719 = vsel %vm2636, %v1254, %v2213
        %v2720 = vsel %vm2636, %v1255, %v2215
        %v2721 = vsel %vm2636, %v1256, %v2217
        %v2722 = vsel %vm2636, %v1257, %v2219
        %v2723 = vsel %vm2636, %v1258, %v2221
        %v2724 = vsel %vm2636, %v1259, %v2223
        %v2725 = vsel %vm2636, %v1260, %v2225
        %v2726 = vsel %vm2636, %v1261, %v2227
        %v2727 = vsel %vm2636, %v1262, %v2229
        %v2728 = vsel %vm2636, %v1263, %v2231
        %v2729 = vsel %vm2636, %v1264, %v2233
        %v2730 = vsel %vm2636, %v1265, %v2235
        %v2731 = vsel %vm2636, %v1266, %v2237
        %v2732 = vsel %vm2636, %v1267, %v2239
        %v2733 = vsel %vm2636, %v1268, %v2241
        %v2734 = vsel %vm2636, %v1269, %v2243
        %v2735 = vsel %vm2636, %v1270, %v2245
        %v2736 = vsel %vm2636, %v1271, %v2247
        %v2737 = vsel %vm2636, %v1272, %v2249
        %v2738 = vsel %vm2636, %v1273, %v2251
        %v2739 = vsel %vm2636, %v1274, %v2253
        %v2740 = vsel %vm2636, %v1275, %v2255
        %v2741 = vsel %vm2636, %v1276, %v2257
        %v2742 = vsel %vm2636, %v1277, %v2259
        %v2743 = vsel %vm2636, %v1278, %v2261
        %v2744 = vsel %vm2636, %v1279, %v2263
        %v2745 = vsel %vm2636, %v1280, %v2265
        %v2746 = vsel %vm2636, %v1281, %v2267
        %v2747 = vsel %vm2636, %v1282, %v2269
        %v2748 = vsel %vm2636, %v1283, %v2271
        %v2749 = vsel %vm2636, %v1284, %v2273
        %v2750 = vsel %vm2636, %v1285, %v2275
        %v2751 = vsel %vm2636, %v1286, %v2277
        %v2752 = vsel %vm2636, %v1287, %v2279
        %v2753 = vsel %vm2636, %v1288, %v2281
        %v2754 = vsel %vm2636, %v1289, %v2283
        %v2755 = vsel %vm2636, %v1290, %v2285
        %v2756 = vsel %vm2636, %v1291, %v2287
        %v2757 = vsel %vm2636, %v1292, %v2289
        %v2758 = vsel %vm2636, %v1293, %v2291
        %v2759 = vsel %vm2636, %v1294, %v2293
        %v2760 = vsel %vm2636, %v1295, %v2295
        %v2761 = vsel %vm2636, %v1296, %v2297
        %v2762 = vsel %vm2636, %v1297, %v2299
        %v2763 = vsel %vm2636, %v1298, %v2301
        %v2764 = vsel %vm2636, %v1299, %v2303
        %v2765 = vsel %vm2636, %v1300, %v2305
        %v2766 = vsel %vm2636, %v1301, %v2307
        %v2767 = vsel %vm2636, %v1302, %v2309
        %v2768 = vsel %vm2636, %v1303, %v2311
        %v2769 = vsel %vm2636, %v1304, %v2313
        %v2770 = vsel %vm2636, %v1305, %v2315
        %v2771 = vsel %vm2636, %v1306, %v2317
        %v2772 = vsel %vm2636, %v1307, %v2319
        %v2773 = vsel %vm2636, %v1308, %v2321
        %v2774 = vsel %vm2636, %v1309, %v2323
        %v2775 = vsel %vm2636, %v1310, %v2325
        %v2776 = vsel %vm2636, %v1311, %v2327
        %v2777 = vsel %vm2636, %v1312, %v2329
        %v2778 = vsel %vm2636, %v1313, %v2331
        %v2779 = vsel %vm2636, %v1314, %v2333
        %v2780 = vsel %vm2636, %v1315, %v2335
        %v2781 = vsel %vm2636, %v1316, %v2337
        %v2782 = vsel %vm2636, %v1317, %v2339
        %v2783 = vsel %vm2636, %v1318, %v2341
        %v2784 = vsel %vm2636, %v1319, %v2343
        %v2785 = vsel %vm2636, %v1320, %v2345
        %v2786 = vsel %vm2636, %v1321, %v2347
        %v2787 = vsel %vm2636, %v1322, %v2349
        %v2788 = vsel %vm2636, %v1323, %v2351
        %v2789 = vsel %vm2636, %v1324, %v2353
        %v2790 = vsel %vm2636, %v1325, %v2355
        %v2791 = vsel %vm2636, %v1326, %v2357
        %v2792 = vsel %vm2636, %v1327, %v2359
        %v2793 = vsel %vm2636, %v1328, %v2361
        %v2794 = vsel %vm2636, %v1329, %v2363
        %v2795 = vsel %vm2636, %v1330, %v2365
        %v2796 = vsel %vm2636, %v1331, %v2367
        %v2797 = vsel %vm2636, %v1332, %v2369
        %v2798 = vsel %vm2636, %v1333, %v2371
        %v2799 = vsel %vm2636, %v1334, %v2373
        %v2800 = vsel %vm2636, %v1335, %v2375
        %v2801 = vsel %vm2636, %v1336, %v2377
        %v2802 = vsel %vm2636, %v1337, %v2379
        %v2803 = vsel %vm2636, %v1338, %v2381
        %v2804 = vsel %vm2636, %v1339, %v2383
        %v2805 = vsel %vm2636, %v1340, %v2385
        %v2806 = vsel %vm2636, %v1341, %v2387
        %v2807 = vsel %vm2636, %v1342, %v2389
        %v2808 = vsel %vm2636, %v1343, %v2391
        %v2809 = vsel %vm2636, %v1344, %v2393
        %v2810 = vsel %vm2636, %v1345, %v2395
        %v2811 = vsel %vm2636, %v1346, %v2397
        %v2812 = vsel %vm2636, %v1347, %v2399
        %v2813 = vsel %vm2636, %v1348, %v2401
        %v2814 = vsel %vm2636, %v1349, %v2403
        %v2815 = vsel %vm2636, %v1350, %v2405
        %v2816 = vsel %vm2636, %v1351, %v2407
        %v2817 = vsel %vm2636, %v1352, %v2409
        %v2818 = vsel %vm2636, %v1353, %v2411
        %v2819 = vsel %vm2636, %v1354, %v2413
        %v2820 = vsel %vm2636, %v1355, %v2415
        %v2821 = vsel %vm2636, %v1356, %v2417
        %v2822 = vsel %vm2636, %v1357, %v2419
        %v2823 = vsel %vm2636, %v1358, %v2421
        %v2824 = vsel %vm2636, %v1359, %v2423
        %v2825 = vsel %vm2636, %v1360, %v2425
        %v2826 = vsel %vm2636, %v1361, %v2427
        %v2827 = vsel %vm2636, %v1362, %v2429
        %v2828 = vsel %vm2636, %v1363, %v2431
        %v2829 = vsel %vm2636, %v1364, %v2433
        %v2830 = vsel %vm2636, %v1365, %v2435
        %v2831 = vsel %vm2636, %v1366, %v2437
        %v2832 = vsel %vm2636, %v1367, %v2439
        %v2833 = vld [vmem:[%s1] sm:$0xff]
        %v2834 = vld [vmem:[%s1 + $0x8] sm:$0xff]
        %v2835 = vld [vmem:[%s1 + $0x10] sm:$0xff]
        %v2836 = vld [vmem:[%s1 + $0x18] sm:$0xff]
        %v2837 = vld [vmem:[%s1 + $0x20] sm:$0xff]
        %v2838 = vld [vmem:[%s1 + $0x28] sm:$0xff]
        %v2839 = vld [vmem:[%s1 + $0x30] sm:$0xff]
        %v2840 = vld [vmem:[%s1 + $0x38] sm:$0xff]
        %v2841 = vld [vmem:[%s1 + $0x40] sm:$0xff]
        %v2842 = vld [vmem:[%s1 + $0x48] sm:$0xff]
        %v2843 = vld [vmem:[%s1 + $0x50] sm:$0xff]
        %v2844 = vld [vmem:[%s1 + $0x58] sm:$0xff]
        %v2845 = vld [vmem:[%s1 + $0x60] sm:$0xff]
        %v2846 = vld [vmem:[%s1 + $0x68] sm:$0xff]
        %v2847 = vld [vmem:[%s1 + $0x70] sm:$0xff]
        %v2848 = vld [vmem:[%s1 + $0x78] sm:$0xff]
        %v2849 = vld [vmem:[%s1 + $0x80] sm:$0xff]
        %v2850 = vld [vmem:[%s1 + $0x88] sm:$0xff]
        %v2851 = vld [vmem:[%s1 + $0x90] sm:$0xff]
        %v2852 = vld [vmem:[%s1 + $0x98] sm:$0xff]
        %v2853 = vld [vmem:[%s1 + $0xa0] sm:$0xff]
        %v2854 = vld [vmem:[%s1 + $0xa8] sm:$0xff]
        %v2855 = vld [vmem:[%s1 + $0xb0] sm:$0xff]
        %v2856 = vld [vmem:[%s1 + $0xb8] sm:$0xff]
        %v2858 = vsel %vm2636, %v1824, 0
        %v2861 = vsel %vm2636, %v1825, 0
        %v2864 = vsel %vm2636, %v1826, 0
        %v2867 = vsel %vm2636, %v1827, 0
        %v2870 = vsel %vm2636, %v1828, 0
        %v2873 = vsel %vm2636, %v1829, 0
        %v2876 = vsel %vm2636, %v1830, 0
        %v2879 = vsel %vm2636, %v1831, 0
        %v2882 = vsel %vm2636, %v1832, 0
        %v2885 = vsel %vm2636, %v1833, 0
        %v2888 = vsel %vm2636, %v1834, 0
        %v2891 = vsel %vm2636, %v1835, 0
        %v2894 = vsel %vm2636, %v1836, 0
        %v2897 = vsel %vm2636, %v1837, 0
        %v2900 = vsel %vm2636, %v1838, 0
        %v2903 = vsel %vm2636, %v1839, 0
        %v2906 = vsel %vm2636, %v1840, 0
        %v2909 = vsel %vm2636, %v1841, 0
        %v2912 = vsel %vm2636, %v1842, 0
        %v2915 = vsel %vm2636, %v1843, 0
        %v2918 = vsel %vm2636, %v1844, 0
        %v2921 = vsel %vm2636, %v1845, 0
        %v2924 = vsel %vm2636, %v1846, 0
        %v2927 = vsel %vm2636, %v1847, 0
        %v2930 = vsel %vm2636, %v1848, 0
        %v2933 = vsel %vm2636, %v1849, 0
        %v2936 = vsel %vm2636, %v1850, 0
        %v2939 = vsel %vm2636, %v1851, 0
        %v2942 = vsel %vm2636, %v1852, 0
        %v2945 = vsel %vm2636, %v1853, 0
        %v2948 = vsel %vm2636, %v1854, 0
        %v2951 = vsel %vm2636, %v1855, 0
        %v2954 = vsel %vm2636, %v1856, 0
        %v2957 = vsel %vm2636, %v1857, 0
        %v2960 = vsel %vm2636, %v1858, 0
        %v2963 = vsel %vm2636, %v1859, 0
        %v2966 = vsel %vm2636, %v1860, 0
        %v2969 = vsel %vm2636, %v1861, 0
        %v2972 = vsel %vm2636, %v1862, 0
        %v2975 = vsel %vm2636, %v1863, 0
        %v2978 = vsel %vm2636, %v1864, 0
        %v2981 = vsel %vm2636, %v1865, 0
        %v2984 = vsel %vm2636, %v1866, 0
        %v2987 = vsel %vm2636, %v1867, 0
        %v2990 = vsel %vm2636, %v1868, 0
        %v2993 = vsel %vm2636, %v1869, 0
        %v2996 = vsel %vm2636, %v1870, 0
        %v2999 = vsel %vm2636, %v1871, 0
        %v3002 = vsel %vm2636, %v1872, 0
        %v3005 = vsel %vm2636, %v1873, 0
        %v3008 = vsel %vm2636, %v1874, 0
        %v3011 = vsel %vm2636, %v1875, 0
        %v3014 = vsel %vm2636, %v1876, 0
        %v3017 = vsel %vm2636, %v1877, 0
        %v3020 = vsel %vm2636, %v1878, 0
        %v3023 = vsel %vm2636, %v1879, 0
        %v3026 = vsel %vm2636, %v1880, 0
        %v3029 = vsel %vm2636, %v1881, 0
        %v3032 = vsel %vm2636, %v1882, 0
        %v3035 = vsel %vm2636, %v1883, 0
        %v3038 = vsel %vm2636, %v1884, 0
        %v3041 = vsel %vm2636, %v1885, 0
        %v3044 = vsel %vm2636, %v1886, 0
        %v3047 = vsel %vm2636, %v1887, 0
        %v3050 = vsel %vm2636, %v1888, 0
        %v3053 = vsel %vm2636, %v1889, 0
        %v3056 = vsel %vm2636, %v1890, 0
        %v3059 = vsel %vm2636, %v1891, 0
        %v3062 = vsel %vm2636, %v1892, 0
        %v3065 = vsel %vm2636, %v1893, 0
        %v3068 = vsel %vm2636, %v1894, 0
        %v3071 = vsel %vm2636, %v1895, 0
        %v3074 = vsel %vm2636, %v1896, 0
        %v3077 = vsel %vm2636, %v1897, 0
        %v3080 = vsel %vm2636, %v1898, 0
        %v3083 = vsel %vm2636, %v1899, 0
        %v3086 = vsel %vm2636, %v1900, 0
        %v3089 = vsel %vm2636, %v1901, 0
        %v3092 = vsel %vm2636, %v1902, 0
        %v3095 = vsel %vm2636, %v1903, 0
        %v3098 = vsel %vm2636, %v1904, 0
        %v3101 = vsel %vm2636, %v1905, 0
        %v3104 = vsel %vm2636, %v1906, 0
        %v3107 = vsel %vm2636, %v1907, 0
        %v3110 = vsel %vm2636, %v1908, 0
        %v3113 = vsel %vm2636, %v1909, 0
        %v3116 = vsel %vm2636, %v1910, 0
        %v3119 = vsel %vm2636, %v1911, 0
        %v3122 = vsel %vm2636, %v1912, 0
        %v3125 = vsel %vm2636, %v1913, 0
        %v3128 = vsel %vm2636, %v1914, 0
        %v3131 = vsel %vm2636, %v1915, 0
        %v3134 = vsel %vm2636, %v1916, 0
        %v3137 = vsel %vm2636, %v1917, 0
        %v3140 = vsel %vm2636, %v1918, 0
        %v3143 = vsel %vm2636, %v1919, 0
        %v3146 = vsel %vm2636, %v1920, 0
        %v3149 = vsel %vm2636, %v1921, 0
        %v3152 = vsel %vm2636, %v1922, 0
        %v3155 = vsel %vm2636, %v1923, 0
        %v3158 = vsel %vm2636, %v1924, 0
        %v3161 = vsel %vm2636, %v1925, 0
        %v3164 = vsel %vm2636, %v1926, 0
        %v3167 = vsel %vm2636, %v1927, 0
        %v3170 = vsel %vm2636, %v1928, 0
        %v3173 = vsel %vm2636, %v1929, 0
        %v3176 = vsel %vm2636, %v1930, 0
        %v3179 = vsel %vm2636, %v1931, 0
        %v3182 = vsel %vm2636, %v1932, 0
        %v3185 = vsel %vm2636, %v1933, 0
        %v3188 = vsel %vm2636, %v1934, 0
        %v3191 = vsel %vm2636, %v1935, 0
        %v3194 = vsel %vm2636, %v1936, 0
        %v3197 = vsel %vm2636, %v1937, 0
        %v3200 = vsel %vm2636, %v1938, 0
        %v3203 = vsel %vm2636, %v1939, 0
        %v3206 = vsel %vm2636, %v1940, 0
        %v3209 = vsel %vm2636, %v1941, 0
        %v3212 = vsel %vm2636, %v1942, 0
        %v3215 = vsel %vm2636, %v1943, 0
        %v3218 = vsel %vm2636, %v1944, 0
        %v3221 = vsel %vm2636, %v1945, 0
        %v3224 = vsel %vm2636, %v1946, 0
        %v3227 = vsel %vm2636, %v1947, 0
        %v3230 = vsel %vm2636, %v1948, 0
        %v3233 = vsel %vm2636, %v1949, 0
        %v3236 = vsel %vm2636, %v1950, 0
        %v3239 = vsel %vm2636, %v1951, 0
        %v3242 = vsel %vm2636, %v1952, 0
        %v3245 = vsel %vm2636, %v1953, 0
        %v3248 = vsel %vm2636, %v1954, 0
        %v3251 = vsel %vm2636, %v1955, 0
        %v3254 = vsel %vm2636, %v1956, 0
        %v3257 = vsel %vm2636, %v1957, 0
        %v3260 = vsel %vm2636, %v1958, 0
        %v3263 = vsel %vm2636, %v1959, 0
        %v3266 = vsel %vm2636, %v1960, 0
        %v3269 = vsel %vm2636, %v1961, 0
        %v3272 = vsel %vm2636, %v1962, 0
        %v3275 = vsel %vm2636, %v1963, 0
        %v3278 = vsel %vm2636, %v1964, 0
        %v3281 = vsel %vm2636, %v1965, 0
        %v3284 = vsel %vm2636, %v1966, 0
        %v3287 = vsel %vm2636, %v1967, 0
        %v3290 = vsel %vm2636, %v1968, 0
        %v3293 = vsel %vm2636, %v1969, 0
        %v3296 = vsel %vm2636, %v1970, 0
        %v3299 = vsel %vm2636, %v1971, 0
        %v3302 = vsel %vm2636, %v1972, 0
        %v3305 = vsel %vm2636, %v1973, 0
        %v3308 = vsel %vm2636, %v1974, 0
        %v3311 = vsel %vm2636, %v1975, 0
        %v3314 = vsel %vm2636, %v1976, 0
        %v3317 = vsel %vm2636, %v1977, 0
        %v3320 = vsel %vm2636, %v1978, 0
        %v3323 = vsel %vm2636, %v1979, 0
        %v3326 = vsel %vm2636, %v1980, 0
        %v3329 = vsel %vm2636, %v1981, 0
        %v3332 = vsel %vm2636, %v1982, 0
        %v3335 = vsel %vm2636, %v1983, 0
        %v3338 = vsel %vm2636, %v1984, 0
        %v3341 = vsel %vm2636, %v1985, 0
        %v3344 = vsel %vm2636, %v1986, 0
        %v3347 = vsel %vm2636, %v1987, 0
        %v3350 = vsel %vm2636, %v1988, 0
        %v3353 = vsel %vm2636, %v1989, 0
        %v3356 = vsel %vm2636, %v1990, 0
        %v3359 = vsel %vm2636, %v1991, 0
        %v3362 = vsel %vm2636, %v1992, 0
        %v3365 = vsel %vm2636, %v1993, 0
        %v3368 = vsel %vm2636, %v1994, 0
        %v3371 = vsel %vm2636, %v1995, 0
        %v3374 = vsel %vm2636, %v1996, 0
        %v3377 = vsel %vm2636, %v1997, 0
        %v3380 = vsel %vm2636, %v1998, 0
        %v3383 = vsel %vm2636, %v1999, 0
        %v3386 = vsel %vm2636, %v2000, 0
        %v3389 = vsel %vm2636, %v2001, 0
        %v3392 = vsel %vm2636, %v2002, 0
        %v3395 = vsel %vm2636, %v2003, 0
        %v3398 = vsel %vm2636, %v2004, 0
        %v3401 = vsel %vm2636, %v2005, 0
        %v3404 = vsel %vm2636, %v2006, 0
        %v3407 = vsel %vm2636, %v2007, 0
        %v3410 = vsel %vm2636, %v2008, 0
        %v3413 = vsel %vm2636, %v2009, 0
        %v3416 = vsel %vm2636, %v2010, 0
        %v3419 = vsel %vm2636, %v2011, 0
        %v3422 = vsel %vm2636, %v2012, 0
        %v3425 = vsel %vm2636, %v2013, 0
        %v3428 = vsel %vm2636, %v2014, 0
        %v3431 = vsel %vm2636, %v2015, 0
        %v3434 = vsel %vm2636, %v2016, 0
        %v3437 = vsel %vm2636, %v2017, 0
        %v3440 = vsel %vm2636, %v2018, 0
        %v3443 = vsel %vm2636, %v2019, 0
        %3445 = vmatpush.msra.mxu0 %v2848
        %3446 = vmatpush.msra.mxu0 %v2847
        %3447 = vmatpush.msra.mxu0 %v2846
        %3448 = vmatpush.msra.mxu0 %v2845
        %3449 = vmatpush.msra.mxu0 %v2844
        %3450 = vmatpush.msra.mxu0 %v2843
        %3451 = vmatpush.msra.mxu0 %v2842
        %3452 = vmatpush.msra.mxu0 %v2841
        %3453 = vmatpush.msra.mxu0 %v2840
        %3454 = vmatpush.msra.mxu0 %v2839
        %3455 = vmatpush.msra.mxu0 %v2838
        %3456 = vmatpush.msra.mxu0 %v2837
        %3457 = vmatpush.msra.mxu0 %v2836
        %3458 = vmatpush.msra.mxu0 %v2835
        %3459 = vmatpush.msra.mxu0 %v2834
        %3460 = vmatpush.msra.mxu0 %v2833
        %3461 = vmatmul.f32.gmra.mxu0 %v2637
        %v3462 = vpop.f32.mrf.mxu0
        %v3463 = vadd.f32 0.0, %v3462
        %3464 = vmatmul.f32.gmra.mxu0 %v2638
        %v3465 = vpop.f32.mrf.mxu0
        %v3466 = vadd.f32 0.0, %v3465
        %3467 = vmatmul.f32.gmra.mxu0 %v2639
        %v3468 = vpop.f32.mrf.mxu0
        %v3469 = vadd.f32 0.0, %v3468
        %3470 = vmatmul.f32.gmra.mxu0 %v2640
        %v3471 = vpop.f32.mrf.mxu0
        %v3472 = vadd.f32 0.0, %v3471
        %3473 = vmatmul.f32.gmra.mxu0 %v2641
        %v3474 = vpop.f32.mrf.mxu0
        %v3475 = vadd.f32 0.0, %v3474
        %3476 = vmatmul.f32.gmra.mxu0 %v2642
        %v3477 = vpop.f32.mrf.mxu0
        %v3478 = vadd.f32 0.0, %v3477
        %3479 = vmatmul.f32.gmra.mxu0 %v2643
        %v3480 = vpop.f32.mrf.mxu0
        %v3481 = vadd.f32 0.0, %v3480
        %3482 = vmatmul.f32.gmra.mxu0 %v2644
        %v3483 = vpop.f32.mrf.mxu0
        %v3484 = vadd.f32 0.0, %v3483
        %3485 = vmatmul.f32.gmra.mxu0 %v2645
        %v3486 = vpop.f32.mrf.mxu0
        %v3487 = vadd.f32 0.0, %v3486
        %3488 = vmatmul.f32.gmra.mxu0 %v2646
        %v3489 = vpop.f32.mrf.mxu0
        %v3490 = vadd.f32 0.0, %v3489
        %3491 = vmatmul.f32.gmra.mxu0 %v2647
        %v3492 = vpop.f32.mrf.mxu0
        %v3493 = vadd.f32 0.0, %v3492
        %3494 = vmatmul.f32.gmra.mxu0 %v2648
        %v3495 = vpop.f32.mrf.mxu0
        %v3496 = vadd.f32 0.0, %v3495
        %3497 = vmatmul.f32.gmra.mxu0 %v2649
        %v3498 = vpop.f32.mrf.mxu0
        %v3499 = vadd.f32 0.0, %v3498
        %3500 = vmatmul.f32.gmra.mxu0 %v2650
        %v3501 = vpop.f32.mrf.mxu0
        %v3502 = vadd.f32 0.0, %v3501
        %3503 = vmatmul.f32.gmra.mxu0 %v2651
        %v3504 = vpop.f32.mrf.mxu0
        %v3505 = vadd.f32 0.0, %v3504
        %3506 = vmatmul.f32.gmra.mxu0 %v2652
        %v3507 = vpop.f32.mrf.mxu0
        %v3508 = vadd.f32 0.0, %v3507
        %3509 = vmatmul.f32.gmra.mxu0 %v2653
        %v3510 = vpop.f32.mrf.mxu0
        %v3511 = vadd.f32 0.0, %v3510
        %3512 = vmatmul.f32.gmra.mxu0 %v2654
        %v3513 = vpop.f32.mrf.mxu0
        %v3514 = vadd.f32 0.0, %v3513
        %3515 = vmatmul.f32.gmra.mxu0 %v2655
        %v3516 = vpop.f32.mrf.mxu0
        %v3517 = vadd.f32 0.0, %v3516
        %3518 = vmatmul.f32.gmra.mxu0 %v2656
        %v3519 = vpop.f32.mrf.mxu0
        %v3520 = vadd.f32 0.0, %v3519
        %3521 = vmatmul.f32.gmra.mxu0 %v2657
        %v3522 = vpop.f32.mrf.mxu0
        %v3523 = vadd.f32 0.0, %v3522
        %3524 = vmatmul.f32.gmra.mxu0 %v2658
        %v3525 = vpop.f32.mrf.mxu0
        %v3526 = vadd.f32 0.0, %v3525
        %3527 = vmatmul.f32.gmra.mxu0 %v2659
        %v3528 = vpop.f32.mrf.mxu0
        %v3529 = vadd.f32 0.0, %v3528
        %3530 = vmatmul.f32.gmra.mxu0 %v2660
        %v3531 = vpop.f32.mrf.mxu0
        %v3532 = vadd.f32 0.0, %v3531
        %3533 = vmatmul.f32.gmra.mxu0 %v2661
        %v3534 = vpop.f32.mrf.mxu0
        %v3535 = vadd.f32 0.0, %v3534
        %3536 = vmatmul.f32.gmra.mxu0 %v2662
        %v3537 = vpop.f32.mrf.mxu0
        %v3538 = vadd.f32 0.0, %v3537
        %3539 = vmatmul.f32.gmra.mxu0 %v2663
        %v3540 = vpop.f32.mrf.mxu0
        %v3541 = vadd.f32 0.0, %v3540
        %3542 = vmatmul.f32.gmra.mxu0 %v2664
        %v3543 = vpop.f32.mrf.mxu0
        %v3544 = vadd.f32 0.0, %v3543
        %3545 = vmatmul.f32.gmra.mxu0 %v2665
        %v3546 = vpop.f32.mrf.mxu0
        %v3547 = vadd.f32 0.0, %v3546
        %3548 = vmatmul.f32.gmra.mxu0 %v2666
        %v3549 = vpop.f32.mrf.mxu0
        %v3550 = vadd.f32 0.0, %v3549
        %3551 = vmatmul.f32.gmra.mxu0 %v2667
        %v3552 = vpop.f32.mrf.mxu0
        %v3553 = vadd.f32 0.0, %v3552
        %3554 = vmatmul.f32.gmra.mxu0 %v2668
        %v3555 = vpop.f32.mrf.mxu0
        %v3556 = vadd.f32 0.0, %v3555
        %3557 = vmatmul.f32.gmra.mxu0 %v2669
        %v3558 = vpop.f32.mrf.mxu0
        %v3559 = vadd.f32 0.0, %v3558
        %3560 = vmatmul.f32.gmra.mxu0 %v2670
        %v3561 = vpop.f32.mrf.mxu0
        %v3562 = vadd.f32 0.0, %v3561
        %3563 = vmatmul.f32.gmra.mxu0 %v2671
        %v3564 = vpop.f32.mrf.mxu0
        %v3565 = vadd.f32 0.0, %v3564
        %3566 = vmatmul.f32.gmra.mxu0 %v2672
        %v3567 = vpop.f32.mrf.mxu0
        %v3568 = vadd.f32 0.0, %v3567
        %3569 = vmatmul.f32.gmra.mxu0 %v2673
        %v3570 = vpop.f32.mrf.mxu0
        %v3571 = vadd.f32 0.0, %v3570
        %3572 = vmatmul.f32.gmra.mxu0 %v2674
        %v3573 = vpop.f32.mrf.mxu0
        %v3574 = vadd.f32 0.0, %v3573
        %3575 = vmatmul.f32.gmra.mxu0 %v2675
        %v3576 = vpop.f32.mrf.mxu0
        %v3577 = vadd.f32 0.0, %v3576
        %3578 = vmatmul.f32.gmra.mxu0 %v2676
        %v3579 = vpop.f32.mrf.mxu0
        %v3580 = vadd.f32 0.0, %v3579
        %3581 = vmatmul.f32.gmra.mxu0 %v2677
        %v3582 = vpop.f32.mrf.mxu0
        %v3583 = vadd.f32 0.0, %v3582
        %3584 = vmatmul.f32.gmra.mxu0 %v2678
        %v3585 = vpop.f32.mrf.mxu0
        %v3586 = vadd.f32 0.0, %v3585
        %3587 = vmatmul.f32.gmra.mxu0 %v2679
        %v3588 = vpop.f32.mrf.mxu0
        %v3589 = vadd.f32 0.0, %v3588
        %3590 = vmatmul.f32.gmra.mxu0 %v2680
        %v3591 = vpop.f32.mrf.mxu0
        %v3592 = vadd.f32 0.0, %v3591
        %3593 = vmatmul.f32.gmra.mxu0 %v2681
        %v3594 = vpop.f32.mrf.mxu0
        %v3595 = vadd.f32 0.0, %v3594
        %3596 = vmatmul.f32.gmra.mxu0 %v2682
        %v3597 = vpop.f32.mrf.mxu0
        %v3598 = vadd.f32 0.0, %v3597
        %3599 = vmatmul.f32.gmra.mxu0 %v2683
        %v3600 = vpop.f32.mrf.mxu0
        %v3601 = vadd.f32 0.0, %v3600
        %3602 = vmatmul.f32.gmra.mxu0 %v2684
        %v3603 = vpop.f32.mrf.mxu0
        %v3604 = vadd.f32 0.0, %v3603
        %3605 = vmatmul.f32.gmra.mxu0 %v2685
        %v3606 = vpop.f32.mrf.mxu0
        %v3607 = vadd.f32 0.0, %v3606
        %3608 = vmatmul.f32.gmra.mxu0 %v2686
        %v3609 = vpop.f32.mrf.mxu0
        %v3610 = vadd.f32 0.0, %v3609
        %3611 = vmatmul.f32.gmra.mxu0 %v2687
        %v3612 = vpop.f32.mrf.mxu0
        %v3613 = vadd.f32 0.0, %v3612
        %3614 = vmatmul.f32.gmra.mxu0 %v2688
        %v3615 = vpop.f32.mrf.mxu0
        %v3616 = vadd.f32 0.0, %v3615
        %3617 = vmatmul.f32.gmra.mxu0 %v2689
        %v3618 = vpop.f32.mrf.mxu0
        %v3619 = vadd.f32 0.0, %v3618
        %3620 = vmatmul.f32.gmra.mxu0 %v2690
        %v3621 = vpop.f32.mrf.mxu0
        %v3622 = vadd.f32 0.0, %v3621
        %3623 = vmatmul.f32.gmra.mxu0 %v2691
        %v3624 = vpop.f32.mrf.mxu0
        %v3625 = vadd.f32 0.0, %v3624
        %3626 = vmatmul.f32.gmra.mxu0 %v2692
        %v3627 = vpop.f32.mrf.mxu0
        %v3628 = vadd.f32 0.0, %v3627
        %3629 = vmatmul.f32.gmra.mxu0 %v2693
        %v3630 = vpop.f32.mrf.mxu0
        %v3631 = vadd.f32 0.0, %v3630
        %3632 = vmatmul.f32.gmra.mxu0 %v2694
        %v3633 = vpop.f32.mrf.mxu0
        %v3634 = vadd.f32 0.0, %v3633
        %3635 = vmatmul.f32.gmra.mxu0 %v2695
        %v3636 = vpop.f32.mrf.mxu0
        %v3637 = vadd.f32 0.0, %v3636
        %3638 = vmatmul.f32.gmra.mxu0 %v2696
        %v3639 = vpop.f32.mrf.mxu0
        %v3640 = vadd.f32 0.0, %v3639
        %3641 = vmatmul.f32.gmra.mxu0 %v2697
        %v3642 = vpop.f32.mrf.mxu0
        %v3643 = vadd.f32 0.0, %v3642
        %3644 = vmatmul.f32.gmra.mxu0 %v2698
        %v3645 = vpop.f32.mrf.mxu0
        %v3646 = vadd.f32 0.0, %v3645
        %3647 = vmatmul.f32.gmra.mxu0 %v2699
        %v3648 = vpop.f32.mrf.mxu0
        %v3649 = vadd.f32 0.0, %v3648
        %3650 = vmatmul.f32.gmra.mxu0 %v2700
        %v3651 = vpop.f32.mrf.mxu0
        %v3652 = vadd.f32 0.0, %v3651
        %3653 = vmatmul.f32.gmra.mxu0 %v2701
        %v3654 = vpop.f32.mrf.mxu0
        %v3655 = vadd.f32 0.0, %v3654
        %3656 = vmatmul.f32.gmra.mxu0 %v2702
        %v3657 = vpop.f32.mrf.mxu0
        %v3658 = vadd.f32 0.0, %v3657
        %3659 = vmatmul.f32.gmra.mxu0 %v2703
        %v3660 = vpop.f32.mrf.mxu0
        %v3661 = vadd.f32 0.0, %v3660
        %3662 = vmatmul.f32.gmra.mxu0 %v2704
        %v3663 = vpop.f32.mrf.mxu0
        %v3664 = vadd.f32 0.0, %v3663
        %3665 = vmatmul.f32.gmra.mxu0 %v2705
        %v3666 = vpop.f32.mrf.mxu0
        %v3667 = vadd.f32 0.0, %v3666
        %3668 = vmatmul.f32.gmra.mxu0 %v2706
        %v3669 = vpop.f32.mrf.mxu0
        %v3670 = vadd.f32 0.0, %v3669
        %3671 = vmatmul.f32.gmra.mxu0 %v2707
        %v3672 = vpop.f32.mrf.mxu0
        %v3673 = vadd.f32 0.0, %v3672
        %3674 = vmatmul.f32.gmra.mxu0 %v2708
        %v3675 = vpop.f32.mrf.mxu0
        %v3676 = vadd.f32 0.0, %v3675
        %3677 = vmatmul.f32.gmra.mxu0 %v2709
        %v3678 = vpop.f32.mrf.mxu0
        %v3679 = vadd.f32 0.0, %v3678
        %3680 = vmatmul.f32.gmra.mxu0 %v2710
        %v3681 = vpop.f32.mrf.mxu0
        %v3682 = vadd.f32 0.0, %v3681
        %3683 = vmatmul.f32.gmra.mxu0 %v2711
        %v3684 = vpop.f32.mrf.mxu0
        %v3685 = vadd.f32 0.0, %v3684
        %3686 = vmatmul.f32.gmra.mxu0 %v2712
        %v3687 = vpop.f32.mrf.mxu0
        %v3688 = vadd.f32 0.0, %v3687
        %3689 = vmatmul.f32.gmra.mxu0 %v2713
        %v3690 = vpop.f32.mrf.mxu0
        %v3691 = vadd.f32 0.0, %v3690
        %3692 = vmatmul.f32.gmra.mxu0 %v2714
        %v3693 = vpop.f32.mrf.mxu0
        %v3694 = vadd.f32 0.0, %v3693
        %3695 = vmatmul.f32.gmra.mxu0 %v2715
        %v3696 = vpop.f32.mrf.mxu0
        %v3697 = vadd.f32 0.0, %v3696
        %3698 = vmatmul.f32.gmra.mxu0 %v2716
        %v3699 = vpop.f32.mrf.mxu0
        %v3700 = vadd.f32 0.0, %v3699
        %3701 = vmatmul.f32.gmra.mxu0 %v2717
        %v3702 = vpop.f32.mrf.mxu0
        %v3703 = vadd.f32 0.0, %v3702
        %3704 = vmatmul.f32.gmra.mxu0 %v2718
        %v3705 = vpop.f32.mrf.mxu0
        %v3706 = vadd.f32 0.0, %v3705
        %3707 = vmatmul.f32.gmra.mxu0 %v2719
        %v3708 = vpop.f32.mrf.mxu0
        %v3709 = vadd.f32 0.0, %v3708
        %3710 = vmatmul.f32.gmra.mxu0 %v2720
        %v3711 = vpop.f32.mrf.mxu0
        %v3712 = vadd.f32 0.0, %v3711
        %3713 = vmatmul.f32.gmra.mxu0 %v2721
        %v3714 = vpop.f32.mrf.mxu0
        %v3715 = vadd.f32 0.0, %v3714
        %3716 = vmatmul.f32.gmra.mxu0 %v2722
        %v3717 = vpop.f32.mrf.mxu0
        %v3718 = vadd.f32 0.0, %v3717
        %3719 = vmatmul.f32.gmra.mxu0 %v2723
        %v3720 = vpop.f32.mrf.mxu0
        %v3721 = vadd.f32 0.0, %v3720
        %3722 = vmatmul.f32.gmra.mxu0 %v2724
        %v3723 = vpop.f32.mrf.mxu0
        %v3724 = vadd.f32 0.0, %v3723
        %3725 = vmatmul.f32.gmra.mxu0 %v2725
        %v3726 = vpop.f32.mrf.mxu0
        %v3727 = vadd.f32 0.0, %v3726
        %3728 = vmatmul.f32.gmra.mxu0 %v2726
        %v3729 = vpop.f32.mrf.mxu0
        %v3730 = vadd.f32 0.0, %v3729
        %3731 = vmatmul.f32.gmra.mxu0 %v2727
        %v3732 = vpop.f32.mrf.mxu0
        %v3733 = vadd.f32 0.0, %v3732
        %3734 = vmatmul.f32.gmra.mxu0 %v2728
        %v3735 = vpop.f32.mrf.mxu0
        %v3736 = vadd.f32 0.0, %v3735
        %3737 = vmatmul.f32.gmra.mxu0 %v2729
        %v3738 = vpop.f32.mrf.mxu0
        %v3739 = vadd.f32 0.0, %v3738
        %3740 = vmatmul.f32.gmra.mxu0 %v2730
        %v3741 = vpop.f32.mrf.mxu0
        %v3742 = vadd.f32 0.0, %v3741
        %3743 = vmatmul.f32.gmra.mxu0 %v2731
        %v3744 = vpop.f32.mrf.mxu0
        %v3745 = vadd.f32 0.0, %v3744
        %3746 = vmatmul.f32.gmra.mxu0 %v2732
        %v3747 = vpop.f32.mrf.mxu0
        %v3748 = vadd.f32 0.0, %v3747
        %3749 = vmatmul.f32.gmra.mxu0 %v2733
        %v3750 = vpop.f32.mrf.mxu0
        %v3751 = vadd.f32 0.0, %v3750
        %3752 = vmatmul.f32.gmra.mxu0 %v2734
        %v3753 = vpop.f32.mrf.mxu0
        %v3754 = vadd.f32 0.0, %v3753
        %3755 = vmatmul.f32.gmra.mxu0 %v2735
        %v3756 = vpop.f32.mrf.mxu0
        %v3757 = vadd.f32 0.0, %v3756
        %3758 = vmatmul.f32.gmra.mxu0 %v2736
        %v3759 = vpop.f32.mrf.mxu0
        %v3760 = vadd.f32 0.0, %v3759
        %3761 = vmatmul.f32.gmra.mxu0 %v2737
        %v3762 = vpop.f32.mrf.mxu0
        %v3763 = vadd.f32 0.0, %v3762
        %3764 = vmatmul.f32.gmra.mxu0 %v2738
        %v3765 = vpop.f32.mrf.mxu0
        %v3766 = vadd.f32 0.0, %v3765
        %3767 = vmatmul.f32.gmra.mxu0 %v2739
        %v3768 = vpop.f32.mrf.mxu0
        %v3769 = vadd.f32 0.0, %v3768
        %3770 = vmatmul.f32.gmra.mxu0 %v2740
        %v3771 = vpop.f32.mrf.mxu0
        %v3772 = vadd.f32 0.0, %v3771
        %3773 = vmatmul.f32.gmra.mxu0 %v2741
        %v3774 = vpop.f32.mrf.mxu0
        %v3775 = vadd.f32 0.0, %v3774
        %3776 = vmatmul.f32.gmra.mxu0 %v2742
        %v3777 = vpop.f32.mrf.mxu0
        %v3778 = vadd.f32 0.0, %v3777
        %3779 = vmatmul.f32.gmra.mxu0 %v2743
        %v3780 = vpop.f32.mrf.mxu0
        %v3781 = vadd.f32 0.0, %v3780
        %3782 = vmatmul.f32.gmra.mxu0 %v2744
        %v3783 = vpop.f32.mrf.mxu0
        %v3784 = vadd.f32 0.0, %v3783
        %3785 = vmatmul.f32.gmra.mxu0 %v2745
        %v3786 = vpop.f32.mrf.mxu0
        %v3787 = vadd.f32 0.0, %v3786
        %3788 = vmatmul.f32.gmra.mxu0 %v2746
        %v3789 = vpop.f32.mrf.mxu0
        %v3790 = vadd.f32 0.0, %v3789
        %3791 = vmatmul.f32.gmra.mxu0 %v2747
        %v3792 = vpop.f32.mrf.mxu0
        %v3793 = vadd.f32 0.0, %v3792
        %3794 = vmatmul.f32.gmra.mxu0 %v2748
        %v3795 = vpop.f32.mrf.mxu0
        %v3796 = vadd.f32 0.0, %v3795
        %3797 = vmatmul.f32.gmra.mxu0 %v2749
        %v3798 = vpop.f32.mrf.mxu0
        %v3799 = vadd.f32 0.0, %v3798
        %3800 = vmatmul.f32.gmra.mxu0 %v2750
        %v3801 = vpop.f32.mrf.mxu0
        %v3802 = vadd.f32 0.0, %v3801
        %3803 = vmatmul.f32.gmra.mxu0 %v2751
        %v3804 = vpop.f32.mrf.mxu0
        %v3805 = vadd.f32 0.0, %v3804
        %3806 = vmatmul.f32.gmra.mxu0 %v2752
        %v3807 = vpop.f32.mrf.mxu0
        %v3808 = vadd.f32 0.0, %v3807
        %3809 = vmatmul.f32.gmra.mxu0 %v2753
        %v3810 = vpop.f32.mrf.mxu0
        %v3811 = vadd.f32 0.0, %v3810
        %3812 = vmatmul.f32.gmra.mxu0 %v2754
        %v3813 = vpop.f32.mrf.mxu0
        %v3814 = vadd.f32 0.0, %v3813
        %3815 = vmatmul.f32.gmra.mxu0 %v2755
        %v3816 = vpop.f32.mrf.mxu0
        %v3817 = vadd.f32 0.0, %v3816
        %3818 = vmatmul.f32.gmra.mxu0 %v2756
        %v3819 = vpop.f32.mrf.mxu0
        %v3820 = vadd.f32 0.0, %v3819
        %3821 = vmatmul.f32.gmra.mxu0 %v2757
        %v3822 = vpop.f32.mrf.mxu0
        %v3823 = vadd.f32 0.0, %v3822
        %3824 = vmatmul.f32.gmra.mxu0 %v2758
        %v3825 = vpop.f32.mrf.mxu0
        %v3826 = vadd.f32 0.0, %v3825
        %3827 = vmatmul.f32.gmra.mxu0 %v2759
        %v3828 = vpop.f32.mrf.mxu0
        %v3829 = vadd.f32 0.0, %v3828
        %3830 = vmatmul.f32.gmra.mxu0 %v2760
        %v3831 = vpop.f32.mrf.mxu0
        %v3832 = vadd.f32 0.0, %v3831
        %3833 = vmatmul.f32.gmra.mxu0 %v2761
        %v3834 = vpop.f32.mrf.mxu0
        %v3835 = vadd.f32 0.0, %v3834
        %3836 = vmatmul.f32.gmra.mxu0 %v2762
        %v3837 = vpop.f32.mrf.mxu0
        %v3838 = vadd.f32 0.0, %v3837
        %3839 = vmatmul.f32.gmra.mxu0 %v2763
        %v3840 = vpop.f32.mrf.mxu0
        %v3841 = vadd.f32 0.0, %v3840
        %3842 = vmatmul.f32.gmra.mxu0 %v2764
        %v3843 = vpop.f32.mrf.mxu0
        %v3844 = vadd.f32 0.0, %v3843
        %3845 = vmatmul.f32.gmra.mxu0 %v2765
        %v3846 = vpop.f32.mrf.mxu0
        %v3847 = vadd.f32 0.0, %v3846
        %3848 = vmatmul.f32.gmra.mxu0 %v2766
        %v3849 = vpop.f32.mrf.mxu0
        %v3850 = vadd.f32 0.0, %v3849
        %3851 = vmatmul.f32.gmra.mxu0 %v2767
        %v3852 = vpop.f32.mrf.mxu0
        %v3853 = vadd.f32 0.0, %v3852
        %3854 = vmatmul.f32.gmra.mxu0 %v2768
        %v3855 = vpop.f32.mrf.mxu0
        %v3856 = vadd.f32 0.0, %v3855
        %3857 = vmatmul.f32.gmra.mxu0 %v2769
        %v3858 = vpop.f32.mrf.mxu0
        %v3859 = vadd.f32 0.0, %v3858
        %3860 = vmatmul.f32.gmra.mxu0 %v2770
        %v3861 = vpop.f32.mrf.mxu0
        %v3862 = vadd.f32 0.0, %v3861
        %3863 = vmatmul.f32.gmra.mxu0 %v2771
        %v3864 = vpop.f32.mrf.mxu0
        %v3865 = vadd.f32 0.0, %v3864
        %3866 = vmatmul.f32.gmra.mxu0 %v2772
        %v3867 = vpop.f32.mrf.mxu0
        %v3868 = vadd.f32 0.0, %v3867
        %3869 = vmatmul.f32.gmra.mxu0 %v2773
        %v3870 = vpop.f32.mrf.mxu0
        %v3871 = vadd.f32 0.0, %v3870
        %3872 = vmatmul.f32.gmra.mxu0 %v2774
        %v3873 = vpop.f32.mrf.mxu0
        %v3874 = vadd.f32 0.0, %v3873
        %3875 = vmatmul.f32.gmra.mxu0 %v2775
        %v3876 = vpop.f32.mrf.mxu0
        %v3877 = vadd.f32 0.0, %v3876
        %3878 = vmatmul.f32.gmra.mxu0 %v2776
        %v3879 = vpop.f32.mrf.mxu0
        %v3880 = vadd.f32 0.0, %v3879
        %3881 = vmatmul.f32.gmra.mxu0 %v2777
        %v3882 = vpop.f32.mrf.mxu0
        %v3883 = vadd.f32 0.0, %v3882
        %3884 = vmatmul.f32.gmra.mxu0 %v2778
        %v3885 = vpop.f32.mrf.mxu0
        %v3886 = vadd.f32 0.0, %v3885
        %3887 = vmatmul.f32.gmra.mxu0 %v2779
        %v3888 = vpop.f32.mrf.mxu0
        %v3889 = vadd.f32 0.0, %v3888
        %3890 = vmatmul.f32.gmra.mxu0 %v2780
        %v3891 = vpop.f32.mrf.mxu0
        %v3892 = vadd.f32 0.0, %v3891
        %3893 = vmatmul.f32.gmra.mxu0 %v2781
        %v3894 = vpop.f32.mrf.mxu0
        %v3895 = vadd.f32 0.0, %v3894
        %3896 = vmatmul.f32.gmra.mxu0 %v2782
        %v3897 = vpop.f32.mrf.mxu0
        %v3898 = vadd.f32 0.0, %v3897
        %3899 = vmatmul.f32.gmra.mxu0 %v2783
        %v3900 = vpop.f32.mrf.mxu0
        %v3901 = vadd.f32 0.0, %v3900
        %3902 = vmatmul.f32.gmra.mxu0 %v2784
        %v3903 = vpop.f32.mrf.mxu0
        %v3904 = vadd.f32 0.0, %v3903
        %3905 = vmatmul.f32.gmra.mxu0 %v2785
        %v3906 = vpop.f32.mrf.mxu0
        %v3907 = vadd.f32 0.0, %v3906
        %3908 = vmatmul.f32.gmra.mxu0 %v2786
        %v3909 = vpop.f32.mrf.mxu0
        %v3910 = vadd.f32 0.0, %v3909
        %3911 = vmatmul.f32.gmra.mxu0 %v2787
        %v3912 = vpop.f32.mrf.mxu0
        %v3913 = vadd.f32 0.0, %v3912
        %3914 = vmatmul.f32.gmra.mxu0 %v2788
        %v3915 = vpop.f32.mrf.mxu0
        %v3916 = vadd.f32 0.0, %v3915
        %3917 = vmatmul.f32.gmra.mxu0 %v2789
        %v3918 = vpop.f32.mrf.mxu0
        %v3919 = vadd.f32 0.0, %v3918
        %3920 = vmatmul.f32.gmra.mxu0 %v2790
        %v3921 = vpop.f32.mrf.mxu0
        %v3922 = vadd.f32 0.0, %v3921
        %3923 = vmatmul.f32.gmra.mxu0 %v2791
        %v3924 = vpop.f32.mrf.mxu0
        %v3925 = vadd.f32 0.0, %v3924
        %3926 = vmatmul.f32.gmra.mxu0 %v2792
        %v3927 = vpop.f32.mrf.mxu0
        %v3928 = vadd.f32 0.0, %v3927
        %3929 = vmatmul.f32.gmra.mxu0 %v2793
        %v3930 = vpop.f32.mrf.mxu0
        %v3931 = vadd.f32 0.0, %v3930
        %3932 = vmatmul.f32.gmra.mxu0 %v2794
        %v3933 = vpop.f32.mrf.mxu0
        %v3934 = vadd.f32 0.0, %v3933
        %3935 = vmatmul.f32.gmra.mxu0 %v2795
        %v3936 = vpop.f32.mrf.mxu0
        %v3937 = vadd.f32 0.0, %v3936
        %3938 = vmatmul.f32.gmra.mxu0 %v2796
        %v3939 = vpop.f32.mrf.mxu0
        %v3940 = vadd.f32 0.0, %v3939
        %3941 = vmatmul.f32.gmra.mxu0 %v2797
        %v3942 = vpop.f32.mrf.mxu0
        %v3943 = vadd.f32 0.0, %v3942
        %3944 = vmatmul.f32.gmra.mxu0 %v2798
        %v3945 = vpop.f32.mrf.mxu0
        %v3946 = vadd.f32 0.0, %v3945
        %3947 = vmatmul.f32.gmra.mxu0 %v2799
        %v3948 = vpop.f32.mrf.mxu0
        %v3949 = vadd.f32 0.0, %v3948
        %3950 = vmatmul.f32.gmra.mxu0 %v2800
        %v3951 = vpop.f32.mrf.mxu0
        %v3952 = vadd.f32 0.0, %v3951
        %3953 = vmatmul.f32.gmra.mxu0 %v2801
        %v3954 = vpop.f32.mrf.mxu0
        %v3955 = vadd.f32 0.0, %v3954
        %3956 = vmatmul.f32.gmra.mxu0 %v2802
        %v3957 = vpop.f32.mrf.mxu0
        %v3958 = vadd.f32 0.0, %v3957
        %3959 = vmatmul.f32.gmra.mxu0 %v2803
        %v3960 = vpop.f32.mrf.mxu0
        %v3961 = vadd.f32 0.0, %v3960
        %3962 = vmatmul.f32.gmra.mxu0 %v2804
        %v3963 = vpop.f32.mrf.mxu0
        %v3964 = vadd.f32 0.0, %v3963
        %3965 = vmatmul.f32.gmra.mxu0 %v2805
        %v3966 = vpop.f32.mrf.mxu0
        %v3967 = vadd.f32 0.0, %v3966
        %3968 = vmatmul.f32.gmra.mxu0 %v2806
        %v3969 = vpop.f32.mrf.mxu0
        %v3970 = vadd.f32 0.0, %v3969
        %3971 = vmatmul.f32.gmra.mxu0 %v2807
        %v3972 = vpop.f32.mrf.mxu0
        %v3973 = vadd.f32 0.0, %v3972
        %3974 = vmatmul.f32.gmra.mxu0 %v2808
        %v3975 = vpop.f32.mrf.mxu0
        %v3976 = vadd.f32 0.0, %v3975
        %3977 = vmatmul.f32.gmra.mxu0 %v2809
        %v3978 = vpop.f32.mrf.mxu0
        %v3979 = vadd.f32 0.0, %v3978
        %3980 = vmatmul.f32.gmra.mxu0 %v2810
        %v3981 = vpop.f32.mrf.mxu0
        %v3982 = vadd.f32 0.0, %v3981
        %3983 = vmatmul.f32.gmra.mxu0 %v2811
        %v3984 = vpop.f32.mrf.mxu0
        %v3985 = vadd.f32 0.0, %v3984
        %3986 = vmatmul.f32.gmra.mxu0 %v2812
        %v3987 = vpop.f32.mrf.mxu0
        %v3988 = vadd.f32 0.0, %v3987
        %3989 = vmatmul.f32.gmra.mxu0 %v2813
        %v3990 = vpop.f32.mrf.mxu0
        %v3991 = vadd.f32 0.0, %v3990
        %3992 = vmatmul.f32.gmra.mxu0 %v2814
        %v3993 = vpop.f32.mrf.mxu0
        %v3994 = vadd.f32 0.0, %v3993
        %3995 = vmatmul.f32.gmra.mxu0 %v2815
        %v3996 = vpop.f32.mrf.mxu0
        %v3997 = vadd.f32 0.0, %v3996
        %3998 = vmatmul.f32.gmra.mxu0 %v2816
        %v3999 = vpop.f32.mrf.mxu0
        %v4000 = vadd.f32 0.0, %v3999
        %4001 = vmatmul.f32.gmra.mxu0 %v2817
        %v4002 = vpop.f32.mrf.mxu0
        %v4003 = vadd.f32 0.0, %v4002
        %4004 = vmatmul.f32.gmra.mxu0 %v2818
        %v4005 = vpop.f32.mrf.mxu0
        %v4006 = vadd.f32 0.0, %v4005
        %4007 = vmatmul.f32.gmra.mxu0 %v2819
        %v4008 = vpop.f32.mrf.mxu0
        %v4009 = vadd.f32 0.0, %v4008
        %4010 = vmatmul.f32.gmra.mxu0 %v2820
        %v4011 = vpop.f32.mrf.mxu0
        %v4012 = vadd.f32 0.0, %v4011
        %4013 = vmatmul.f32.gmra.mxu0 %v2821
        %v4014 = vpop.f32.mrf.mxu0
        %v4015 = vadd.f32 0.0, %v4014
        %4016 = vmatmul.f32.gmra.mxu0 %v2822
        %v4017 = vpop.f32.mrf.mxu0
        %v4018 = vadd.f32 0.0, %v4017
        %4019 = vmatmul.f32.gmra.mxu0 %v2823
        %v4020 = vpop.f32.mrf.mxu0
        %v4021 = vadd.f32 0.0, %v4020
        %4022 = vmatmul.f32.gmra.mxu0 %v2824
        %v4023 = vpop.f32.mrf.mxu0
        %v4024 = vadd.f32 0.0, %v4023
        %4025 = vmatmul.f32.gmra.mxu0 %v2825
        %v4026 = vpop.f32.mrf.mxu0
        %v4027 = vadd.f32 0.0, %v4026
        %4028 = vmatmul.f32.gmra.mxu0 %v2826
        %v4029 = vpop.f32.mrf.mxu0
        %v4030 = vadd.f32 0.0, %v4029
        %4031 = vmatmul.f32.gmra.mxu0 %v2827
        %v4032 = vpop.f32.mrf.mxu0
        %v4033 = vadd.f32 0.0, %v4032
        %4034 = vmatmul.f32.gmra.mxu0 %v2828
        %v4035 = vpop.f32.mrf.mxu0
        %v4036 = vadd.f32 0.0, %v4035
        %4037 = vmatmul.f32.gmra.mxu0 %v2829
        %v4038 = vpop.f32.mrf.mxu0
        %v4039 = vadd.f32 0.0, %v4038
        %4040 = vmatmul.f32.gmra.mxu0 %v2830
        %v4041 = vpop.f32.mrf.mxu0
        %v4042 = vadd.f32 0.0, %v4041
        %4043 = vmatmul.f32.gmra.mxu0 %v2831
        %v4044 = vpop.f32.mrf.mxu0
        %v4045 = vadd.f32 0.0, %v4044
        %4046 = vmatmul.f32.gmra.mxu0 %v2832
        %v4047 = vpop.f32.mrf.mxu0
        %v4048 = vadd.f32 0.0, %v4047
        %4049 = vdwg.mxu0
        %4050 = vmatpush.msra.mxu0 0.0
        %4051 = vmatpush.msra.mxu0 0.0
        %4052 = vmatpush.msra.mxu0 0.0
        %4053 = vmatpush.msra.mxu0 0.0
        %4054 = vmatpush.msra.mxu0 0.0
        %4055 = vmatpush.msra.mxu0 0.0
        %4056 = vmatpush.msra.mxu0 0.0
        %4057 = vmatpush.msra.mxu0 0.0
        %4058 = vmatpush.msra.mxu0 %v2856
        %4059 = vmatpush.msra.mxu0 %v2855
        %4060 = vmatpush.msra.mxu0 %v2854
        %4061 = vmatpush.msra.mxu0 %v2853
        %4062 = vmatpush.msra.mxu0 %v2852
        %4063 = vmatpush.msra.mxu0 %v2851
        %4064 = vmatpush.msra.mxu0 %v2850
        %4065 = vmatpush.msra.mxu0 %v2849
        %4066 = vmatmul.f32.gmra.mxu0 %v2858
        %v4067 = vpop.f32.mrf.mxu0
        %v4068 = vadd.f32 %v3463, %v4067
        %4069 = vmatmul.f32.gmra.mxu0 %v2861
        %v4070 = vpop.f32.mrf.mxu0
        %v4071 = vadd.f32 %v3466, %v4070
        %4072 = vmatmul.f32.gmra.mxu0 %v2864
        %v4073 = vpop.f32.mrf.mxu0
        %v4074 = vadd.f32 %v3469, %v4073
        %4075 = vmatmul.f32.gmra.mxu0 %v2867
        %v4076 = vpop.f32.mrf.mxu0
        %v4077 = vadd.f32 %v3472, %v4076
        %4078 = vmatmul.f32.gmra.mxu0 %v2870
        %v4079 = vpop.f32.mrf.mxu0
        %v4080 = vadd.f32 %v3475, %v4079
        %4081 = vmatmul.f32.gmra.mxu0 %v2873
        %v4082 = vpop.f32.mrf.mxu0
        %v4083 = vadd.f32 %v3478, %v4082
        %4084 = vmatmul.f32.gmra.mxu0 %v2876
        %v4085 = vpop.f32.mrf.mxu0
        %v4086 = vadd.f32 %v3481, %v4085
        %4087 = vmatmul.f32.gmra.mxu0 %v2879
        %v4088 = vpop.f32.mrf.mxu0
        %v4089 = vadd.f32 %v3484, %v4088
        %4090 = vmatmul.f32.gmra.mxu0 %v2882
        %v4091 = vpop.f32.mrf.mxu0
        %v4092 = vadd.f32 %v3487, %v4091
        %4093 = vmatmul.f32.gmra.mxu0 %v2885
        %v4094 = vpop.f32.mrf.mxu0
        %v4095 = vadd.f32 %v3490, %v4094
        %4096 = vmatmul.f32.gmra.mxu0 %v2888
        %v4097 = vpop.f32.mrf.mxu0
        %v4098 = vadd.f32 %v3493, %v4097
        %4099 = vmatmul.f32.gmra.mxu0 %v2891
        %v4100 = vpop.f32.mrf.mxu0
        %v4101 = vadd.f32 %v3496, %v4100
        %4102 = vmatmul.f32.gmra.mxu0 %v2894
        %v4103 = vpop.f32.mrf.mxu0
        %v4104 = vadd.f32 %v3499, %v4103
        %4105 = vmatmul.f32.gmra.mxu0 %v2897
        %v4106 = vpop.f32.mrf.mxu0
        %v4107 = vadd.f32 %v3502, %v4106
        %4108 = vmatmul.f32.gmra.mxu0 %v2900
        %v4109 = vpop.f32.mrf.mxu0
        %v4110 = vadd.f32 %v3505, %v4109
        %4111 = vmatmul.f32.gmra.mxu0 %v2903
        %v4112 = vpop.f32.mrf.mxu0
        %v4113 = vadd.f32 %v3508, %v4112
        %4114 = vmatmul.f32.gmra.mxu0 %v2906
        %v4115 = vpop.f32.mrf.mxu0
        %v4116 = vadd.f32 %v3511, %v4115
        %4117 = vmatmul.f32.gmra.mxu0 %v2909
        %v4118 = vpop.f32.mrf.mxu0
        %v4119 = vadd.f32 %v3514, %v4118
        %4120 = vmatmul.f32.gmra.mxu0 %v2912
        %v4121 = vpop.f32.mrf.mxu0
        %v4122 = vadd.f32 %v3517, %v4121
        %4123 = vmatmul.f32.gmra.mxu0 %v2915
        %v4124 = vpop.f32.mrf.mxu0
        %v4125 = vadd.f32 %v3520, %v4124
        %4126 = vmatmul.f32.gmra.mxu0 %v2918
        %v4127 = vpop.f32.mrf.mxu0
        %v4128 = vadd.f32 %v3523, %v4127
        %4129 = vmatmul.f32.gmra.mxu0 %v2921
        %v4130 = vpop.f32.mrf.mxu0
        %v4131 = vadd.f32 %v3526, %v4130
        %4132 = vmatmul.f32.gmra.mxu0 %v2924
        %v4133 = vpop.f32.mrf.mxu0
        %v4134 = vadd.f32 %v3529, %v4133
        %4135 = vmatmul.f32.gmra.mxu0 %v2927
        %v4136 = vpop.f32.mrf.mxu0
        %v4137 = vadd.f32 %v3532, %v4136
        %4138 = vmatmul.f32.gmra.mxu0 %v2930
        %v4139 = vpop.f32.mrf.mxu0
        %v4140 = vadd.f32 %v3535, %v4139
        %4141 = vmatmul.f32.gmra.mxu0 %v2933
        %v4142 = vpop.f32.mrf.mxu0
        %v4143 = vadd.f32 %v3538, %v4142
        %4144 = vmatmul.f32.gmra.mxu0 %v2936
        %v4145 = vpop.f32.mrf.mxu0
        %v4146 = vadd.f32 %v3541, %v4145
        %4147 = vmatmul.f32.gmra.mxu0 %v2939
        %v4148 = vpop.f32.mrf.mxu0
        %v4149 = vadd.f32 %v3544, %v4148
        %4150 = vmatmul.f32.gmra.mxu0 %v2942
        %v4151 = vpop.f32.mrf.mxu0
        %v4152 = vadd.f32 %v3547, %v4151
        %4153 = vmatmul.f32.gmra.mxu0 %v2945
        %v4154 = vpop.f32.mrf.mxu0
        %v4155 = vadd.f32 %v3550, %v4154
        %4156 = vmatmul.f32.gmra.mxu0 %v2948
        %v4157 = vpop.f32.mrf.mxu0
        %v4158 = vadd.f32 %v3553, %v4157
        %4159 = vmatmul.f32.gmra.mxu0 %v2951
        %v4160 = vpop.f32.mrf.mxu0
        %v4161 = vadd.f32 %v3556, %v4160
        %4162 = vmatmul.f32.gmra.mxu0 %v2954
        %v4163 = vpop.f32.mrf.mxu0
        %v4164 = vadd.f32 %v3559, %v4163
        %4165 = vmatmul.f32.gmra.mxu0 %v2957
        %v4166 = vpop.f32.mrf.mxu0
        %v4167 = vadd.f32 %v3562, %v4166
        %4168 = vmatmul.f32.gmra.mxu0 %v2960
        %v4169 = vpop.f32.mrf.mxu0
        %v4170 = vadd.f32 %v3565, %v4169
        %4171 = vmatmul.f32.gmra.mxu0 %v2963
        %v4172 = vpop.f32.mrf.mxu0
        %v4173 = vadd.f32 %v3568, %v4172
        %4174 = vmatmul.f32.gmra.mxu0 %v2966
        %v4175 = vpop.f32.mrf.mxu0
        %v4176 = vadd.f32 %v3571, %v4175
        %4177 = vmatmul.f32.gmra.mxu0 %v2969
        %v4178 = vpop.f32.mrf.mxu0
        %v4179 = vadd.f32 %v3574, %v4178
        %4180 = vmatmul.f32.gmra.mxu0 %v2972
        %v4181 = vpop.f32.mrf.mxu0
        %v4182 = vadd.f32 %v3577, %v4181
        %4183 = vmatmul.f32.gmra.mxu0 %v2975
        %v4184 = vpop.f32.mrf.mxu0
        %v4185 = vadd.f32 %v3580, %v4184
        %4186 = vmatmul.f32.gmra.mxu0 %v2978
        %v4187 = vpop.f32.mrf.mxu0
        %v4188 = vadd.f32 %v3583, %v4187
        %4189 = vmatmul.f32.gmra.mxu0 %v2981
        %v4190 = vpop.f32.mrf.mxu0
        %v4191 = vadd.f32 %v3586, %v4190
        %4192 = vmatmul.f32.gmra.mxu0 %v2984
        %v4193 = vpop.f32.mrf.mxu0
        %v4194 = vadd.f32 %v3589, %v4193
        %4195 = vmatmul.f32.gmra.mxu0 %v2987
        %v4196 = vpop.f32.mrf.mxu0
        %v4197 = vadd.f32 %v3592, %v4196
        %4198 = vmatmul.f32.gmra.mxu0 %v2990
        %v4199 = vpop.f32.mrf.mxu0
        %v4200 = vadd.f32 %v3595, %v4199
        %4201 = vmatmul.f32.gmra.mxu0 %v2993
        %v4202 = vpop.f32.mrf.mxu0
        %v4203 = vadd.f32 %v3598, %v4202
        %4204 = vmatmul.f32.gmra.mxu0 %v2996
        %v4205 = vpop.f32.mrf.mxu0
        %v4206 = vadd.f32 %v3601, %v4205
        %4207 = vmatmul.f32.gmra.mxu0 %v2999
        %v4208 = vpop.f32.mrf.mxu0
        %v4209 = vadd.f32 %v3604, %v4208
        %4210 = vmatmul.f32.gmra.mxu0 %v3002
        %v4211 = vpop.f32.mrf.mxu0
        %v4212 = vadd.f32 %v3607, %v4211
        %4213 = vmatmul.f32.gmra.mxu0 %v3005
        %v4214 = vpop.f32.mrf.mxu0
        %v4215 = vadd.f32 %v3610, %v4214
        %4216 = vmatmul.f32.gmra.mxu0 %v3008
        %v4217 = vpop.f32.mrf.mxu0
        %v4218 = vadd.f32 %v3613, %v4217
        %4219 = vmatmul.f32.gmra.mxu0 %v3011
        %v4220 = vpop.f32.mrf.mxu0
        %v4221 = vadd.f32 %v3616, %v4220
        %4222 = vmatmul.f32.gmra.mxu0 %v3014
        %v4223 = vpop.f32.mrf.mxu0
        %v4224 = vadd.f32 %v3619, %v4223
        %4225 = vmatmul.f32.gmra.mxu0 %v3017
        %v4226 = vpop.f32.mrf.mxu0
        %v4227 = vadd.f32 %v3622, %v4226
        %4228 = vmatmul.f32.gmra.mxu0 %v3020
        %v4229 = vpop.f32.mrf.mxu0
        %v4230 = vadd.f32 %v3625, %v4229
        %4231 = vmatmul.f32.gmra.mxu0 %v3023
        %v4232 = vpop.f32.mrf.mxu0
        %v4233 = vadd.f32 %v3628, %v4232
        %4234 = vmatmul.f32.gmra.mxu0 %v3026
        %v4235 = vpop.f32.mrf.mxu0
        %v4236 = vadd.f32 %v3631, %v4235
        %4237 = vmatmul.f32.gmra.mxu0 %v3029
        %v4238 = vpop.f32.mrf.mxu0
        %v4239 = vadd.f32 %v3634, %v4238
        %4240 = vmatmul.f32.gmra.mxu0 %v3032
        %v4241 = vpop.f32.mrf.mxu0
        %v4242 = vadd.f32 %v3637, %v4241
        %4243 = vmatmul.f32.gmra.mxu0 %v3035
        %v4244 = vpop.f32.mrf.mxu0
        %v4245 = vadd.f32 %v3640, %v4244
        %4246 = vmatmul.f32.gmra.mxu0 %v3038
        %v4247 = vpop.f32.mrf.mxu0
        %v4248 = vadd.f32 %v3643, %v4247
        %4249 = vmatmul.f32.gmra.mxu0 %v3041
        %v4250 = vpop.f32.mrf.mxu0
        %v4251 = vadd.f32 %v3646, %v4250
        %4252 = vmatmul.f32.gmra.mxu0 %v3044
        %v4253 = vpop.f32.mrf.mxu0
        %v4254 = vadd.f32 %v3649, %v4253
        %4255 = vmatmul.f32.gmra.mxu0 %v3047
        %v4256 = vpop.f32.mrf.mxu0
        %v4257 = vadd.f32 %v3652, %v4256
        %4258 = vmatmul.f32.gmra.mxu0 %v3050
        %v4259 = vpop.f32.mrf.mxu0
        %v4260 = vadd.f32 %v3655, %v4259
        %4261 = vmatmul.f32.gmra.mxu0 %v3053
        %v4262 = vpop.f32.mrf.mxu0
        %v4263 = vadd.f32 %v3658, %v4262
        %4264 = vmatmul.f32.gmra.mxu0 %v3056
        %v4265 = vpop.f32.mrf.mxu0
        %v4266 = vadd.f32 %v3661, %v4265
        %4267 = vmatmul.f32.gmra.mxu0 %v3059
        %v4268 = vpop.f32.mrf.mxu0
        %v4269 = vadd.f32 %v3664, %v4268
        %4270 = vmatmul.f32.gmra.mxu0 %v3062
        %v4271 = vpop.f32.mrf.mxu0
        %v4272 = vadd.f32 %v3667, %v4271
        %4273 = vmatmul.f32.gmra.mxu0 %v3065
        %v4274 = vpop.f32.mrf.mxu0
        %v4275 = vadd.f32 %v3670, %v4274
        %4276 = vmatmul.f32.gmra.mxu0 %v3068
        %v4277 = vpop.f32.mrf.mxu0
        %v4278 = vadd.f32 %v3673, %v4277
        %4279 = vmatmul.f32.gmra.mxu0 %v3071
        %v4280 = vpop.f32.mrf.mxu0
        %v4281 = vadd.f32 %v3676, %v4280
        %4282 = vmatmul.f32.gmra.mxu0 %v3074
        %v4283 = vpop.f32.mrf.mxu0
        %v4284 = vadd.f32 %v3679, %v4283
        %4285 = vmatmul.f32.gmra.mxu0 %v3077
        %v4286 = vpop.f32.mrf.mxu0
        %v4287 = vadd.f32 %v3682, %v4286
        %4288 = vmatmul.f32.gmra.mxu0 %v3080
        %v4289 = vpop.f32.mrf.mxu0
        %v4290 = vadd.f32 %v3685, %v4289
        %4291 = vmatmul.f32.gmra.mxu0 %v3083
        %v4292 = vpop.f32.mrf.mxu0
        %v4293 = vadd.f32 %v3688, %v4292
        %4294 = vmatmul.f32.gmra.mxu0 %v3086
        %v4295 = vpop.f32.mrf.mxu0
        %v4296 = vadd.f32 %v3691, %v4295
        %4297 = vmatmul.f32.gmra.mxu0 %v3089
        %v4298 = vpop.f32.mrf.mxu0
        %v4299 = vadd.f32 %v3694, %v4298
        %4300 = vmatmul.f32.gmra.mxu0 %v3092
        %v4301 = vpop.f32.mrf.mxu0
        %v4302 = vadd.f32 %v3697, %v4301
        %4303 = vmatmul.f32.gmra.mxu0 %v3095
        %v4304 = vpop.f32.mrf.mxu0
        %v4305 = vadd.f32 %v3700, %v4304
        %4306 = vmatmul.f32.gmra.mxu0 %v3098
        %v4307 = vpop.f32.mrf.mxu0
        %v4308 = vadd.f32 %v3703, %v4307
        %4309 = vmatmul.f32.gmra.mxu0 %v3101
        %v4310 = vpop.f32.mrf.mxu0
        %v4311 = vadd.f32 %v3706, %v4310
        %4312 = vmatmul.f32.gmra.mxu0 %v3104
        %v4313 = vpop.f32.mrf.mxu0
        %v4314 = vadd.f32 %v3709, %v4313
        %4315 = vmatmul.f32.gmra.mxu0 %v3107
        %v4316 = vpop.f32.mrf.mxu0
        %v4317 = vadd.f32 %v3712, %v4316
        %4318 = vmatmul.f32.gmra.mxu0 %v3110
        %v4319 = vpop.f32.mrf.mxu0
        %v4320 = vadd.f32 %v3715, %v4319
        %4321 = vmatmul.f32.gmra.mxu0 %v3113
        %v4322 = vpop.f32.mrf.mxu0
        %v4323 = vadd.f32 %v3718, %v4322
        %4324 = vmatmul.f32.gmra.mxu0 %v3116
        %v4325 = vpop.f32.mrf.mxu0
        %v4326 = vadd.f32 %v3721, %v4325
        %4327 = vmatmul.f32.gmra.mxu0 %v3119
        %v4328 = vpop.f32.mrf.mxu0
        %v4329 = vadd.f32 %v3724, %v4328
        %4330 = vmatmul.f32.gmra.mxu0 %v3122
        %v4331 = vpop.f32.mrf.mxu0
        %v4332 = vadd.f32 %v3727, %v4331
        %4333 = vmatmul.f32.gmra.mxu0 %v3125
        %v4334 = vpop.f32.mrf.mxu0
        %v4335 = vadd.f32 %v3730, %v4334
        %4336 = vmatmul.f32.gmra.mxu0 %v3128
        %v4337 = vpop.f32.mrf.mxu0
        %v4338 = vadd.f32 %v3733, %v4337
        %4339 = vmatmul.f32.gmra.mxu0 %v3131
        %v4340 = vpop.f32.mrf.mxu0
        %v4341 = vadd.f32 %v3736, %v4340
        %4342 = vmatmul.f32.gmra.mxu0 %v3134
        %v4343 = vpop.f32.mrf.mxu0
        %v4344 = vadd.f32 %v3739, %v4343
        %4345 = vmatmul.f32.gmra.mxu0 %v3137
        %v4346 = vpop.f32.mrf.mxu0
        %v4347 = vadd.f32 %v3742, %v4346
        %4348 = vmatmul.f32.gmra.mxu0 %v3140
        %v4349 = vpop.f32.mrf.mxu0
        %v4350 = vadd.f32 %v3745, %v4349
        %4351 = vmatmul.f32.gmra.mxu0 %v3143
        %v4352 = vpop.f32.mrf.mxu0
        %v4353 = vadd.f32 %v3748, %v4352
        %4354 = vmatmul.f32.gmra.mxu0 %v3146
        %v4355 = vpop.f32.mrf.mxu0
        %v4356 = vadd.f32 %v3751, %v4355
        %4357 = vmatmul.f32.gmra.mxu0 %v3149
        %v4358 = vpop.f32.mrf.mxu0
        %v4359 = vadd.f32 %v3754, %v4358
        %4360 = vmatmul.f32.gmra.mxu0 %v3152
        %v4361 = vpop.f32.mrf.mxu0
        %v4362 = vadd.f32 %v3757, %v4361
        %4363 = vmatmul.f32.gmra.mxu0 %v3155
        %v4364 = vpop.f32.mrf.mxu0
        %v4365 = vadd.f32 %v3760, %v4364
        %4366 = vmatmul.f32.gmra.mxu0 %v3158
        %v4367 = vpop.f32.mrf.mxu0
        %v4368 = vadd.f32 %v3763, %v4367
        %4369 = vmatmul.f32.gmra.mxu0 %v3161
        %v4370 = vpop.f32.mrf.mxu0
        %v4371 = vadd.f32 %v3766, %v4370
        %4372 = vmatmul.f32.gmra.mxu0 %v3164
        %v4373 = vpop.f32.mrf.mxu0
        %v4374 = vadd.f32 %v3769, %v4373
        %4375 = vmatmul.f32.gmra.mxu0 %v3167
        %v4376 = vpop.f32.mrf.mxu0
        %v4377 = vadd.f32 %v3772, %v4376
        %4378 = vmatmul.f32.gmra.mxu0 %v3170
        %v4379 = vpop.f32.mrf.mxu0
        %v4380 = vadd.f32 %v3775, %v4379
        %4381 = vmatmul.f32.gmra.mxu0 %v3173
        %v4382 = vpop.f32.mrf.mxu0
        %v4383 = vadd.f32 %v3778, %v4382
        %4384 = vmatmul.f32.gmra.mxu0 %v3176
        %v4385 = vpop.f32.mrf.mxu0
        %v4386 = vadd.f32 %v3781, %v4385
        %4387 = vmatmul.f32.gmra.mxu0 %v3179
        %v4388 = vpop.f32.mrf.mxu0
        %v4389 = vadd.f32 %v3784, %v4388
        %4390 = vmatmul.f32.gmra.mxu0 %v3182
        %v4391 = vpop.f32.mrf.mxu0
        %v4392 = vadd.f32 %v3787, %v4391
        %4393 = vmatmul.f32.gmra.mxu0 %v3185
        %v4394 = vpop.f32.mrf.mxu0
        %v4395 = vadd.f32 %v3790, %v4394
        %4396 = vmatmul.f32.gmra.mxu0 %v3188
        %v4397 = vpop.f32.mrf.mxu0
        %v4398 = vadd.f32 %v3793, %v4397
        %4399 = vmatmul.f32.gmra.mxu0 %v3191
        %v4400 = vpop.f32.mrf.mxu0
        %v4401 = vadd.f32 %v3796, %v4400
        %4402 = vmatmul.f32.gmra.mxu0 %v3194
        %v4403 = vpop.f32.mrf.mxu0
        %v4404 = vadd.f32 %v3799, %v4403
        %4405 = vmatmul.f32.gmra.mxu0 %v3197
        %v4406 = vpop.f32.mrf.mxu0
        %v4407 = vadd.f32 %v3802, %v4406
        %4408 = vmatmul.f32.gmra.mxu0 %v3200
        %v4409 = vpop.f32.mrf.mxu0
        %v4410 = vadd.f32 %v3805, %v4409
        %4411 = vmatmul.f32.gmra.mxu0 %v3203
        %v4412 = vpop.f32.mrf.mxu0
        %v4413 = vadd.f32 %v3808, %v4412
        %4414 = vmatmul.f32.gmra.mxu0 %v3206
        %v4415 = vpop.f32.mrf.mxu0
        %v4416 = vadd.f32 %v3811, %v4415
        %4417 = vmatmul.f32.gmra.mxu0 %v3209
        %v4418 = vpop.f32.mrf.mxu0
        %v4419 = vadd.f32 %v3814, %v4418
        %4420 = vmatmul.f32.gmra.mxu0 %v3212
        %v4421 = vpop.f32.mrf.mxu0
        %v4422 = vadd.f32 %v3817, %v4421
        %4423 = vmatmul.f32.gmra.mxu0 %v3215
        %v4424 = vpop.f32.mrf.mxu0
        %v4425 = vadd.f32 %v3820, %v4424
        %4426 = vmatmul.f32.gmra.mxu0 %v3218
        %v4427 = vpop.f32.mrf.mxu0
        %v4428 = vadd.f32 %v3823, %v4427
        %4429 = vmatmul.f32.gmra.mxu0 %v3221
        %v4430 = vpop.f32.mrf.mxu0
        %v4431 = vadd.f32 %v3826, %v4430
        %4432 = vmatmul.f32.gmra.mxu0 %v3224
        %v4433 = vpop.f32.mrf.mxu0
        %v4434 = vadd.f32 %v3829, %v4433
        %4435 = vmatmul.f32.gmra.mxu0 %v3227
        %v4436 = vpop.f32.mrf.mxu0
        %v4437 = vadd.f32 %v3832, %v4436
        %4438 = vmatmul.f32.gmra.mxu0 %v3230
        %v4439 = vpop.f32.mrf.mxu0
        %v4440 = vadd.f32 %v3835, %v4439
        %4441 = vmatmul.f32.gmra.mxu0 %v3233
        %v4442 = vpop.f32.mrf.mxu0
        %v4443 = vadd.f32 %v3838, %v4442
        %4444 = vmatmul.f32.gmra.mxu0 %v3236
        %v4445 = vpop.f32.mrf.mxu0
        %v4446 = vadd.f32 %v3841, %v4445
        %4447 = vmatmul.f32.gmra.mxu0 %v3239
        %v4448 = vpop.f32.mrf.mxu0
        %v4449 = vadd.f32 %v3844, %v4448
        %4450 = vmatmul.f32.gmra.mxu0 %v3242
        %v4451 = vpop.f32.mrf.mxu0
        %v4452 = vadd.f32 %v3847, %v4451
        %4453 = vmatmul.f32.gmra.mxu0 %v3245
        %v4454 = vpop.f32.mrf.mxu0
        %v4455 = vadd.f32 %v3850, %v4454
        %4456 = vmatmul.f32.gmra.mxu0 %v3248
        %v4457 = vpop.f32.mrf.mxu0
        %v4458 = vadd.f32 %v3853, %v4457
        %4459 = vmatmul.f32.gmra.mxu0 %v3251
        %v4460 = vpop.f32.mrf.mxu0
        %v4461 = vadd.f32 %v3856, %v4460
        %4462 = vmatmul.f32.gmra.mxu0 %v3254
        %v4463 = vpop.f32.mrf.mxu0
        %v4464 = vadd.f32 %v3859, %v4463
        %4465 = vmatmul.f32.gmra.mxu0 %v3257
        %v4466 = vpop.f32.mrf.mxu0
        %v4467 = vadd.f32 %v3862, %v4466
        %4468 = vmatmul.f32.gmra.mxu0 %v3260
        %v4469 = vpop.f32.mrf.mxu0
        %v4470 = vadd.f32 %v3865, %v4469
        %4471 = vmatmul.f32.gmra.mxu0 %v3263
        %v4472 = vpop.f32.mrf.mxu0
        %v4473 = vadd.f32 %v3868, %v4472
        %4474 = vmatmul.f32.gmra.mxu0 %v3266
        %v4475 = vpop.f32.mrf.mxu0
        %v4476 = vadd.f32 %v3871, %v4475
        %4477 = vmatmul.f32.gmra.mxu0 %v3269
        %v4478 = vpop.f32.mrf.mxu0
        %v4479 = vadd.f32 %v3874, %v4478
        %4480 = vmatmul.f32.gmra.mxu0 %v3272
        %v4481 = vpop.f32.mrf.mxu0
        %v4482 = vadd.f32 %v3877, %v4481
        %4483 = vmatmul.f32.gmra.mxu0 %v3275
        %v4484 = vpop.f32.mrf.mxu0
        %v4485 = vadd.f32 %v3880, %v4484
        %4486 = vmatmul.f32.gmra.mxu0 %v3278
        %v4487 = vpop.f32.mrf.mxu0
        %v4488 = vadd.f32 %v3883, %v4487
        %4489 = vmatmul.f32.gmra.mxu0 %v3281
        %v4490 = vpop.f32.mrf.mxu0
        %v4491 = vadd.f32 %v3886, %v4490
        %4492 = vmatmul.f32.gmra.mxu0 %v3284
        %v4493 = vpop.f32.mrf.mxu0
        %v4494 = vadd.f32 %v3889, %v4493
        %4495 = vmatmul.f32.gmra.mxu0 %v3287
        %v4496 = vpop.f32.mrf.mxu0
        %v4497 = vadd.f32 %v3892, %v4496
        %4498 = vmatmul.f32.gmra.mxu0 %v3290
        %v4499 = vpop.f32.mrf.mxu0
        %v4500 = vadd.f32 %v3895, %v4499
        %4501 = vmatmul.f32.gmra.mxu0 %v3293
        %v4502 = vpop.f32.mrf.mxu0
        %v4503 = vadd.f32 %v3898, %v4502
        %4504 = vmatmul.f32.gmra.mxu0 %v3296
        %v4505 = vpop.f32.mrf.mxu0
        %v4506 = vadd.f32 %v3901, %v4505
        %4507 = vmatmul.f32.gmra.mxu0 %v3299
        %v4508 = vpop.f32.mrf.mxu0
        %v4509 = vadd.f32 %v3904, %v4508
        %4510 = vmatmul.f32.gmra.mxu0 %v3302
        %v4511 = vpop.f32.mrf.mxu0
        %v4512 = vadd.f32 %v3907, %v4511
        %4513 = vmatmul.f32.gmra.mxu0 %v3305
        %v4514 = vpop.f32.mrf.mxu0
        %v4515 = vadd.f32 %v3910, %v4514
        %4516 = vmatmul.f32.gmra.mxu0 %v3308
        %v4517 = vpop.f32.mrf.mxu0
        %v4518 = vadd.f32 %v3913, %v4517
        %4519 = vmatmul.f32.gmra.mxu0 %v3311
        %v4520 = vpop.f32.mrf.mxu0
        %v4521 = vadd.f32 %v3916, %v4520
        %4522 = vmatmul.f32.gmra.mxu0 %v3314
        %v4523 = vpop.f32.mrf.mxu0
        %v4524 = vadd.f32 %v3919, %v4523
        %4525 = vmatmul.f32.gmra.mxu0 %v3317
        %v4526 = vpop.f32.mrf.mxu0
        %v4527 = vadd.f32 %v3922, %v4526
        %4528 = vmatmul.f32.gmra.mxu0 %v3320
        %v4529 = vpop.f32.mrf.mxu0
        %v4530 = vadd.f32 %v3925, %v4529
        %4531 = vmatmul.f32.gmra.mxu0 %v3323
        %v4532 = vpop.f32.mrf.mxu0
        %v4533 = vadd.f32 %v3928, %v4532
        %4534 = vmatmul.f32.gmra.mxu0 %v3326
        %v4535 = vpop.f32.mrf.mxu0
        %v4536 = vadd.f32 %v3931, %v4535
        %4537 = vmatmul.f32.gmra.mxu0 %v3329
        %v4538 = vpop.f32.mrf.mxu0
        %v4539 = vadd.f32 %v3934, %v4538
        %4540 = vmatmul.f32.gmra.mxu0 %v3332
        %v4541 = vpop.f32.mrf.mxu0
        %v4542 = vadd.f32 %v3937, %v4541
        %4543 = vmatmul.f32.gmra.mxu0 %v3335
        %v4544 = vpop.f32.mrf.mxu0
        %v4545 = vadd.f32 %v3940, %v4544
        %4546 = vmatmul.f32.gmra.mxu0 %v3338
        %v4547 = vpop.f32.mrf.mxu0
        %v4548 = vadd.f32 %v3943, %v4547
        %4549 = vmatmul.f32.gmra.mxu0 %v3341
        %v4550 = vpop.f32.mrf.mxu0
        %v4551 = vadd.f32 %v3946, %v4550
        %4552 = vmatmul.f32.gmra.mxu0 %v3344
        %v4553 = vpop.f32.mrf.mxu0
        %v4554 = vadd.f32 %v3949, %v4553
        %4555 = vmatmul.f32.gmra.mxu0 %v3347
        %v4556 = vpop.f32.mrf.mxu0
        %v4557 = vadd.f32 %v3952, %v4556
        %4558 = vmatmul.f32.gmra.mxu0 %v3350
        %v4559 = vpop.f32.mrf.mxu0
        %v4560 = vadd.f32 %v3955, %v4559
        %4561 = vmatmul.f32.gmra.mxu0 %v3353
        %v4562 = vpop.f32.mrf.mxu0
        %v4563 = vadd.f32 %v3958, %v4562
        %4564 = vmatmul.f32.gmra.mxu0 %v3356
        %v4565 = vpop.f32.mrf.mxu0
        %v4566 = vadd.f32 %v3961, %v4565
        %4567 = vmatmul.f32.gmra.mxu0 %v3359
        %v4568 = vpop.f32.mrf.mxu0
        %v4569 = vadd.f32 %v3964, %v4568
        %4570 = vmatmul.f32.gmra.mxu0 %v3362
        %v4571 = vpop.f32.mrf.mxu0
        %v4572 = vadd.f32 %v3967, %v4571
        %4573 = vmatmul.f32.gmra.mxu0 %v3365
        %v4574 = vpop.f32.mrf.mxu0
        %v4575 = vadd.f32 %v3970, %v4574
        %4576 = vmatmul.f32.gmra.mxu0 %v3368
        %v4577 = vpop.f32.mrf.mxu0
        %v4578 = vadd.f32 %v3973, %v4577
        %4579 = vmatmul.f32.gmra.mxu0 %v3371
        %v4580 = vpop.f32.mrf.mxu0
        %v4581 = vadd.f32 %v3976, %v4580
        %4582 = vmatmul.f32.gmra.mxu0 %v3374
        %v4583 = vpop.f32.mrf.mxu0
        %v4584 = vadd.f32 %v3979, %v4583
        %4585 = vmatmul.f32.gmra.mxu0 %v3377
        %v4586 = vpop.f32.mrf.mxu0
        %v4587 = vadd.f32 %v3982, %v4586
        %4588 = vmatmul.f32.gmra.mxu0 %v3380
        %v4589 = vpop.f32.mrf.mxu0
        %v4590 = vadd.f32 %v3985, %v4589
        %4591 = vmatmul.f32.gmra.mxu0 %v3383
        %v4592 = vpop.f32.mrf.mxu0
        %v4593 = vadd.f32 %v3988, %v4592
        %4594 = vmatmul.f32.gmra.mxu0 %v3386
        %v4595 = vpop.f32.mrf.mxu0
        %v4596 = vadd.f32 %v3991, %v4595
        %4597 = vmatmul.f32.gmra.mxu0 %v3389
        %v4598 = vpop.f32.mrf.mxu0
        %v4599 = vadd.f32 %v3994, %v4598
        %4600 = vmatmul.f32.gmra.mxu0 %v3392
        %v4601 = vpop.f32.mrf.mxu0
        %v4602 = vadd.f32 %v3997, %v4601
        %4603 = vmatmul.f32.gmra.mxu0 %v3395
        %v4604 = vpop.f32.mrf.mxu0
        %v4605 = vadd.f32 %v4000, %v4604
        %4606 = vmatmul.f32.gmra.mxu0 %v3398
        %v4607 = vpop.f32.mrf.mxu0
        %v4608 = vadd.f32 %v4003, %v4607
        %4609 = vmatmul.f32.gmra.mxu0 %v3401
        %v4610 = vpop.f32.mrf.mxu0
        %v4611 = vadd.f32 %v4006, %v4610
        %4612 = vmatmul.f32.gmra.mxu0 %v3404
        %v4613 = vpop.f32.mrf.mxu0
        %v4614 = vadd.f32 %v4009, %v4613
        %4615 = vmatmul.f32.gmra.mxu0 %v3407
        %v4616 = vpop.f32.mrf.mxu0
        %v4617 = vadd.f32 %v4012, %v4616
        %4618 = vmatmul.f32.gmra.mxu0 %v3410
        %v4619 = vpop.f32.mrf.mxu0
        %v4620 = vadd.f32 %v4015, %v4619
        %4621 = vmatmul.f32.gmra.mxu0 %v3413
        %v4622 = vpop.f32.mrf.mxu0
        %v4623 = vadd.f32 %v4018, %v4622
        %4624 = vmatmul.f32.gmra.mxu0 %v3416
        %v4625 = vpop.f32.mrf.mxu0
        %v4626 = vadd.f32 %v4021, %v4625
        %4627 = vmatmul.f32.gmra.mxu0 %v3419
        %v4628 = vpop.f32.mrf.mxu0
        %v4629 = vadd.f32 %v4024, %v4628
        %4630 = vmatmul.f32.gmra.mxu0 %v3422
        %v4631 = vpop.f32.mrf.mxu0
        %v4632 = vadd.f32 %v4027, %v4631
        %4633 = vmatmul.f32.gmra.mxu0 %v3425
        %v4634 = vpop.f32.mrf.mxu0
        %v4635 = vadd.f32 %v4030, %v4634
        %4636 = vmatmul.f32.gmra.mxu0 %v3428
        %v4637 = vpop.f32.mrf.mxu0
        %v4638 = vadd.f32 %v4033, %v4637
        %4639 = vmatmul.f32.gmra.mxu0 %v3431
        %v4640 = vpop.f32.mrf.mxu0
        %v4641 = vadd.f32 %v4036, %v4640
        %4642 = vmatmul.f32.gmra.mxu0 %v3434
        %v4643 = vpop.f32.mrf.mxu0
        %v4644 = vadd.f32 %v4039, %v4643
        %4645 = vmatmul.f32.gmra.mxu0 %v3437
        %v4646 = vpop.f32.mrf.mxu0
        %v4647 = vadd.f32 %v4042, %v4646
        %4648 = vmatmul.f32.gmra.mxu0 %v3440
        %v4649 = vpop.f32.mrf.mxu0
        %v4650 = vadd.f32 %v4045, %v4649
        %4651 = vmatmul.f32.gmra.mxu0 %v3443
        %v4652 = vpop.f32.mrf.mxu0
        %v4653 = vadd.f32 %v4048, %v4652
        %4654 = vdwg.mxu0
        %4655 = vst.msk [vmem:[%s139] sm:$0xff] %vm2636, %v4068
        %4656 = vst.msk [vmem:[%s139 + $0x8] sm:$0xff] %vm2636, %v4071
        %4657 = vst.msk [vmem:[%s139 + $0x10] sm:$0xff] %vm2636, %v4074
        %4658 = vst.msk [vmem:[%s139 + $0x18] sm:$0xff] %vm2636, %v4077
        %4659 = vst.msk [vmem:[%s139 + $0x20] sm:$0xff] %vm2636, %v4080
        %4660 = vst.msk [vmem:[%s139 + $0x28] sm:$0xff] %vm2636, %v4083
        %4661 = vst.msk [vmem:[%s139 + $0x30] sm:$0xff] %vm2636, %v4086
        %4662 = vst.msk [vmem:[%s139 + $0x38] sm:$0xff] %vm2636, %v4089
        %4663 = vst.msk [vmem:[%s139 + $0x40] sm:$0xff] %vm2636, %v4092
        %4664 = vst.msk [vmem:[%s139 + $0x48] sm:$0xff] %vm2636, %v4095
        %4665 = vst.msk [vmem:[%s139 + $0x50] sm:$0xff] %vm2636, %v4098
        %4666 = vst.msk [vmem:[%s139 + $0x58] sm:$0xff] %vm2636, %v4101
        %4667 = vst.msk [vmem:[%s139 + $0x60] sm:$0xff] %vm2636, %v4104
        %4668 = vst.msk [vmem:[%s139 + $0x68] sm:$0xff] %vm2636, %v4107
        %4669 = vst.msk [vmem:[%s139 + $0x70] sm:$0xff] %vm2636, %v4110
        %4670 = vst.msk [vmem:[%s139 + $0x78] sm:$0xff] %vm2636, %v4113
        %4671 = vst.msk [vmem:[%s139 + $0x80] sm:$0xff] %vm2636, %v4116
        %4672 = vst.msk [vmem:[%s139 + $0x88] sm:$0xff] %vm2636, %v4119
        %4673 = vst.msk [vmem:[%s139 + $0x90] sm:$0xff] %vm2636, %v4122
        %4674 = vst.msk [vmem:[%s139 + $0x98] sm:$0xff] %vm2636, %v4125
        %4675 = vst.msk [vmem:[%s139 + $0xa0] sm:$0xff] %vm2636, %v4128
        %4676 = vst.msk [vmem:[%s139 + $0xa8] sm:$0xff] %vm2636, %v4131
        %4677 = vst.msk [vmem:[%s139 + $0xb0] sm:$0xff] %vm2636, %v4134
        %4678 = vst.msk [vmem:[%s139 + $0xb8] sm:$0xff] %vm2636, %v4137
        %4679 = vst.msk [vmem:[%s139 + $0xc0] sm:$0xff] %vm2636, %v4140
        %4680 = vst.msk [vmem:[%s139 + $0xc8] sm:$0xff] %vm2636, %v4143
        %4681 = vst.msk [vmem:[%s139 + $0xd0] sm:$0xff] %vm2636, %v4146
        %4682 = vst.msk [vmem:[%s139 + $0xd8] sm:$0xff] %vm2636, %v4149
        %4683 = vst.msk [vmem:[%s139 + $0xe0] sm:$0xff] %vm2636, %v4152
        %4684 = vst.msk [vmem:[%s139 + $0xe8] sm:$0xff] %vm2636, %v4155
        %4685 = vst.msk [vmem:[%s139 + $0xf0] sm:$0xff] %vm2636, %v4158
        %4686 = vst.msk [vmem:[%s139 + $0xf8] sm:$0xff] %vm2636, %v4161
        %4687 = vst.msk [vmem:[%s139 + $0x100] sm:$0xff] %vm2636, %v4164
        %4688 = vst.msk [vmem:[%s139 + $0x108] sm:$0xff] %vm2636, %v4167
        %4689 = vst.msk [vmem:[%s139 + $0x110] sm:$0xff] %vm2636, %v4170
        %4690 = vst.msk [vmem:[%s139 + $0x118] sm:$0xff] %vm2636, %v4173
        %4691 = vst.msk [vmem:[%s139 + $0x120] sm:$0xff] %vm2636, %v4176
        %4692 = vst.msk [vmem:[%s139 + $0x128] sm:$0xff] %vm2636, %v4179
        %4693 = vst.msk [vmem:[%s139 + $0x130] sm:$0xff] %vm2636, %v4182
        %4694 = vst.msk [vmem:[%s139 + $0x138] sm:$0xff] %vm2636, %v4185
        %4695 = vst.msk [vmem:[%s139 + $0x140] sm:$0xff] %vm2636, %v4188
        %4696 = vst.msk [vmem:[%s139 + $0x148] sm:$0xff] %vm2636, %v4191
        %4697 = vst.msk [vmem:[%s139 + $0x150] sm:$0xff] %vm2636, %v4194
        %4698 = vst.msk [vmem:[%s139 + $0x158] sm:$0xff] %vm2636, %v4197
        %4699 = vst.msk [vmem:[%s139 + $0x160] sm:$0xff] %vm2636, %v4200
        %4700 = vst.msk [vmem:[%s139 + $0x168] sm:$0xff] %vm2636, %v4203
        %4701 = vst.msk [vmem:[%s139 + $0x170] sm:$0xff] %vm2636, %v4206
        %4702 = vst.msk [vmem:[%s139 + $0x178] sm:$0xff] %vm2636, %v4209
        %4703 = vst.msk [vmem:[%s139 + $0x180] sm:$0xff] %vm2636, %v4212
        %4704 = vst.msk [vmem:[%s139 + $0x188] sm:$0xff] %vm2636, %v4215
        %4705 = vst.msk [vmem:[%s139 + $0x190] sm:$0xff] %vm2636, %v4218
        %4706 = vst.msk [vmem:[%s139 + $0x198] sm:$0xff] %vm2636, %v4221
        %4707 = vst.msk [vmem:[%s139 + $0x1a0] sm:$0xff] %vm2636, %v4224
        %4708 = vst.msk [vmem:[%s139 + $0x1a8] sm:$0xff] %vm2636, %v4227
        %4709 = vst.msk [vmem:[%s139 + $0x1b0] sm:$0xff] %vm2636, %v4230
        %4710 = vst.msk [vmem:[%s139 + $0x1b8] sm:$0xff] %vm2636, %v4233
        %4711 = vst.msk [vmem:[%s139 + $0x1c0] sm:$0xff] %vm2636, %v4236
        %4712 = vst.msk [vmem:[%s139 + $0x1c8] sm:$0xff] %vm2636, %v4239
        %4713 = vst.msk [vmem:[%s139 + $0x1d0] sm:$0xff] %vm2636, %v4242
        %4714 = vst.msk [vmem:[%s139 + $0x1d8] sm:$0xff] %vm2636, %v4245
        %4715 = vst.msk [vmem:[%s139 + $0x1e0] sm:$0xff] %vm2636, %v4248
        %4716 = vst.msk [vmem:[%s139 + $0x1e8] sm:$0xff] %vm2636, %v4251
        %4717 = vst.msk [vmem:[%s139 + $0x1f0] sm:$0xff] %vm2636, %v4254
        %4718 = vst.msk [vmem:[%s139 + $0x1f8] sm:$0xff] %vm2636, %v4257
        %4719 = vst.msk [vmem:[%s139 + $0x200] sm:$0xff] %vm2636, %v4260
        %4720 = vst.msk [vmem:[%s139 + $0x208] sm:$0xff] %vm2636, %v4263
        %4721 = vst.msk [vmem:[%s139 + $0x210] sm:$0xff] %vm2636, %v4266
        %4722 = vst.msk [vmem:[%s139 + $0x218] sm:$0xff] %vm2636, %v4269
        %4723 = vst.msk [vmem:[%s139 + $0x220] sm:$0xff] %vm2636, %v4272
        %4724 = vst.msk [vmem:[%s139 + $0x228] sm:$0xff] %vm2636, %v4275
        %4725 = vst.msk [vmem:[%s139 + $0x230] sm:$0xff] %vm2636, %v4278
        %4726 = vst.msk [vmem:[%s139 + $0x238] sm:$0xff] %vm2636, %v4281
        %4727 = vst.msk [vmem:[%s139 + $0x240] sm:$0xff] %vm2636, %v4284
        %4728 = vst.msk [vmem:[%s139 + $0x248] sm:$0xff] %vm2636, %v4287
        %4729 = vst.msk [vmem:[%s139 + $0x250] sm:$0xff] %vm2636, %v4290
        %4730 = vst.msk [vmem:[%s139 + $0x258] sm:$0xff] %vm2636, %v4293
        %4731 = vst.msk [vmem:[%s139 + $0x260] sm:$0xff] %vm2636, %v4296
        %4732 = vst.msk [vmem:[%s139 + $0x268] sm:$0xff] %vm2636, %v4299
        %4733 = vst.msk [vmem:[%s139 + $0x270] sm:$0xff] %vm2636, %v4302
        %4734 = vst.msk [vmem:[%s139 + $0x278] sm:$0xff] %vm2636, %v4305
        %4735 = vst.msk [vmem:[%s139 + $0x280] sm:$0xff] %vm2636, %v4308
        %4736 = vst.msk [vmem:[%s139 + $0x288] sm:$0xff] %vm2636, %v4311
        %4737 = vst.msk [vmem:[%s139 + $0x290] sm:$0xff] %vm2636, %v4314
        %4738 = vst.msk [vmem:[%s139 + $0x298] sm:$0xff] %vm2636, %v4317
        %4739 = vst.msk [vmem:[%s139 + $0x2a0] sm:$0xff] %vm2636, %v4320
        %4740 = vst.msk [vmem:[%s139 + $0x2a8] sm:$0xff] %vm2636, %v4323
        %4741 = vst.msk [vmem:[%s139 + $0x2b0] sm:$0xff] %vm2636, %v4326
        %4742 = vst.msk [vmem:[%s139 + $0x2b8] sm:$0xff] %vm2636, %v4329
        %4743 = vst.msk [vmem:[%s139 + $0x2c0] sm:$0xff] %vm2636, %v4332
        %4744 = vst.msk [vmem:[%s139 + $0x2c8] sm:$0xff] %vm2636, %v4335
        %4745 = vst.msk [vmem:[%s139 + $0x2d0] sm:$0xff] %vm2636, %v4338
        %4746 = vst.msk [vmem:[%s139 + $0x2d8] sm:$0xff] %vm2636, %v4341
        %4747 = vst.msk [vmem:[%s139 + $0x2e0] sm:$0xff] %vm2636, %v4344
        %4748 = vst.msk [vmem:[%s139 + $0x2e8] sm:$0xff] %vm2636, %v4347
        %4749 = vst.msk [vmem:[%s139 + $0x2f0] sm:$0xff] %vm2636, %v4350
        %4750 = vst.msk [vmem:[%s139 + $0x2f8] sm:$0xff] %vm2636, %v4353
        %4751 = vst.msk [vmem:[%s139 + $0x300] sm:$0xff] %vm2636, %v4356
        %4752 = vst.msk [vmem:[%s139 + $0x308] sm:$0xff] %vm2636, %v4359
        %4753 = vst.msk [vmem:[%s139 + $0x310] sm:$0xff] %vm2636, %v4362
        %4754 = vst.msk [vmem:[%s139 + $0x318] sm:$0xff] %vm2636, %v4365
        %4755 = vst.msk [vmem:[%s139 + $0x320] sm:$0xff] %vm2636, %v4368
        %4756 = vst.msk [vmem:[%s139 + $0x328] sm:$0xff] %vm2636, %v4371
        %4757 = vst.msk [vmem:[%s139 + $0x330] sm:$0xff] %vm2636, %v4374
        %4758 = vst.msk [vmem:[%s139 + $0x338] sm:$0xff] %vm2636, %v4377
        %4759 = vst.msk [vmem:[%s139 + $0x340] sm:$0xff] %vm2636, %v4380
        %4760 = vst.msk [vmem:[%s139 + $0x348] sm:$0xff] %vm2636, %v4383
        %4761 = vst.msk [vmem:[%s139 + $0x350] sm:$0xff] %vm2636, %v4386
        %4762 = vst.msk [vmem:[%s139 + $0x358] sm:$0xff] %vm2636, %v4389
        %4763 = vst.msk [vmem:[%s139 + $0x360] sm:$0xff] %vm2636, %v4392
        %4764 = vst.msk [vmem:[%s139 + $0x368] sm:$0xff] %vm2636, %v4395
        %4765 = vst.msk [vmem:[%s139 + $0x370] sm:$0xff] %vm2636, %v4398
        %4766 = vst.msk [vmem:[%s139 + $0x378] sm:$0xff] %vm2636, %v4401
        %4767 = vst.msk [vmem:[%s139 + $0x380] sm:$0xff] %vm2636, %v4404
        %4768 = vst.msk [vmem:[%s139 + $0x388] sm:$0xff] %vm2636, %v4407
        %4769 = vst.msk [vmem:[%s139 + $0x390] sm:$0xff] %vm2636, %v4410
        %4770 = vst.msk [vmem:[%s139 + $0x398] sm:$0xff] %vm2636, %v4413
        %4771 = vst.msk [vmem:[%s139 + $0x3a0] sm:$0xff] %vm2636, %v4416
        %4772 = vst.msk [vmem:[%s139 + $0x3a8] sm:$0xff] %vm2636, %v4419
        %4773 = vst.msk [vmem:[%s139 + $0x3b0] sm:$0xff] %vm2636, %v4422
        %4774 = vst.msk [vmem:[%s139 + $0x3b8] sm:$0xff] %vm2636, %v4425
        %4775 = vst.msk [vmem:[%s139 + $0x3c0] sm:$0xff] %vm2636, %v4428
        %4776 = vst.msk [vmem:[%s139 + $0x3c8] sm:$0xff] %vm2636, %v4431
        %4777 = vst.msk [vmem:[%s139 + $0x3d0] sm:$0xff] %vm2636, %v4434
        %4778 = vst.msk [vmem:[%s139 + $0x3d8] sm:$0xff] %vm2636, %v4437
        %4779 = vst.msk [vmem:[%s139 + $0x3e0] sm:$0xff] %vm2636, %v4440
        %4780 = vst.msk [vmem:[%s139 + $0x3e8] sm:$0xff] %vm2636, %v4443
        %4781 = vst.msk [vmem:[%s139 + $0x3f0] sm:$0xff] %vm2636, %v4446
        %4782 = vst.msk [vmem:[%s139 + $0x3f8] sm:$0xff] %vm2636, %v4449
        %4783 = vst.msk [vmem:[%s139 + $0x400] sm:$0xff] %vm2636, %v4452
        %4784 = vst.msk [vmem:[%s139 + $0x408] sm:$0xff] %vm2636, %v4455
        %4785 = vst.msk [vmem:[%s139 + $0x410] sm:$0xff] %vm2636, %v4458
        %4786 = vst.msk [vmem:[%s139 + $0x418] sm:$0xff] %vm2636, %v4461
        %4787 = vst.msk [vmem:[%s139 + $0x420] sm:$0xff] %vm2636, %v4464
        %4788 = vst.msk [vmem:[%s139 + $0x428] sm:$0xff] %vm2636, %v4467
        %4789 = vst.msk [vmem:[%s139 + $0x430] sm:$0xff] %vm2636, %v4470
        %4790 = vst.msk [vmem:[%s139 + $0x438] sm:$0xff] %vm2636, %v4473
        %4791 = vst.msk [vmem:[%s139 + $0x440] sm:$0xff] %vm2636, %v4476
        %4792 = vst.msk [vmem:[%s139 + $0x448] sm:$0xff] %vm2636, %v4479
        %4793 = vst.msk [vmem:[%s139 + $0x450] sm:$0xff] %vm2636, %v4482
        %4794 = vst.msk [vmem:[%s139 + $0x458] sm:$0xff] %vm2636, %v4485
        %4795 = vst.msk [vmem:[%s139 + $0x460] sm:$0xff] %vm2636, %v4488
        %4796 = vst.msk [vmem:[%s139 + $0x468] sm:$0xff] %vm2636, %v4491
        %4797 = vst.msk [vmem:[%s139 + $0x470] sm:$0xff] %vm2636, %v4494
        %4798 = vst.msk [vmem:[%s139 + $0x478] sm:$0xff] %vm2636, %v4497
        %4799 = vst.msk [vmem:[%s139 + $0x480] sm:$0xff] %vm2636, %v4500
        %4800 = vst.msk [vmem:[%s139 + $0x488] sm:$0xff] %vm2636, %v4503
        %4801 = vst.msk [vmem:[%s139 + $0x490] sm:$0xff] %vm2636, %v4506
        %4802 = vst.msk [vmem:[%s139 + $0x498] sm:$0xff] %vm2636, %v4509
        %4803 = vst.msk [vmem:[%s139 + $0x4a0] sm:$0xff] %vm2636, %v4512
        %4804 = vst.msk [vmem:[%s139 + $0x4a8] sm:$0xff] %vm2636, %v4515
        %4805 = vst.msk [vmem:[%s139 + $0x4b0] sm:$0xff] %vm2636, %v4518
        %4806 = vst.msk [vmem:[%s139 + $0x4b8] sm:$0xff] %vm2636, %v4521
        %4807 = vst.msk [vmem:[%s139 + $0x4c0] sm:$0xff] %vm2636, %v4524
        %4808 = vst.msk [vmem:[%s139 + $0x4c8] sm:$0xff] %vm2636, %v4527
        %4809 = vst.msk [vmem:[%s139 + $0x4d0] sm:$0xff] %vm2636, %v4530
        %4810 = vst.msk [vmem:[%s139 + $0x4d8] sm:$0xff] %vm2636, %v4533
        %4811 = vst.msk [vmem:[%s139 + $0x4e0] sm:$0xff] %vm2636, %v4536
        %4812 = vst.msk [vmem:[%s139 + $0x4e8] sm:$0xff] %vm2636, %v4539
        %4813 = vst.msk [vmem:[%s139 + $0x4f0] sm:$0xff] %vm2636, %v4542
        %4814 = vst.msk [vmem:[%s139 + $0x4f8] sm:$0xff] %vm2636, %v4545
        %4815 = vst.msk [vmem:[%s139 + $0x500] sm:$0xff] %vm2636, %v4548
        %4816 = vst.msk [vmem:[%s139 + $0x508] sm:$0xff] %vm2636, %v4551
        %4817 = vst.msk [vmem:[%s139 + $0x510] sm:$0xff] %vm2636, %v4554
        %4818 = vst.msk [vmem:[%s139 + $0x518] sm:$0xff] %vm2636, %v4557
        %4819 = vst.msk [vmem:[%s139 + $0x520] sm:$0xff] %vm2636, %v4560
        %4820 = vst.msk [vmem:[%s139 + $0x528] sm:$0xff] %vm2636, %v4563
        %4821 = vst.msk [vmem:[%s139 + $0x530] sm:$0xff] %vm2636, %v4566
        %4822 = vst.msk [vmem:[%s139 + $0x538] sm:$0xff] %vm2636, %v4569
        %4823 = vst.msk [vmem:[%s139 + $0x540] sm:$0xff] %vm2636, %v4572
        %4824 = vst.msk [vmem:[%s139 + $0x548] sm:$0xff] %vm2636, %v4575
        %4825 = vst.msk [vmem:[%s139 + $0x550] sm:$0xff] %vm2636, %v4578
        %4826 = vst.msk [vmem:[%s139 + $0x558] sm:$0xff] %vm2636, %v4581
        %4827 = vst.msk [vmem:[%s139 + $0x560] sm:$0xff] %vm2636, %v4584
        %4828 = vst.msk [vmem:[%s139 + $0x568] sm:$0xff] %vm2636, %v4587
        %4829 = vst.msk [vmem:[%s139 + $0x570] sm:$0xff] %vm2636, %v4590
        %4830 = vst.msk [vmem:[%s139 + $0x578] sm:$0xff] %vm2636, %v4593
        %4831 = vst.msk [vmem:[%s139 + $0x580] sm:$0xff] %vm2636, %v4596
        %4832 = vst.msk [vmem:[%s139 + $0x588] sm:$0xff] %vm2636, %v4599
        %4833 = vst.msk [vmem:[%s139 + $0x590] sm:$0xff] %vm2636, %v4602
        %4834 = vst.msk [vmem:[%s139 + $0x598] sm:$0xff] %vm2636, %v4605
        %4835 = vst.msk [vmem:[%s139 + $0x5a0] sm:$0xff] %vm2636, %v4608
        %4836 = vst.msk [vmem:[%s139 + $0x5a8] sm:$0xff] %vm2636, %v4611
        %4837 = vst.msk [vmem:[%s139 + $0x5b0] sm:$0xff] %vm2636, %v4614
        %4838 = vst.msk [vmem:[%s139 + $0x5b8] sm:$0xff] %vm2636, %v4617
        %4839 = vst.msk [vmem:[%s139 + $0x5c0] sm:$0xff] %vm2636, %v4620
        %4840 = vst.msk [vmem:[%s139 + $0x5c8] sm:$0xff] %vm2636, %v4623
        %4841 = vst.msk [vmem:[%s139 + $0x5d0] sm:$0xff] %vm2636, %v4626
        %4842 = vst.msk [vmem:[%s139 + $0x5d8] sm:$0xff] %vm2636, %v4629
        %4843 = vst.msk [vmem:[%s139 + $0x5e0] sm:$0xff] %vm2636, %v4632
        %4844 = vst.msk [vmem:[%s139 + $0x5e8] sm:$0xff] %vm2636, %v4635
        %4845 = vst.msk [vmem:[%s139 + $0x5f0] sm:$0xff] %vm2636, %v4638
        %4846 = vst.msk [vmem:[%s139 + $0x5f8] sm:$0xff] %vm2636, %v4641
        %4847 = vst.msk [vmem:[%s139 + $0x600] sm:$0xff] %vm2636, %v4644
        %4848 = vst.msk [vmem:[%s139 + $0x608] sm:$0xff] %vm2636, %v4647
        %4849 = vst.msk [vmem:[%s139 + $0x610] sm:$0xff] %vm2636, %v4650
        %4850 = vst.msk [vmem:[%s139 + $0x618] sm:$0xff] %vm2636, %v4653
        %s4851 = sand.u32 %s71, 1
        %s4852 = scalar_lea.sflag [#allocation3], %s4851
        %s4853 = sand.u32 %s71, 1
        %s4854 = smul.addr %s4853, 1568
        %s4855 = scalar_lea.vmem [#allocation2], %s4854
        // Predicated region
        $region29: #{kernel_generated_0_forward.1} parent=27 // pred_check
          %p4856 = pneg %p81
        $region30: #{kernel_generated_0_forward.1} parent=27 // pred_check_branch
          %4858 = sbr.rel (%p4856) target = $region32
        $region31: #{kernel_generated_0_forward.1} parent=27 // pred_region
          %s4859 = smul.u32 196, %s16
          %4861 = vsyncadd %s4852, 0
          %s4862 = smul.addr %s4859, 8
          %s4863 = scalar_lea.hbm %s2, %s4862
          %s4864 = sshll.u32 %s4855, 4
          %s4865 = int_to_ptr.vmem [resolvable:$true] %s4864
          %s4866 = sshll.u32 %s4863, 4
          %s4867 = int_to_ptr.hbm [resolvable:$true] %s4866
          %4872 = dma.vmem_to_hbm [thread:$0]  %s4865, 25088, %s4867, %s4852, 128, 128, 8
        $region32: #{kernel_generated_0_forward.1} parent=27 // pred_fallthru
          _
      $region28: #{kernel_generated_0_forward.1} parent=5 // pred_fallthru
        _
      %p4873 = scmp.le.s32.totalorder 2, %s11
      // Predicated region
      $region33: #{kernel_generated_0_forward.1} parent=5 // pred_check
        %p4874 = pneg %p4873
      $region34: #{kernel_generated_0_forward.1} parent=5 // pred_check_branch
        %4876 = sbr.rel (%p4874) target = $region36
      $region35: #{kernel_generated_0_forward.1} parent=5 // pred_region
        %s4877 = ssub.s32 %s11, 2
        // Predicated region
        $region37: #{kernel_generated_0_forward.1} parent=35 // pred_check
          %p4878 = pneg %p87
        $region38: #{kernel_generated_0_forward.1} parent=35 // pred_check_branch
          %4880 = sbr.rel (%p4878) target = $region40
        $region39: #{kernel_generated_0_forward.1} parent=35 // pred_region
          %s4881 = sand.u32 %s72, 1
          %s4882 = scalar_lea.sflag [#allocation3], %s4881
          %s4883 = sand.u32 %s72, 1
          %s4884 = smul.addr %s4883, 1568
          %s4885 = scalar_lea.vmem [#allocation2], %s4884
          %4887 = dma.done %s4882, 25088
        $region40: #{kernel_generated_0_forward.1} parent=35 // pred_fallthru
          _
      $region36: #{kernel_generated_0_forward.1} parent=5 // pred_fallthru
        _
    $region6: #{kernel_generated_0_forward.1} parent=1 // loop_footer
      %s15 = sadd.s32 1, %s11
    $region7: #{kernel_generated_0_forward.1} parent=1 // loop_footer_branch
      %10 = sbr.rel target = $region3
    $region8: #{kernel_generated_0_forward.1} parent=1 // loop_exit
      _
    %4888 = vsyncpa [#allocation3], 1
    %s4889 = scalar_lea.sflag [#allocation3], 1
    %4890 = vsyncpa %s4889, 1

</llo_original>
